<compile_context>
chip_gen: v7x
topology: tpu7x:2x2x1
jax: 0.10.0
libtpu: 0.0.40
codegen_flags: <defaults>
</compile_context>

<pallas_src>
import math

import jax
import jax.numpy as jnp
from jax.experimental import pallas as pl
from jax.experimental.pallas import tpu as pltpu

# ---------------- small, deterministic config (XLM-R-base scaled down) ------
VOCAB = 100
HIDDEN = 32
HEADS = 4
HEAD_DIM = HIDDEN // HEADS
LAYERS = 2
FFN = 64
SEQ = 8
BATCH = 2
PAD_ID = 1                        # XLM-R pad token id
MAX_POS = SEQ + PAD_ID + 1        # RoBERTa-style position offset by pad_id
LN_EPS = 1e-5

# ---- packed per-layer weight slab: (LAYERS, HIDDEN, W_COLS), lane layout ----
W_QKV = 0                         # [  0,  96)  fused QKV projection (H, 3H)
W_O = 3 * HIDDEN                  # [ 96, 128)  output projection     (H, H)
W_FC1 = 4 * HIDDEN                # [128, 192)  FFN up-projection     (H, FFN)
W_FC2T = 4 * HIDDEN + FFN         # [192, 256)  FFN down-proj, stored transposed (H, FFN)
W_COLS = W_FC2T + FFN             # 256 lanes = exactly two lane tiles

# ---- packed small-vector slab: (VEC_ROWS, VEC_W), one vector per row -------
VEC_W = 128
ROW_EMB_G, ROW_EMB_B, ROW_REG = 0, 1, 2   # ROW_REG: lanes[:H]=reg_w, lane[H]=reg_b
ROWS_GLOBAL = 3
(R_QKV_B, R_O_B, R_LN1_G, R_LN1_B,
 R_FC1_B, R_FC2_B, R_LN2_G, R_LN2_B) = range(8)
ROWS_PER_LAYER = 8
VEC_ROWS = ROWS_GLOBAL + ROWS_PER_LAYER * LAYERS


# ============================ fused Pallas kernel ===========================
def _layernorm(h, g, b, eps):
    mu = jnp.mean(h, axis=-1, keepdims=True)
    var = jnp.mean((h - mu) ** 2, axis=-1, keepdims=True)
    return (h - mu) * jax.lax.rsqrt(var + eps) * g + b


def _fused_forward_kernel(x_ref, bias_ref, pool_ref, w_ref, vec_ref,
                          out_ref, qkv_scr):
    """Whole forward pass on a flat (M=B*S, H) activation slab, all in VMEM."""
    H = HIDDEN
    HD = HEAD_DIM
    M = x_ref.shape[0]
    scale = 1.0 / math.sqrt(HD)

    # --- embedding LayerNorm ------------------------------------------------
    x = _layernorm(x_ref[...],
                   vec_ref[ROW_EMB_G:ROW_EMB_G + 1, :H],
                   vec_ref[ROW_EMB_B:ROW_EMB_B + 1, :H],
                   LN_EPS)
    bias_mm = bias_ref[...]                                   # (M, M) additive mask

    for l in range(LAYERS):                                   # static unroll
        base = ROWS_GLOBAL + l * ROWS_PER_LAYER
        qkv_b = vec_ref[base + R_QKV_B:base + R_QKV_B + 1, :3 * H]
        o_b = vec_ref[base + R_O_B:base + R_O_B + 1, :H]
        ln1_g = vec_ref[base + R_LN1_G:base + R_LN1_G + 1, :H]
        ln1_b = vec_ref[base + R_LN1_B:base + R_LN1_B + 1, :H]
        fc1_b = vec_ref[base + R_FC1_B:base + R_FC1_B + 1, :FFN]
        fc2_b = vec_ref[base + R_FC2_B:base + R_FC2_B + 1, :H]
        ln2_g = vec_ref[base + R_LN2_G:base + R_LN2_G + 1, :H]
        ln2_b = vec_ref[base + R_LN2_B:base + R_LN2_B + 1, :H]

        # ---- fused QKV projection: one (M,H)@(H,3H) MXU matmul -------------
        qkv = jnp.dot(x, w_ref[l, :, W_QKV:W_QKV + 3 * H],
                      preferred_element_type=jnp.float32) + qkv_b
        qkv_scr[...] = qkv                       # land in VMEM; slice the ref

        # ---- per-head scores, max-shifted; ONE batched exp across heads ----
        shifted = []
        for h in range(HEADS):
            qh = qkv_scr[:, h * HD:(h + 1) * HD]                       # (M, HD)
            kh = qkv_scr[:, H + h * HD:H + (h + 1) * HD]
            s = jax.lax.dot_general(qh, kh, (((1,), (1,)), ((), ())),
                                    preferred_element_type=jnp.float32)
            s = s * scale + bias_mm
            shifted.append(s - jnp.max(s, axis=-1, keepdims=True))
        p_all = jnp.exp(jnp.concatenate(shifted, axis=-1))             # (M, HEADS*M)

        # ---- per-head context, concatenated -> single output projection ----
        ctx_parts = []
        for h in range(HEADS):
            p_h = p_all[:, h * M:(h + 1) * M]                          # (M, M)
            inv = pl.reciprocal(jnp.sum(p_h, axis=-1, keepdims=True),
                                approx=True)                           # EUP divide
            vh = qkv_scr[:, 2 * H + h * HD:2 * H + (h + 1) * HD]
            ctx_parts.append(jnp.dot(p_h, vh,
                                     preferred_element_type=jnp.float32) * inv)
        ctx = jnp.concatenate(ctx_parts, axis=-1)                      # (M, H)
        attn = jnp.dot(ctx, w_ref[l, :, W_O:W_O + H],
                       preferred_element_type=jnp.float32) + o_b
        x = _layernorm(attn + x, ln1_g, ln1_b, LN_EPS)

        # ---- FFN ------------------------------------------------------------
        h1 = jnp.dot(x, w_ref[l, :, W_FC1:W_FC1 + FFN],
                     preferred_element_type=jnp.float32) + fc1_b
        # TODO(synk): XLM-R uses exact erf-GELU; tanh approximation used here.
        h1 = jax.nn.gelu(h1, approximate=True)
        # fc2 stored transposed (H, FFN) -> contract lane dims: h1 @ fc2
        h2 = jax.lax.dot_general(h1, w_ref[l, :, W_FC2T:W_FC2T + FFN],
                                 (((1,), (1,)), ((), ())),
                                 preferred_element_type=jnp.float32) + fc2_b
        x = _layernorm(h2 + x, ln2_g, ln2_b, LN_EPS)

    # --- masked sequence-sum (block-diag matmul) + regressor Linear(H, 1) ----
    pooled = jnp.dot(pool_ref[...], x, preferred_element_type=jnp.float32)  # (B, H)
    reg_w = vec_ref[ROW_REG:ROW_REG + 1, :H]                                # (1, H)
    reg_b = vec_ref[ROW_REG:ROW_REG + 1, H:H + 1]                           # (1, 1)
    out_ref[...] = jnp.sum(pooled * reg_w, axis=-1, keepdims=True) + reg_b


# ============================ params (deterministic) ========================
def init_params(key):
    def nrm(k, shape, s=0.02):
        return jax.random.normal(k, shape, jnp.float32) * s

    ks = iter(jax.random.split(key, 16))

    word_emb = nrm(next(ks), (VOCAB, HIDDEN))
    pos_emb = nrm(next(ks), (MAX_POS, HIDDEN))
    type_emb = nrm(next(ks), (1, HIDDEN))

    # ---- packed per-layer weight matrices: (LAYERS, HIDDEN, 256) -----------
    qkv_w = nrm(next(ks), (LAYERS, HIDDEN, 3 * HIDDEN))
    o_w = nrm(next(ks), (LAYERS, HIDDEN, HIDDEN))
    fc1_w = nrm(next(ks), (LAYERS, HIDDEN, FFN))
    fc2_w = nrm(next(ks), (LAYERS, FFN, HIDDEN))
    w_pack = jnp.concatenate(
        [qkv_w, o_w, fc1_w, jnp.transpose(fc2_w, (0, 2, 1))], axis=-1)

    # ---- packed small vectors: (VEC_ROWS, 128) ------------------------------
    vecs = jnp.zeros((VEC_ROWS, VEC_W), jnp.float32)
    vecs = vecs.at[ROW_EMB_G, :HIDDEN].set(1.0)                 # emb LN gain
    vecs = vecs.at[ROW_REG, :HIDDEN].set(nrm(next(ks), (HIDDEN,)))   # reg_w
    vecs = vecs.at[ROW_REG, HIDDEN].set(0.01)                        # reg_b
    for l in range(LAYERS):
        base = ROWS_GLOBAL + l * ROWS_PER_LAYER
        kq, ko, k1, k2 = jax.random.split(next(ks), 4)
        vecs = vecs.at[base + R_QKV_B, :3 * HIDDEN].set(nrm(kq, (3 * HIDDEN,)))
        vecs = vecs.at[base + R_O_B, :HIDDEN].set(nrm(ko, (HIDDEN,)))
        vecs = vecs.at[base + R_LN1_G, :HIDDEN].set(1.0)
        vecs = vecs.at[base + R_FC1_B, :FFN].set(nrm(k1, (FFN,)))
        vecs = vecs.at[base + R_FC2_B, :HIDDEN].set(nrm(k2, (HIDDEN,)))
        vecs = vecs.at[base + R_LN2_G, :HIDDEN].set(1.0)
    return {"word_emb": word_emb, "pos_emb": pos_emb, "type_emb": type_emb,
            "w_pack": w_pack, "vecs": vecs}


# ============================ forward (glue JAX) ============================
def xlm_comet_forward(params, input_ids, attention_masks):
    """Mirrors XLMCometRegressor.forward (inference; dropout = identity)."""
    B, S = input_ids.shape
    M = B * S

    # --- embeddings (token-id gathers stay in glue JAX; rest is in-kernel) ---
    not_pad = (input_ids != PAD_ID).astype(jnp.int32)
    position_ids = jnp.cumsum(not_pad, axis=1) * not_pad + PAD_ID   # RoBERTa style
    emb = (params["word_emb"][input_ids]
           + params["pos_emb"][position_ids]
           + params["type_emb"][0][None, None, :])
    x = emb.reshape(M, HIDDEN).astype(jnp.float32)

    # (M, M) additive attention bias: -1e9 on cross-batch and padded keys so
    # attention over the flat (B*S) slab equals per-batch attention.
    key_mask = attention_masks.astype(jnp.float32)                  # (B, S)
    allow = jnp.eye(B, dtype=jnp.float32)[:, :, None] * key_mask[None, :, :]
    allow = jnp.broadcast_to(allow[:, None, :, :], (B, S, B, S)).reshape(M, M)
    bias_mm = (1.0 - allow) * -1e9

    # pooling mask matches the reference exactly: (input_ids > 0).
    # NOTE: with XLM-R's PAD_ID == 1 this includes padding tokens; that quirk
    # exists in the original PyTorch module and is reproduced on purpose.
    pool_mask = (input_ids > 0).astype(jnp.float32)                 # (B, S)
    pool_p = (jnp.eye(B, dtype=jnp.float32)[:, :, None]
              * pool_mask[:, None, :]).reshape(B, M)                # block-diag

    # Single no-grid pallas_call: 5 operands, all whole-resident in VMEM.
    return pl.pallas_call(
        _fused_forward_kernel,
        out_shape=jax.ShapeDtypeStruct((B, 1), jnp.float32),
        scratch_shapes=[pltpu.VMEM((M, 3 * HIDDEN), jnp.float32)],   # QKV landing
    )(x, bias_mm, pool_p, params["w_pack"], params["vecs"])


# ================================== main ====================================
if __name__ == "__main__":
    key = jax.random.PRNGKey(0)
    pkey, ikey = jax.random.split(key)

    params = init_params(pkey)

    # deterministic token ids in [2, VOCAB) with trailing padding
    input_ids = jax.random.randint(ikey, (BATCH, SEQ), 2, VOCAB, dtype=jnp.int32)
    input_ids = input_ids.at[0, 6:].set(PAD_ID)
    input_ids = input_ids.at[1, 5:].set(PAD_ID)
    attention_masks = (input_ids != PAD_ID).astype(jnp.int32)

    fwd = jax.jit(xlm_comet_forward)
    out = fwd(params, input_ids, attention_masks)
    out = jax.block_until_ready(out)

    assert out.shape == (BATCH, 1), out.shape
    assert bool(jnp.all(jnp.isfinite(out)))
    print("KERNEL_OK")
</pallas_src>

<mosaic_0001>
module attributes {stable_mosaic.version = 11 : i64} {
  func.func @_fused_forward_kernel(%arg0: memref<16x32xf32, #tpu.memory_space<vmem>>, %arg1: memref<16x16xf32, #tpu.memory_space<vmem>>, %arg2: memref<2x16xf32, #tpu.memory_space<vmem>>, %arg3: memref<2x32x256xf32, #tpu.memory_space<vmem>>, %arg4: memref<19x128xf32, #tpu.memory_space<vmem>>, %arg5: memref<2x1xf32, #tpu.memory_space<vmem>>, %arg6: memref<16x96xf32, #tpu.memory_space<vmem>>) attributes {dimension_semantics = [], scalar_prefetch = 0 : i64, scratch_operands = 1 : i64, tpu.core_type = #tpu.core_type<tc>} {
    %c0 = arith.constant 0 : index
    %c0_0 = arith.constant 0 : index
    %0 = vector.load %arg0[%c0, %c0_0] : memref<16x32xf32, #tpu.memory_space<vmem>>, vector<16x32xf32>
    %c0_1 = arith.constant 0 : index
    %c0_2 = arith.constant 0 : index
    %1 = vector.load %arg4[%c0_1, %c0_2] : memref<19x128xf32, #tpu.memory_space<vmem>>, vector<1x32xf32>
    %c1 = arith.constant 1 : index
    %c0_3 = arith.constant 0 : index
    %2 = vector.load %arg4[%c1, %c0_3] : memref<19x128xf32, #tpu.memory_space<vmem>>, vector<1x32xf32>
    %cst = arith.constant dense<0.000000e+00> : vector<16xf32>
    %3 = vector.multi_reduction <add>, %0, %cst [1] : vector<16x32xf32> to vector<16xf32>
    %4 = vector.shape_cast %3 : vector<16xf32> to vector<16x1xf32>
    %cst_4 = arith.constant 3.200000e+01 : f32
    %5 = vector.broadcast %cst_4 : f32 to vector<16x1xf32>
    %6 = arith.divf %4, %5 : vector<16x1xf32>
    %7 = vector.broadcast %6 : vector<16x1xf32> to vector<16x32xf32>
    %8 = arith.subf %0, %7 : vector<16x32xf32>
    %9 = arith.mulf %8, %8 : vector<16x32xf32>
    %cst_5 = arith.constant dense<0.000000e+00> : vector<16xf32>
    %10 = vector.multi_reduction <add>, %9, %cst_5 [1] : vector<16x32xf32> to vector<16xf32>
    %11 = vector.shape_cast %10 : vector<16xf32> to vector<16x1xf32>
    %cst_6 = arith.constant 3.200000e+01 : f32
    %12 = vector.broadcast %cst_6 : f32 to vector<16x1xf32>
    %13 = arith.divf %11, %12 : vector<16x1xf32>
    %14 = vector.broadcast %6 : vector<16x1xf32> to vector<16x32xf32>
    %15 = arith.subf %0, %14 : vector<16x32xf32>
    %cst_7 = arith.constant 9.99999974E-6 : f32
    %16 = vector.broadcast %cst_7 : f32 to vector<16x1xf32>
    %17 = arith.addf %13, %16 : vector<16x1xf32>
    %18 = math.rsqrt %17 : vector<16x1xf32>
    %19 = vector.broadcast %18 : vector<16x1xf32> to vector<16x32xf32>
    %20 = arith.mulf %15, %19 : vector<16x32xf32>
    %21 = vector.broadcast %1 : vector<1x32xf32> to vector<16x32xf32>
    %22 = arith.mulf %20, %21 : vector<16x32xf32>
    %23 = vector.broadcast %2 : vector<1x32xf32> to vector<16x32xf32>
    %24 = arith.addf %22, %23 : vector<16x32xf32>
    %c0_8 = arith.constant 0 : index
    %c0_9 = arith.constant 0 : index
    %25 = vector.load %arg1[%c0_8, %c0_9] : memref<16x16xf32, #tpu.memory_space<vmem>>, vector<16x16xf32>
    %c3 = arith.constant 3 : index
    %c0_10 = arith.constant 0 : index
    %26 = vector.load %arg4[%c3, %c0_10] : memref<19x128xf32, #tpu.memory_space<vmem>>, vector<1x96xf32>
    %c4 = arith.constant 4 : index
    %c0_11 = arith.constant 0 : index
    %27 = vector.load %arg4[%c4, %c0_11] : memref<19x128xf32, #tpu.memory_space<vmem>>, vector<1x32xf32>
    %c5 = arith.constant 5 : index
    %c0_12 = arith.constant 0 : index
    %28 = vector.load %arg4[%c5, %c0_12] : memref<19x128xf32, #tpu.memory_space<vmem>>, vector<1x32xf32>
    %c6 = arith.constant 6 : index
    %c0_13 = arith.constant 0 : index
    %29 = vector.load %arg4[%c6, %c0_13] : memref<19x128xf32, #tpu.memory_space<vmem>>, vector<1x32xf32>
    %c7 = arith.constant 7 : index
    %c0_14 = arith.constant 0 : index
    %30 = vector.load %arg4[%c7, %c0_14] : memref<19x128xf32, #tpu.memory_space<vmem>>, vector<1x64xf32>
    %c8 = arith.constant 8 : index
    %c0_15 = arith.constant 0 : index
    %31 = vector.load %arg4[%c8, %c0_15] : memref<19x128xf32, #tpu.memory_space<vmem>>, vector<1x32xf32>
    %c9 = arith.constant 9 : index
    %c0_16 = arith.constant 0 : index
    %32 = vector.load %arg4[%c9, %c0_16] : memref<19x128xf32, #tpu.memory_space<vmem>>, vector<1x32xf32>
    %c10 = arith.constant 10 : index
    %c0_17 = arith.constant 0 : index
    %33 = vector.load %arg4[%c10, %c0_17] : memref<19x128xf32, #tpu.memory_space<vmem>>, vector<1x32xf32>
    %c0_18 = arith.constant 0 : index
    %c0_19 = arith.constant 0 : index
    %c0_20 = arith.constant 0 : index
    %34 = vector.load %arg3[%c0_18, %c0_19, %c0_20] : memref<2x32x256xf32, #tpu.memory_space<vmem>>, vector<1x32x96xf32>
    %35 = vector.shape_cast %34 : vector<1x32x96xf32> to vector<32x96xf32>
    %cst_21 = arith.constant dense<0.000000e+00> : vector<16x96xf32>
    %36 = tpu.matmul %24, %35, %cst_21 {dimension_numbers = #tpu.dot_dimension_numbers<[1], [0], [0], [1], [0, 0, 1, 1], [], []>} : vector<16x32xf32>, vector<32x96xf32>, vector<16x96xf32> -> vector<16x96xf32>
    %37 = vector.broadcast %26 : vector<1x96xf32> to vector<16x96xf32>
    %38 = arith.addf %36, %37 : vector<16x96xf32>
    %c0_22 = arith.constant 0 : index
    %c0_23 = arith.constant 0 : index
    %39 = vector.load %arg6[%c0_22, %c0_23] : memref<16x96xf32, #tpu.memory_space<vmem>>, vector<16x96xf32>
    tpu.vector_store %arg6[%c0_22, %c0_23], %38 {strides = array<i32>} : memref<16x96xf32, #tpu.memory_space<vmem>>, vector<16x96xf32>,
    %c0_24 = arith.constant 0 : index
    %c0_25 = arith.constant 0 : index
    %40 = vector.load %arg6[%c0_24, %c0_25] : memref<16x96xf32, #tpu.memory_space<vmem>>, vector<16x8xf32>
    %c0_26 = arith.constant 0 : index
    %c32 = arith.constant 32 : index
    %41 = vector.load %arg6[%c0_26, %c32] : memref<16x96xf32, #tpu.memory_space<vmem>>, vector<16x8xf32>
    %cst_27 = arith.constant dense<0.000000e+00> : vector<16x16xf32>
    %42 = tpu.matmul %40, %41, %cst_27 {dimension_numbers = #tpu.dot_dimension_numbers<[1], [1], [0], [0], [0, 0, 1, 0], [], []>} : vector<16x8xf32>, vector<16x8xf32>, vector<16x16xf32> -> vector<16x16xf32>
    %cst_28 = arith.constant 0.353553385 : f32
    %43 = vector.broadcast %cst_28 : f32 to vector<16x16xf32>
    %44 = arith.mulf %42, %43 : vector<16x16xf32>
    %45 = arith.addf %44, %25 : vector<16x16xf32>
    %cst_29 = arith.constant dense<0xFF800000> : vector<16xf32>
    %46 = vector.multi_reduction <maximumf>, %45, %cst_29 [1] : vector<16x16xf32> to vector<16xf32>
    %47 = vector.shape_cast %46 : vector<16xf32> to vector<16x1xf32>
    %48 = vector.broadcast %47 : vector<16x1xf32> to vector<16x16xf32>
    %49 = arith.subf %45, %48 : vector<16x16xf32>
    %c0_30 = arith.constant 0 : index
    %c8_31 = arith.constant 8 : index
    %50 = vector.load %arg6[%c0_30, %c8_31] : memref<16x96xf32, #tpu.memory_space<vmem>>, vector<16x8xf32>
    %c0_32 = arith.constant 0 : index
    %c40 = arith.constant 40 : index
    %51 = vector.load %arg6[%c0_32, %c40] : memref<16x96xf32, #tpu.memory_space<vmem>>, vector<16x8xf32>
    %cst_33 = arith.constant dense<0.000000e+00> : vector<16x16xf32>
    %52 = tpu.matmul %50, %51, %cst_33 {dimension_numbers = #tpu.dot_dimension_numbers<[1], [1], [0], [0], [0, 0, 1, 0], [], []>} : vector<16x8xf32>, vector<16x8xf32>, vector<16x16xf32> -> vector<16x16xf32>
    %cst_34 = arith.constant 0.353553385 : f32
    %53 = vector.broadcast %cst_34 : f32 to vector<16x16xf32>
    %54 = arith.mulf %52, %53 : vector<16x16xf32>
    %55 = arith.addf %54, %25 : vector<16x16xf32>
    %cst_35 = arith.constant dense<0xFF800000> : vector<16xf32>
    %56 = vector.multi_reduction <maximumf>, %55, %cst_35 [1] : vector<16x16xf32> to vector<16xf32>
    %57 = vector.shape_cast %56 : vector<16xf32> to vector<16x1xf32>
    %58 = vector.broadcast %57 : vector<16x1xf32> to vector<16x16xf32>
    %59 = arith.subf %55, %58 : vector<16x16xf32>
    %c0_36 = arith.constant 0 : index
    %c16 = arith.constant 16 : index
    %60 = vector.load %arg6[%c0_36, %c16] : memref<16x96xf32, #tpu.memory_space<vmem>>, vector<16x8xf32>
    %c0_37 = arith.constant 0 : index
    %c48 = arith.constant 48 : index
    %61 = vector.load %arg6[%c0_37, %c48] : memref<16x96xf32, #tpu.memory_space<vmem>>, vector<16x8xf32>
    %cst_38 = arith.constant dense<0.000000e+00> : vector<16x16xf32>
    %62 = tpu.matmul %60, %61, %cst_38 {dimension_numbers = #tpu.dot_dimension_numbers<[1], [1], [0], [0], [0, 0, 1, 0], [], []>} : vector<16x8xf32>, vector<16x8xf32>, vector<16x16xf32> -> vector<16x16xf32>
    %cst_39 = arith.constant 0.353553385 : f32
    %63 = vector.broadcast %cst_39 : f32 to vector<16x16xf32>
    %64 = arith.mulf %62, %63 : vector<16x16xf32>
    %65 = arith.addf %64, %25 : vector<16x16xf32>
    %cst_40 = arith.constant dense<0xFF800000> : vector<16xf32>
    %66 = vector.multi_reduction <maximumf>, %65, %cst_40 [1] : vector<16x16xf32> to vector<16xf32>
    %67 = vector.shape_cast %66 : vector<16xf32> to vector<16x1xf32>
    %68 = vector.broadcast %67 : vector<16x1xf32> to vector<16x16xf32>
    %69 = arith.subf %65, %68 : vector<16x16xf32>
    %c0_41 = arith.constant 0 : index
    %c24 = arith.constant 24 : index
    %70 = vector.load %arg6[%c0_41, %c24] : memref<16x96xf32, #tpu.memory_space<vmem>>, vector<16x8xf32>
    %c0_42 = arith.constant 0 : index
    %c56 = arith.constant 56 : index
    %71 = vector.load %arg6[%c0_42, %c56] : memref<16x96xf32, #tpu.memory_space<vmem>>, vector<16x8xf32>
    %cst_43 = arith.constant dense<0.000000e+00> : vector<16x16xf32>
    %72 = tpu.matmul %70, %71, %cst_43 {dimension_numbers = #tpu.dot_dimension_numbers<[1], [1], [0], [0], [0, 0, 1, 0], [], []>} : vector<16x8xf32>, vector<16x8xf32>, vector<16x16xf32> -> vector<16x16xf32>
    %cst_44 = arith.constant 0.353553385 : f32
    %73 = vector.broadcast %cst_44 : f32 to vector<16x16xf32>
    %74 = arith.mulf %72, %73 : vector<16x16xf32>
    %75 = arith.addf %74, %25 : vector<16x16xf32>
    %cst_45 = arith.constant dense<0xFF800000> : vector<16xf32>
    %76 = vector.multi_reduction <maximumf>, %75, %cst_45 [1] : vector<16x16xf32> to vector<16xf32>
    %77 = vector.shape_cast %76 : vector<16xf32> to vector<16x1xf32>
    %78 = vector.broadcast %77 : vector<16x1xf32> to vector<16x16xf32>
    %79 = arith.subf %75, %78 : vector<16x16xf32>
    %80 = tpu.concatenate %49, %59, %69, %79 in 1 : vector<16x16xf32>, vector<16x16xf32>, vector<16x16xf32>, vector<16x16xf32> -> vector<16x64xf32>
    %81 = math.exp %80 : vector<16x64xf32>
    %82 = vector.extract_strided_slice %81 {offsets = [0, 0], sizes = [16, 16], strides = [1, 1]} : vector<16x64xf32> to vector<16x16xf32>
    %cst_46 = arith.constant dense<0.000000e+00> : vector<16xf32>
    %83 = vector.multi_reduction <add>, %82, %cst_46 [1] : vector<16x16xf32> to vector<16xf32>
    %84 = vector.shape_cast %83 : vector<16xf32> to vector<16x1xf32>
    %85 = tpu.reciprocal %84 {approx = true} : vector<16x1xf32> -> vector<16x1xf32>
    %c0_47 = arith.constant 0 : index
    %c64 = arith.constant 64 : index
    %86 = vector.load %arg6[%c0_47, %c64] : memref<16x96xf32, #tpu.memory_space<vmem>>, vector<16x8xf32>
    %cst_48 = arith.constant dense<0.000000e+00> : vector<16x8xf32>
    %87 = tpu.matmul %82, %86, %cst_48 {dimension_numbers = #tpu.dot_dimension_numbers<[1], [0], [0], [1], [0, 0, 1, 1], [], []>} : vector<16x16xf32>, vector<16x8xf32>, vector<16x8xf32> -> vector<16x8xf32>
    %88 = vector.broadcast %85 : vector<16x1xf32> to vector<16x8xf32>
    %89 = arith.mulf %87, %88 : vector<16x8xf32>
    %90 = vector.extract_strided_slice %81 {offsets = [0, 16], sizes = [16, 16], strides = [1, 1]} : vector<16x64xf32> to vector<16x16xf32>
    %cst_49 = arith.constant dense<0.000000e+00> : vector<16xf32>
    %91 = vector.multi_reduction <add>, %90, %cst_49 [1] : vector<16x16xf32> to vector<16xf32>
    %92 = vector.shape_cast %91 : vector<16xf32> to vector<16x1xf32>
    %93 = tpu.reciprocal %92 {approx = true} : vector<16x1xf32> -> vector<16x1xf32>
    %c0_50 = arith.constant 0 : index
    %c72 = arith.constant 72 : index
    %94 = vector.load %arg6[%c0_50, %c72] : memref<16x96xf32, #tpu.memory_space<vmem>>, vector<16x8xf32>
    %cst_51 = arith.constant dense<0.000000e+00> : vector<16x8xf32>
    %95 = tpu.matmul %90, %94, %cst_51 {dimension_numbers = #tpu.dot_dimension_numbers<[1], [0], [0], [1], [0, 0, 1, 1], [], []>} : vector<16x16xf32>, vector<16x8xf32>, vector<16x8xf32> -> vector<16x8xf32>
    %96 = vector.broadcast %93 : vector<16x1xf32> to vector<16x8xf32>
    %97 = arith.mulf %95, %96 : vector<16x8xf32>
    %98 = vector.extract_strided_slice %81 {offsets = [0, 32], sizes = [16, 16], strides = [1, 1]} : vector<16x64xf32> to vector<16x16xf32>
    %cst_52 = arith.constant dense<0.000000e+00> : vector<16xf32>
    %99 = vector.multi_reduction <add>, %98, %cst_52 [1] : vector<16x16xf32> to vector<16xf32>
    %100 = vector.shape_cast %99 : vector<16xf32> to vector<16x1xf32>
    %101 = tpu.reciprocal %100 {approx = true} : vector<16x1xf32> -> vector<16x1xf32>
    %c0_53 = arith.constant 0 : index
    %c80 = arith.constant 80 : index
    %102 = vector.load %arg6[%c0_53, %c80] : memref<16x96xf32, #tpu.memory_space<vmem>>, vector<16x8xf32>
    %cst_54 = arith.constant dense<0.000000e+00> : vector<16x8xf32>
    %103 = tpu.matmul %98, %102, %cst_54 {dimension_numbers = #tpu.dot_dimension_numbers<[1], [0], [0], [1], [0, 0, 1, 1], [], []>} : vector<16x16xf32>, vector<16x8xf32>, vector<16x8xf32> -> vector<16x8xf32>
    %104 = vector.broadcast %101 : vector<16x1xf32> to vector<16x8xf32>
    %105 = arith.mulf %103, %104 : vector<16x8xf32>
    %106 = vector.extract_strided_slice %81 {offsets = [0, 48], sizes = [16, 16], strides = [1, 1]} : vector<16x64xf32> to vector<16x16xf32>
    %cst_55 = arith.constant dense<0.000000e+00> : vector<16xf32>
    %107 = vector.multi_reduction <add>, %106, %cst_55 [1] : vector<16x16xf32> to vector<16xf32>
    %108 = vector.shape_cast %107 : vector<16xf32> to vector<16x1xf32>
    %109 = tpu.reciprocal %108 {approx = true} : vector<16x1xf32> -> vector<16x1xf32>
    %c0_56 = arith.constant 0 : index
    %c88 = arith.constant 88 : index
    %110 = vector.load %arg6[%c0_56, %c88] : memref<16x96xf32, #tpu.memory_space<vmem>>, vector<16x8xf32>
    %cst_57 = arith.constant dense<0.000000e+00> : vector<16x8xf32>
    %111 = tpu.matmul %106, %110, %cst_57 {dimension_numbers = #tpu.dot_dimension_numbers<[1], [0], [0], [1], [0, 0, 1, 1], [], []>} : vector<16x16xf32>, vector<16x8xf32>, vector<16x8xf32> -> vector<16x8xf32>
    %112 = vector.broadcast %109 : vector<16x1xf32> to vector<16x8xf32>
    %113 = arith.mulf %111, %112 : vector<16x8xf32>
    %114 = tpu.concatenate %89, %97, %105, %113 in 1 : vector<16x8xf32>, vector<16x8xf32>, vector<16x8xf32>, vector<16x8xf32> -> vector<16x32xf32>
    %c0_58 = arith.constant 0 : index
    %c0_59 = arith.constant 0 : index
    %c96 = arith.constant 96 : index
    %115 = vector.load %arg3[%c0_58, %c0_59, %c96] : memref<2x32x256xf32, #tpu.memory_space<vmem>>, vector<1x32x32xf32>
    %116 = vector.shape_cast %115 : vector<1x32x32xf32> to vector<32x32xf32>
    %cst_60 = arith.constant dense<0.000000e+00> : vector<16x32xf32>
    %117 = tpu.matmul %114, %116, %cst_60 {dimension_numbers = #tpu.dot_dimension_numbers<[1], [0], [0], [1], [0, 0, 1, 1], [], []>} : vector<16x32xf32>, vector<32x32xf32>, vector<16x32xf32> -> vector<16x32xf32>
    %118 = vector.broadcast %27 : vector<1x32xf32> to vector<16x32xf32>
    %119 = arith.addf %117, %118 : vector<16x32xf32>
    %120 = arith.addf %119, %24 : vector<16x32xf32>
    %cst_61 = arith.constant dense<0.000000e+00> : vector<16xf32>
    %121 = vector.multi_reduction <add>, %120, %cst_61 [1] : vector<16x32xf32> to vector<16xf32>
    %122 = vector.shape_cast %121 : vector<16xf32> to vector<16x1xf32>
    %cst_62 = arith.constant 3.200000e+01 : f32
    %123 = vector.broadcast %cst_62 : f32 to vector<16x1xf32>
    %124 = arith.divf %122, %123 : vector<16x1xf32>
    %125 = vector.broadcast %124 : vector<16x1xf32> to vector<16x32xf32>
    %126 = arith.subf %120, %125 : vector<16x32xf32>
    %127 = arith.mulf %126, %126 : vector<16x32xf32>
    %cst_63 = arith.constant dense<0.000000e+00> : vector<16xf32>
    %128 = vector.multi_reduction <add>, %127, %cst_63 [1] : vector<16x32xf32> to vector<16xf32>
    %129 = vector.shape_cast %128 : vector<16xf32> to vector<16x1xf32>
    %cst_64 = arith.constant 3.200000e+01 : f32
    %130 = vector.broadcast %cst_64 : f32 to vector<16x1xf32>
    %131 = arith.divf %129, %130 : vector<16x1xf32>
    %132 = vector.broadcast %124 : vector<16x1xf32> to vector<16x32xf32>
    %133 = arith.subf %120, %132 : vector<16x32xf32>
    %cst_65 = arith.constant 9.99999974E-6 : f32
    %134 = vector.broadcast %cst_65 : f32 to vector<16x1xf32>
    %135 = arith.addf %131, %134 : vector<16x1xf32>
    %136 = math.rsqrt %135 : vector<16x1xf32>
    %137 = vector.broadcast %136 : vector<16x1xf32> to vector<16x32xf32>
    %138 = arith.mulf %133, %137 : vector<16x32xf32>
    %139 = vector.broadcast %28 : vector<1x32xf32> to vector<16x32xf32>
    %140 = arith.mulf %138, %139 : vector<16x32xf32>
    %141 = vector.broadcast %29 : vector<1x32xf32> to vector<16x32xf32>
    %142 = arith.addf %140, %141 : vector<16x32xf32>
    %c0_66 = arith.constant 0 : index
    %c0_67 = arith.constant 0 : index
    %c128 = arith.constant 128 : index
    %143 = vector.load %arg3[%c0_66, %c0_67, %c128] : memref<2x32x256xf32, #tpu.memory_space<vmem>>, vector<1x32x64xf32>
    %144 = vector.shape_cast %143 : vector<1x32x64xf32> to vector<32x64xf32>
    %cst_68 = arith.constant dense<0.000000e+00> : vector<16x64xf32>
    %145 = tpu.matmul %142, %144, %cst_68 {dimension_numbers = #tpu.dot_dimension_numbers<[1], [0], [0], [1], [0, 0, 1, 1], [], []>} : vector<16x32xf32>, vector<32x64xf32>, vector<16x64xf32> -> vector<16x64xf32>
    %146 = vector.broadcast %30 : vector<1x64xf32> to vector<16x64xf32>
    %147 = arith.addf %145, %146 : vector<16x64xf32>
    %148 = arith.mulf %147, %147 : vector<16x64xf32>
    %149 = arith.mulf %147, %148 : vector<16x64xf32>
    %cst_69 = arith.constant 4.471500e-02 : f32
    %150 = vector.broadcast %cst_69 : f32 to vector<16x64xf32>
    %151 = arith.mulf %150, %149 : vector<16x64xf32>
    %152 = arith.addf %147, %151 : vector<16x64xf32>
    %cst_70 = arith.constant 0.797884583 : f32
    %153 = vector.broadcast %cst_70 : f32 to vector<16x64xf32>
    %154 = arith.mulf %153, %152 : vector<16x64xf32>
    %155 = math.tanh %154 : vector<16x64xf32>
    %cst_71 = arith.constant 1.000000e+00 : f32
    %156 = vector.broadcast %cst_71 : f32 to vector<16x64xf32>
    %157 = arith.addf %156, %155 : vector<16x64xf32>
    %cst_72 = arith.constant 5.000000e-01 : f32
    %158 = vector.broadcast %cst_72 : f32 to vector<16x64xf32>
    %159 = arith.mulf %158, %157 : vector<16x64xf32>
    %160 = arith.mulf %147, %159 : vector<16x64xf32>
    %c0_73 = arith.constant 0 : index
    %c0_74 = arith.constant 0 : index
    %c192 = arith.constant 192 : index
    %161 = vector.load %arg3[%c0_73, %c0_74, %c192] : memref<2x32x256xf32, #tpu.memory_space<vmem>>, vector<1x32x64xf32>
    %162 = vector.shape_cast %161 : vector<1x32x64xf32> to vector<32x64xf32>
    %cst_75 = arith.constant dense<0.000000e+00> : vector<16x32xf32>
    %163 = tpu.matmul %160, %162, %cst_75 {dimension_numbers = #tpu.dot_dimension_numbers<[1], [1], [0], [0], [0, 0, 1, 0], [], []>} : vector<16x64xf32>, vector<32x64xf32>, vector<16x32xf32> -> vector<16x32xf32>
    %164 = vector.broadcast %31 : vector<1x32xf32> to vector<16x32xf32>
    %165 = arith.addf %163, %164 : vector<16x32xf32>
    %166 = arith.addf %165, %142 : vector<16x32xf32>
    %cst_76 = arith.constant dense<0.000000e+00> : vector<16xf32>
    %167 = vector.multi_reduction <add>, %166, %cst_76 [1] : vector<16x32xf32> to vector<16xf32>
    %168 = vector.shape_cast %167 : vector<16xf32> to vector<16x1xf32>
    %cst_77 = arith.constant 3.200000e+01 : f32
    %169 = vector.broadcast %cst_77 : f32 to vector<16x1xf32>
    %170 = arith.divf %168, %169 : vector<16x1xf32>
    %171 = vector.broadcast %170 : vector<16x1xf32> to vector<16x32xf32>
    %172 = arith.subf %166, %171 : vector<16x32xf32>
    %173 = arith.mulf %172, %172 : vector<16x32xf32>
    %cst_78 = arith.constant dense<0.000000e+00> : vector<16xf32>
    %174 = vector.multi_reduction <add>, %173, %cst_78 [1] : vector<16x32xf32> to vector<16xf32>
    %175 = vector.shape_cast %174 : vector<16xf32> to vector<16x1xf32>
    %cst_79 = arith.constant 3.200000e+01 : f32
    %176 = vector.broadcast %cst_79 : f32 to vector<16x1xf32>
    %177 = arith.divf %175, %176 : vector<16x1xf32>
    %178 = vector.broadcast %170 : vector<16x1xf32> to vector<16x32xf32>
    %179 = arith.subf %166, %178 : vector<16x32xf32>
    %cst_80 = arith.constant 9.99999974E-6 : f32
    %180 = vector.broadcast %cst_80 : f32 to vector<16x1xf32>
    %181 = arith.addf %177, %180 : vector<16x1xf32>
    %182 = math.rsqrt %181 : vector<16x1xf32>
    %183 = vector.broadcast %182 : vector<16x1xf32> to vector<16x32xf32>
    %184 = arith.mulf %179, %183 : vector<16x32xf32>
    %185 = vector.broadcast %32 : vector<1x32xf32> to vector<16x32xf32>
    %186 = arith.mulf %184, %185 : vector<16x32xf32>
    %187 = vector.broadcast %33 : vector<1x32xf32> to vector<16x32xf32>
    %188 = arith.addf %186, %187 : vector<16x32xf32>
    %c11 = arith.constant 11 : index
    %c0_81 = arith.constant 0 : index
    %189 = vector.load %arg4[%c11, %c0_81] : memref<19x128xf32, #tpu.memory_space<vmem>>, vector<1x96xf32>
    %c12 = arith.constant 12 : index
    %c0_82 = arith.constant 0 : index
    %190 = vector.load %arg4[%c12, %c0_82] : memref<19x128xf32, #tpu.memory_space<vmem>>, vector<1x32xf32>
    %c13 = arith.constant 13 : index
    %c0_83 = arith.constant 0 : index
    %191 = vector.load %arg4[%c13, %c0_83] : memref<19x128xf32, #tpu.memory_space<vmem>>, vector<1x32xf32>
    %c14 = arith.constant 14 : index
    %c0_84 = arith.constant 0 : index
    %192 = vector.load %arg4[%c14, %c0_84] : memref<19x128xf32, #tpu.memory_space<vmem>>, vector<1x32xf32>
    %c15 = arith.constant 15 : index
    %c0_85 = arith.constant 0 : index
    %193 = vector.load %arg4[%c15, %c0_85] : memref<19x128xf32, #tpu.memory_space<vmem>>, vector<1x64xf32>
    %c16_86 = arith.constant 16 : index
    %c0_87 = arith.constant 0 : index
    %194 = vector.load %arg4[%c16_86, %c0_87] : memref<19x128xf32, #tpu.memory_space<vmem>>, vector<1x32xf32>
    %c17 = arith.constant 17 : index
    %c0_88 = arith.constant 0 : index
    %195 = vector.load %arg4[%c17, %c0_88] : memref<19x128xf32, #tpu.memory_space<vmem>>, vector<1x32xf32>
    %c18 = arith.constant 18 : index
    %c0_89 = arith.constant 0 : index
    %196 = vector.load %arg4[%c18, %c0_89] : memref<19x128xf32, #tpu.memory_space<vmem>>, vector<1x32xf32>
    %c1_90 = arith.constant 1 : index
    %c0_91 = arith.constant 0 : index
    %c0_92 = arith.constant 0 : index
    %197 = vector.load %arg3[%c1_90, %c0_91, %c0_92] : memref<2x32x256xf32, #tpu.memory_space<vmem>>, vector<1x32x96xf32>
    %198 = vector.shape_cast %197 : vector<1x32x96xf32> to vector<32x96xf32>
    %cst_93 = arith.constant dense<0.000000e+00> : vector<16x96xf32>
    %199 = tpu.matmul %188, %198, %cst_93 {dimension_numbers = #tpu.dot_dimension_numbers<[1], [0], [0], [1], [0, 0, 1, 1], [], []>} : vector<16x32xf32>, vector<32x96xf32>, vector<16x96xf32> -> vector<16x96xf32>
    %200 = vector.broadcast %189 : vector<1x96xf32> to vector<16x96xf32>
    %201 = arith.addf %199, %200 : vector<16x96xf32>
    %c0_94 = arith.constant 0 : index
    %c0_95 = arith.constant 0 : index
    %202 = vector.load %arg6[%c0_94, %c0_95] : memref<16x96xf32, #tpu.memory_space<vmem>>, vector<16x96xf32>
    tpu.vector_store %arg6[%c0_94, %c0_95], %201 {strides = array<i32>} : memref<16x96xf32, #tpu.memory_space<vmem>>, vector<16x96xf32>,
    %c0_96 = arith.constant 0 : index
    %c0_97 = arith.constant 0 : index
    %203 = vector.load %arg6[%c0_96, %c0_97] : memref<16x96xf32, #tpu.memory_space<vmem>>, vector<16x8xf32>
    %c0_98 = arith.constant 0 : index
    %c32_99 = arith.constant 32 : index
    %204 = vector.load %arg6[%c0_98, %c32_99] : memref<16x96xf32, #tpu.memory_space<vmem>>, vector<16x8xf32>
    %cst_100 = arith.constant dense<0.000000e+00> : vector<16x16xf32>
    %205 = tpu.matmul %203, %204, %cst_100 {dimension_numbers = #tpu.dot_dimension_numbers<[1], [1], [0], [0], [0, 0, 1, 0], [], []>} : vector<16x8xf32>, vector<16x8xf32>, vector<16x16xf32> -> vector<16x16xf32>
    %cst_101 = arith.constant 0.353553385 : f32
    %206 = vector.broadcast %cst_101 : f32 to vector<16x16xf32>
    %207 = arith.mulf %205, %206 : vector<16x16xf32>
    %208 = arith.addf %207, %25 : vector<16x16xf32>
    %cst_102 = arith.constant dense<0xFF800000> : vector<16xf32>
    %209 = vector.multi_reduction <maximumf>, %208, %cst_102 [1] : vector<16x16xf32> to vector<16xf32>
    %210 = vector.shape_cast %209 : vector<16xf32> to vector<16x1xf32>
    %211 = vector.broadcast %210 : vector<16x1xf32> to vector<16x16xf32>
    %212 = arith.subf %208, %211 : vector<16x16xf32>
    %c0_103 = arith.constant 0 : index
    %c8_104 = arith.constant 8 : index
    %213 = vector.load %arg6[%c0_103, %c8_104] : memref<16x96xf32, #tpu.memory_space<vmem>>, vector<16x8xf32>
    %c0_105 = arith.constant 0 : index
    %c40_106 = arith.constant 40 : index
    %214 = vector.load %arg6[%c0_105, %c40_106] : memref<16x96xf32, #tpu.memory_space<vmem>>, vector<16x8xf32>
    %cst_107 = arith.constant dense<0.000000e+00> : vector<16x16xf32>
    %215 = tpu.matmul %213, %214, %cst_107 {dimension_numbers = #tpu.dot_dimension_numbers<[1], [1], [0], [0], [0, 0, 1, 0], [], []>} : vector<16x8xf32>, vector<16x8xf32>, vector<16x16xf32> -> vector<16x16xf32>
    %cst_108 = arith.constant 0.353553385 : f32
    %216 = vector.broadcast %cst_108 : f32 to vector<16x16xf32>
    %217 = arith.mulf %215, %216 : vector<16x16xf32>
    %218 = arith.addf %217, %25 : vector<16x16xf32>
    %cst_109 = arith.constant dense<0xFF800000> : vector<16xf32>
    %219 = vector.multi_reduction <maximumf>, %218, %cst_109 [1] : vector<16x16xf32> to vector<16xf32>
    %220 = vector.shape_cast %219 : vector<16xf32> to vector<16x1xf32>
    %221 = vector.broadcast %220 : vector<16x1xf32> to vector<16x16xf32>
    %222 = arith.subf %218, %221 : vector<16x16xf32>
    %c0_110 = arith.constant 0 : index
    %c16_111 = arith.constant 16 : index
    %223 = vector.load %arg6[%c0_110, %c16_111] : memref<16x96xf32, #tpu.memory_space<vmem>>, vector<16x8xf32>
    %c0_112 = arith.constant 0 : index
    %c48_113 = arith.constant 48 : index
    %224 = vector.load %arg6[%c0_112, %c48_113] : memref<16x96xf32, #tpu.memory_space<vmem>>, vector<16x8xf32>
    %cst_114 = arith.constant dense<0.000000e+00> : vector<16x16xf32>
    %225 = tpu.matmul %223, %224, %cst_114 {dimension_numbers = #tpu.dot_dimension_numbers<[1], [1], [0], [0], [0, 0, 1, 0], [], []>} : vector<16x8xf32>, vector<16x8xf32>, vector<16x16xf32> -> vector<16x16xf32>
    %cst_115 = arith.constant 0.353553385 : f32
    %226 = vector.broadcast %cst_115 : f32 to vector<16x16xf32>
    %227 = arith.mulf %225, %226 : vector<16x16xf32>
    %228 = arith.addf %227, %25 : vector<16x16xf32>
    %cst_116 = arith.constant dense<0xFF800000> : vector<16xf32>
    %229 = vector.multi_reduction <maximumf>, %228, %cst_116 [1] : vector<16x16xf32> to vector<16xf32>
    %230 = vector.shape_cast %229 : vector<16xf32> to vector<16x1xf32>
    %231 = vector.broadcast %230 : vector<16x1xf32> to vector<16x16xf32>
    %232 = arith.subf %228, %231 : vector<16x16xf32>
    %c0_117 = arith.constant 0 : index
    %c24_118 = arith.constant 24 : index
    %233 = vector.load %arg6[%c0_117, %c24_118] : memref<16x96xf32, #tpu.memory_space<vmem>>, vector<16x8xf32>
    %c0_119 = arith.constant 0 : index
    %c56_120 = arith.constant 56 : index
    %234 = vector.load %arg6[%c0_119, %c56_120] : memref<16x96xf32, #tpu.memory_space<vmem>>, vector<16x8xf32>
    %cst_121 = arith.constant dense<0.000000e+00> : vector<16x16xf32>
    %235 = tpu.matmul %233, %234, %cst_121 {dimension_numbers = #tpu.dot_dimension_numbers<[1], [1], [0], [0], [0, 0, 1, 0], [], []>} : vector<16x8xf32>, vector<16x8xf32>, vector<16x16xf32> -> vector<16x16xf32>
    %cst_122 = arith.constant 0.353553385 : f32
    %236 = vector.broadcast %cst_122 : f32 to vector<16x16xf32>
    %237 = arith.mulf %235, %236 : vector<16x16xf32>
    %238 = arith.addf %237, %25 : vector<16x16xf32>
    %cst_123 = arith.constant dense<0xFF800000> : vector<16xf32>
    %239 = vector.multi_reduction <maximumf>, %238, %cst_123 [1] : vector<16x16xf32> to vector<16xf32>
    %240 = vector.shape_cast %239 : vector<16xf32> to vector<16x1xf32>
    %241 = vector.broadcast %240 : vector<16x1xf32> to vector<16x16xf32>
    %242 = arith.subf %238, %241 : vector<16x16xf32>
    %243 = tpu.concatenate %212, %222, %232, %242 in 1 : vector<16x16xf32>, vector<16x16xf32>, vector<16x16xf32>, vector<16x16xf32> -> vector<16x64xf32>
    %244 = math.exp %243 : vector<16x64xf32>
    %245 = vector.extract_strided_slice %244 {offsets = [0, 0], sizes = [16, 16], strides = [1, 1]} : vector<16x64xf32> to vector<16x16xf32>
    %cst_124 = arith.constant dense<0.000000e+00> : vector<16xf32>
    %246 = vector.multi_reduction <add>, %245, %cst_124 [1] : vector<16x16xf32> to vector<16xf32>
    %247 = vector.shape_cast %246 : vector<16xf32> to vector<16x1xf32>
    %248 = tpu.reciprocal %247 {approx = true} : vector<16x1xf32> -> vector<16x1xf32>
    %c0_125 = arith.constant 0 : index
    %c64_126 = arith.constant 64 : index
    %249 = vector.load %arg6[%c0_125, %c64_126] : memref<16x96xf32, #tpu.memory_space<vmem>>, vector<16x8xf32>
    %cst_127 = arith.constant dense<0.000000e+00> : vector<16x8xf32>
    %250 = tpu.matmul %245, %249, %cst_127 {dimension_numbers = #tpu.dot_dimension_numbers<[1], [0], [0], [1], [0, 0, 1, 1], [], []>} : vector<16x16xf32>, vector<16x8xf32>, vector<16x8xf32> -> vector<16x8xf32>
    %251 = vector.broadcast %248 : vector<16x1xf32> to vector<16x8xf32>
    %252 = arith.mulf %250, %251 : vector<16x8xf32>
    %253 = vector.extract_strided_slice %244 {offsets = [0, 16], sizes = [16, 16], strides = [1, 1]} : vector<16x64xf32> to vector<16x16xf32>
    %cst_128 = arith.constant dense<0.000000e+00> : vector<16xf32>
    %254 = vector.multi_reduction <add>, %253, %cst_128 [1] : vector<16x16xf32> to vector<16xf32>
    %255 = vector.shape_cast %254 : vector<16xf32> to vector<16x1xf32>
    %256 = tpu.reciprocal %255 {approx = true} : vector<16x1xf32> -> vector<16x1xf32>
    %c0_129 = arith.constant 0 : index
    %c72_130 = arith.constant 72 : index
    %257 = vector.load %arg6[%c0_129, %c72_130] : memref<16x96xf32, #tpu.memory_space<vmem>>, vector<16x8xf32>
    %cst_131 = arith.constant dense<0.000000e+00> : vector<16x8xf32>
    %258 = tpu.matmul %253, %257, %cst_131 {dimension_numbers = #tpu.dot_dimension_numbers<[1], [0], [0], [1], [0, 0, 1, 1], [], []>} : vector<16x16xf32>, vector<16x8xf32>, vector<16x8xf32> -> vector<16x8xf32>
    %259 = vector.broadcast %256 : vector<16x1xf32> to vector<16x8xf32>
    %260 = arith.mulf %258, %259 : vector<16x8xf32>
    %261 = vector.extract_strided_slice %244 {offsets = [0, 32], sizes = [16, 16], strides = [1, 1]} : vector<16x64xf32> to vector<16x16xf32>
    %cst_132 = arith.constant dense<0.000000e+00> : vector<16xf32>
    %262 = vector.multi_reduction <add>, %261, %cst_132 [1] : vector<16x16xf32> to vector<16xf32>
    %263 = vector.shape_cast %262 : vector<16xf32> to vector<16x1xf32>
    %264 = tpu.reciprocal %263 {approx = true} : vector<16x1xf32> -> vector<16x1xf32>
    %c0_133 = arith.constant 0 : index
    %c80_134 = arith.constant 80 : index
    %265 = vector.load %arg6[%c0_133, %c80_134] : memref<16x96xf32, #tpu.memory_space<vmem>>, vector<16x8xf32>
    %cst_135 = arith.constant dense<0.000000e+00> : vector<16x8xf32>
    %266 = tpu.matmul %261, %265, %cst_135 {dimension_numbers = #tpu.dot_dimension_numbers<[1], [0], [0], [1], [0, 0, 1, 1], [], []>} : vector<16x16xf32>, vector<16x8xf32>, vector<16x8xf32> -> vector<16x8xf32>
    %267 = vector.broadcast %264 : vector<16x1xf32> to vector<16x8xf32>
    %268 = arith.mulf %266, %267 : vector<16x8xf32>
    %269 = vector.extract_strided_slice %244 {offsets = [0, 48], sizes = [16, 16], strides = [1, 1]} : vector<16x64xf32> to vector<16x16xf32>
    %cst_136 = arith.constant dense<0.000000e+00> : vector<16xf32>
    %270 = vector.multi_reduction <add>, %269, %cst_136 [1] : vector<16x16xf32> to vector<16xf32>
    %271 = vector.shape_cast %270 : vector<16xf32> to vector<16x1xf32>
    %272 = tpu.reciprocal %271 {approx = true} : vector<16x1xf32> -> vector<16x1xf32>
    %c0_137 = arith.constant 0 : index
    %c88_138 = arith.constant 88 : index
    %273 = vector.load %arg6[%c0_137, %c88_138] : memref<16x96xf32, #tpu.memory_space<vmem>>, vector<16x8xf32>
    %cst_139 = arith.constant dense<0.000000e+00> : vector<16x8xf32>
    %274 = tpu.matmul %269, %273, %cst_139 {dimension_numbers = #tpu.dot_dimension_numbers<[1], [0], [0], [1], [0, 0, 1, 1], [], []>} : vector<16x16xf32>, vector<16x8xf32>, vector<16x8xf32> -> vector<16x8xf32>
    %275 = vector.broadcast %272 : vector<16x1xf32> to vector<16x8xf32>
    %276 = arith.mulf %274, %275 : vector<16x8xf32>
    %277 = tpu.concatenate %252, %260, %268, %276 in 1 : vector<16x8xf32>, vector<16x8xf32>, vector<16x8xf32>, vector<16x8xf32> -> vector<16x32xf32>
    %c1_140 = arith.constant 1 : index
    %c0_141 = arith.constant 0 : index
    %c96_142 = arith.constant 96 : index
    %278 = vector.load %arg3[%c1_140, %c0_141, %c96_142] : memref<2x32x256xf32, #tpu.memory_space<vmem>>, vector<1x32x32xf32>
    %279 = vector.shape_cast %278 : vector<1x32x32xf32> to vector<32x32xf32>
    %cst_143 = arith.constant dense<0.000000e+00> : vector<16x32xf32>
    %280 = tpu.matmul %277, %279, %cst_143 {dimension_numbers = #tpu.dot_dimension_numbers<[1], [0], [0], [1], [0, 0, 1, 1], [], []>} : vector<16x32xf32>, vector<32x32xf32>, vector<16x32xf32> -> vector<16x32xf32>
    %281 = vector.broadcast %190 : vector<1x32xf32> to vector<16x32xf32>
    %282 = arith.addf %280, %281 : vector<16x32xf32>
    %283 = arith.addf %282, %188 : vector<16x32xf32>
    %cst_144 = arith.constant dense<0.000000e+00> : vector<16xf32>
    %284 = vector.multi_reduction <add>, %283, %cst_144 [1] : vector<16x32xf32> to vector<16xf32>
    %285 = vector.shape_cast %284 : vector<16xf32> to vector<16x1xf32>
    %cst_145 = arith.constant 3.200000e+01 : f32
    %286 = vector.broadcast %cst_145 : f32 to vector<16x1xf32>
    %287 = arith.divf %285, %286 : vector<16x1xf32>
    %288 = vector.broadcast %287 : vector<16x1xf32> to vector<16x32xf32>
    %289 = arith.subf %283, %288 : vector<16x32xf32>
    %290 = arith.mulf %289, %289 : vector<16x32xf32>
    %cst_146 = arith.constant dense<0.000000e+00> : vector<16xf32>
    %291 = vector.multi_reduction <add>, %290, %cst_146 [1] : vector<16x32xf32> to vector<16xf32>
    %292 = vector.shape_cast %291 : vector<16xf32> to vector<16x1xf32>
    %cst_147 = arith.constant 3.200000e+01 : f32
    %293 = vector.broadcast %cst_147 : f32 to vector<16x1xf32>
    %294 = arith.divf %292, %293 : vector<16x1xf32>
    %295 = vector.broadcast %287 : vector<16x1xf32> to vector<16x32xf32>
    %296 = arith.subf %283, %295 : vector<16x32xf32>
    %cst_148 = arith.constant 9.99999974E-6 : f32
    %297 = vector.broadcast %cst_148 : f32 to vector<16x1xf32>
    %298 = arith.addf %294, %297 : vector<16x1xf32>
    %299 = math.rsqrt %298 : vector<16x1xf32>
    %300 = vector.broadcast %299 : vector<16x1xf32> to vector<16x32xf32>
    %301 = arith.mulf %296, %300 : vector<16x32xf32>
    %302 = vector.broadcast %191 : vector<1x32xf32> to vector<16x32xf32>
    %303 = arith.mulf %301, %302 : vector<16x32xf32>
    %304 = vector.broadcast %192 : vector<1x32xf32> to vector<16x32xf32>
    %305 = arith.addf %303, %304 : vector<16x32xf32>
    %c1_149 = arith.constant 1 : index
    %c0_150 = arith.constant 0 : index
    %c128_151 = arith.constant 128 : index
    %306 = vector.load %arg3[%c1_149, %c0_150, %c128_151] : memref<2x32x256xf32, #tpu.memory_space<vmem>>, vector<1x32x64xf32>
    %307 = vector.shape_cast %306 : vector<1x32x64xf32> to vector<32x64xf32>
    %cst_152 = arith.constant dense<0.000000e+00> : vector<16x64xf32>
    %308 = tpu.matmul %305, %307, %cst_152 {dimension_numbers = #tpu.dot_dimension_numbers<[1], [0], [0], [1], [0, 0, 1, 1], [], []>} : vector<16x32xf32>, vector<32x64xf32>, vector<16x64xf32> -> vector<16x64xf32>
    %309 = vector.broadcast %193 : vector<1x64xf32> to vector<16x64xf32>
    %310 = arith.addf %308, %309 : vector<16x64xf32>
    %311 = arith.mulf %310, %310 : vector<16x64xf32>
    %312 = arith.mulf %310, %311 : vector<16x64xf32>
    %cst_153 = arith.constant 4.471500e-02 : f32
    %313 = vector.broadcast %cst_153 : f32 to vector<16x64xf32>
    %314 = arith.mulf %313, %312 : vector<16x64xf32>
    %315 = arith.addf %310, %314 : vector<16x64xf32>
    %cst_154 = arith.constant 0.797884583 : f32
    %316 = vector.broadcast %cst_154 : f32 to vector<16x64xf32>
    %317 = arith.mulf %316, %315 : vector<16x64xf32>
    %318 = math.tanh %317 : vector<16x64xf32>
    %cst_155 = arith.constant 1.000000e+00 : f32
    %319 = vector.broadcast %cst_155 : f32 to vector<16x64xf32>
    %320 = arith.addf %319, %318 : vector<16x64xf32>
    %cst_156 = arith.constant 5.000000e-01 : f32
    %321 = vector.broadcast %cst_156 : f32 to vector<16x64xf32>
    %322 = arith.mulf %321, %320 : vector<16x64xf32>
    %323 = arith.mulf %310, %322 : vector<16x64xf32>
    %c1_157 = arith.constant 1 : index
    %c0_158 = arith.constant 0 : index
    %c192_159 = arith.constant 192 : index
    %324 = vector.load %arg3[%c1_157, %c0_158, %c192_159] : memref<2x32x256xf32, #tpu.memory_space<vmem>>, vector<1x32x64xf32>
    %325 = vector.shape_cast %324 : vector<1x32x64xf32> to vector<32x64xf32>
    %cst_160 = arith.constant dense<0.000000e+00> : vector<16x32xf32>
    %326 = tpu.matmul %323, %325, %cst_160 {dimension_numbers = #tpu.dot_dimension_numbers<[1], [1], [0], [0], [0, 0, 1, 0], [], []>} : vector<16x64xf32>, vector<32x64xf32>, vector<16x32xf32> -> vector<16x32xf32>
    %327 = vector.broadcast %194 : vector<1x32xf32> to vector<16x32xf32>
    %328 = arith.addf %326, %327 : vector<16x32xf32>
    %329 = arith.addf %328, %305 : vector<16x32xf32>
    %cst_161 = arith.constant dense<0.000000e+00> : vector<16xf32>
    %330 = vector.multi_reduction <add>, %329, %cst_161 [1] : vector<16x32xf32> to vector<16xf32>
    %331 = vector.shape_cast %330 : vector<16xf32> to vector<16x1xf32>
    %cst_162 = arith.constant 3.200000e+01 : f32
    %332 = vector.broadcast %cst_162 : f32 to vector<16x1xf32>
    %333 = arith.divf %331, %332 : vector<16x1xf32>
    %334 = vector.broadcast %333 : vector<16x1xf32> to vector<16x32xf32>
    %335 = arith.subf %329, %334 : vector<16x32xf32>
    %336 = arith.mulf %335, %335 : vector<16x32xf32>
    %cst_163 = arith.constant dense<0.000000e+00> : vector<16xf32>
    %337 = vector.multi_reduction <add>, %336, %cst_163 [1] : vector<16x32xf32> to vector<16xf32>
    %338 = vector.shape_cast %337 : vector<16xf32> to vector<16x1xf32>
    %cst_164 = arith.constant 3.200000e+01 : f32
    %339 = vector.broadcast %cst_164 : f32 to vector<16x1xf32>
    %340 = arith.divf %338, %339 : vector<16x1xf32>
    %341 = vector.broadcast %333 : vector<16x1xf32> to vector<16x32xf32>
    %342 = arith.subf %329, %341 : vector<16x32xf32>
    %cst_165 = arith.constant 9.99999974E-6 : f32
    %343 = vector.broadcast %cst_165 : f32 to vector<16x1xf32>
    %344 = arith.addf %340, %343 : vector<16x1xf32>
    %345 = math.rsqrt %344 : vector<16x1xf32>
    %346 = vector.broadcast %345 : vector<16x1xf32> to vector<16x32xf32>
    %347 = arith.mulf %342, %346 : vector<16x32xf32>
    %348 = vector.broadcast %195 : vector<1x32xf32> to vector<16x32xf32>
    %349 = arith.mulf %347, %348 : vector<16x32xf32>
    %350 = vector.broadcast %196 : vector<1x32xf32> to vector<16x32xf32>
    %351 = arith.addf %349, %350 : vector<16x32xf32>
    %c0_166 = arith.constant 0 : index
    %c0_167 = arith.constant 0 : index
    %352 = vector.load %arg2[%c0_166, %c0_167] : memref<2x16xf32, #tpu.memory_space<vmem>>, vector<2x16xf32>
    %cst_168 = arith.constant dense<0.000000e+00> : vector<2x32xf32>
    %353 = tpu.matmul %352, %351, %cst_168 {dimension_numbers = #tpu.dot_dimension_numbers<[1], [0], [0], [1], [0, 0, 1, 1], [], []>} : vector<2x16xf32>, vector<16x32xf32>, vector<2x32xf32> -> vector<2x32xf32>
    %c2 = arith.constant 2 : index
    %c0_169 = arith.constant 0 : index
    %354 = vector.load %arg4[%c2, %c0_169] : memref<19x128xf32, #tpu.memory_space<vmem>>, vector<1x32xf32>
    %c2_170 = arith.constant 2 : index
    %c32_171 = arith.constant 32 : index
    %355 = vector.load %arg4[%c2_170, %c32_171] : memref<19x128xf32, #tpu.memory_space<vmem>>, vector<1x1xf32>
    %356 = vector.broadcast %354 : vector<1x32xf32> to vector<2x32xf32>
    %357 = arith.mulf %353, %356 : vector<2x32xf32>
    %cst_172 = arith.constant dense<0.000000e+00> : vector<2xf32>
    %358 = vector.multi_reduction <add>, %357, %cst_172 [1] : vector<2x32xf32> to vector<2xf32>
    %359 = vector.shape_cast %358 : vector<2xf32> to vector<2x1xf32>
    %360 = vector.broadcast %355 : vector<1x1xf32> to vector<2x1xf32>
    %361 = arith.addf %359, %360 : vector<2x1xf32>
    %c0_173 = arith.constant 0 : index
    %c0_174 = arith.constant 0 : index
    %362 = vector.load %arg5[%c0_173, %c0_174] : memref<2x1xf32, #tpu.memory_space<vmem>>, vector<2x1xf32>
    tpu.vector_store %arg5[%c0_173, %c0_174], %361 {strides = array<i32>} : memref<2x1xf32, #tpu.memory_space<vmem>>, vector<2x1xf32>,
    return
  }
}

</mosaic_0001>

<llo_original>
// kernel: xlm_comet_forward.1
$region0: #{xlm_comet_forward.1}
  #allocation0 [shape = 'u32[]', space=smem, size = 0x4, offset = 0x4, fixed_abs, tag = 'smem constant byte address 0x4 - core index']
  #allocation1 [shape = 'u32[144,128]{1,0:T(1,128)}', space=vmem, size = 0x12000, scoped, tag = 'internal scratch']
  #allocation2 [shape = 'f32[16,96]{1,0:T(8,128)}', space=vmem, size = 0x2000, scoped, tag = 'scratch operand']
  %s0 = inlined_call_operand.vmem [shape: f32[16,32], index: 0, kind: input, shape index: {}]
  %s1 = inlined_call_operand.vmem [shape: f32[16,16], index: 1, kind: input, shape index: {}]
  %s2 = inlined_call_operand.vmem [shape: f32[2,16], index: 2, kind: input, shape index: {}]
  %s3 = inlined_call_operand.vmem [shape: f32[2,32,256], index: 3, kind: input, shape index: {}]
  %s4 = inlined_call_operand.vmem [shape: f32[19,128], index: 4, kind: input, shape index: {}]
  %s5 = inlined_call_operand.vmem [shape: f32[2,1], index: 5, kind: output, shape index: {}]
  %s6 = sld [smem:[#allocation0]]
  $region30: #{xlm_comet_forward.1} parent=0
    _
  %s8 = ssub.s32 1, %s6
  %s9 = scalar_select 0, %s8, %s6
  // Predicated region
  $region2: #{xlm_comet_forward.1} parent=0 // pred_check
    _
  $region3: #{xlm_comet_forward.1} parent=0 // pred_check_branch
    %11 = sbr.rel (0) target = $region5
  $region4: #{xlm_comet_forward.1} parent=0 // pred_region
    _
  $region5: #{xlm_comet_forward.1} parent=0 // pred_fallthru
    _
  // Predicated region
  $region6: #{xlm_comet_forward.1} parent=0 // pred_check
    _
  $region7: #{xlm_comet_forward.1} parent=0 // pred_check_branch
    %13 = sbr.rel (0) target = $region9
  $region8: #{xlm_comet_forward.1} parent=0 // pred_region
    _
  $region9: #{xlm_comet_forward.1} parent=0 // pred_fallthru
    _
  // Predicated region
  $region10: #{xlm_comet_forward.1} parent=0 // pred_check
    _
  $region11: #{xlm_comet_forward.1} parent=0 // pred_check_branch
    %15 = sbr.rel (0) target = $region13
  $region12: #{xlm_comet_forward.1} parent=0 // pred_region
    _
  $region13: #{xlm_comet_forward.1} parent=0 // pred_fallthru
    _
  // Predicated region
  $region14: #{xlm_comet_forward.1} parent=0 // pred_check
    _
  $region15: #{xlm_comet_forward.1} parent=0 // pred_check_branch
    %17 = sbr.rel (0) target = $region17
  $region16: #{xlm_comet_forward.1} parent=0 // pred_region
    _
  $region17: #{xlm_comet_forward.1} parent=0 // pred_fallthru
    _
  // Predicated region
  $region18: #{xlm_comet_forward.1} parent=0 // pred_check
    _
  $region19: #{xlm_comet_forward.1} parent=0 // pred_check_branch
    %19 = sbr.rel (0) target = $region21
  $region20: #{xlm_comet_forward.1} parent=0 // pred_region
    _
  $region21: #{xlm_comet_forward.1} parent=0 // pred_fallthru
    _
  %v20 = vld [vmem:[%s0] sm:$0xff]
  %v21 = vld [vmem:[%s0 + $0x8] sm:$0xff]
  %v22 = vld [vmem:[%s4] sm:$0x1]
  %v23 = vld [vmem:[%s4 + $0x1] sm:$0x1]
  %vm24 = vcmask 261120
  %v25 = vsel %vm24, %v20, 0.0
  %26 = vadd.xlane.f32.xlu0 %v25
  %v27 = vpop.xlane.xlu0 %26
  %v28 = vsel %vm24, %v21, 0.0
  %29 = vadd.xlane.f32.xlu0 %v28
  %v30 = vpop.xlane.xlu0 %29
  %v31 = vrcp.pop 32.0
  %v32 = vmul.f32 %v27, %v31
  %v33 = vmul.f32 %v30, %v31
  %v34 = vsub.f32 %v20, %v32
  %v35 = vsub.f32 %v21, %v33
  %v36 = vmul.f32 %v34, %v34
  %v37 = vmul.f32 %v35, %v35
  %v38 = vsel %vm24, %v36, 0.0
  %39 = vadd.xlane.f32.xlu0 %v38
  %v40 = vpop.xlane.xlu0 %39
  %v41 = vsel %vm24, %v37, 0.0
  %42 = vadd.xlane.f32.xlu0 %v41
  %v43 = vpop.xlane.xlu0 %42
  %v44 = vmul.f32 %v40, %v31
  %v45 = vmul.f32 %v43, %v31
  %v46 = vadd.f32 %v44, 1e-05
  %v47 = vadd.f32 %v45, 1e-05
  %v48 = vrsqrt.pop %v46
  %v49 = vrsqrt.pop %v47
  %v50 = vmul.f32 %v34, %v48
  %v51 = vmul.f32 %v35, %v49
  %v52 = vlaneseq
  %v53 = vshrl.u32 %v52, 7
  %v54 = vsub.s32 0, %v53
  %v55 = vrot.slane %v22, %v54
  %v56 = vmul.f32 %v50, %v55
  %v57 = vmul.f32 %v51, %v55
  %v58 = vlaneseq
  %v59 = vshrl.u32 %v58, 7
  %v60 = vsub.s32 0, %v59
  %v61 = vrot.slane %v23, %v60
  %v62 = vadd.f32 %v56, %v61
  %v63 = vadd.f32 %v57, %v61
  %v64 = vld [vmem:[%s1] sm:$0xff]
  %v65 = vld [vmem:[%s1 + $0x8] sm:$0xff]
  %v66 = vld [vmem:[%s4 + $0x3] sm:$0x1]
  %v67 = vld [vmem:[%s4 + $0x4] sm:$0x1]
  %v68 = vld [vmem:[%s4 + $0x5] sm:$0x1]
  %v69 = vld [vmem:[%s4 + $0x6] sm:$0x1]
  %v70 = vld [vmem:[%s4 + $0x7] sm:$0x1]
  %v71 = vld [vmem:[%s4 + $0x8] sm:$0x1]
  %v72 = vld [vmem:[%s4 + $0x9] sm:$0x1]
  %v73 = vld [vmem:[%s4 + $0xa] sm:$0x1]
  %v74 = vld [vmem:[%s3] sm:$0xff]
  %v75 = vld [vmem:[%s3 + $0x10] sm:$0xff]
  %v76 = vld [vmem:[%s3 + $0x20] sm:$0xff]
  %v77 = vld [vmem:[%s3 + $0x30] sm:$0xff]
  %v78 = vlaneseq
  %v79 = vshrl.u32 %v78, 7
  %v80 = vsub.s32 0, %v79
  %v81 = vrot.slane %v66, %v80
  %v83 = vsel %vm24, %v62, 0
  %v86 = vsel %vm24, %v63, 0
  %88 = vmatprep.subr.mxu0 0.0
  %89 = vmatpush1.msra.mxu0 %v74
  %90 = vmatprep.subr.mxu0 0.0
  %91 = vmatpush1.msra.mxu0 %v75
  %92 = vmatprep.subr.mxu0 0.0
  %93 = vmatpush1.msra.mxu0 %v76
  %94 = vmatprep.subr.mxu0 0.0
  %95 = vmatpush1.msra.mxu0 %v77
  %96 = vmatprep.subr.mxu0 0.0
  %97 = vmatpush1.msra.mxu0 0.0
  %98 = vmatprep.subr.mxu0 0.0
  %99 = vmatpush1.msra.mxu0 0.0
  %100 = vmatprep.subr.mxu0 0.0
  %101 = vmatpush1.msra.mxu0 0.0
  %102 = vmatprep.subr.mxu0 0.0
  %103 = vmatpush1.msra.mxu0 0.0
  %104 = vmatprep.subr.mxu0 0.0
  %105 = vmatpush1.msra.mxu0 0.0
  %106 = vmatprep.subr.mxu0 0.0
  %107 = vmatpush1.msra.mxu0 0.0
  %108 = vmatprep.subr.mxu0 0.0
  %109 = vmatpush1.msra.mxu0 0.0
  %110 = vmatprep.subr.mxu0 0.0
  %111 = vmatpush1.msra.mxu0 0.0
  %112 = vmatprep.subr.mxu0 0.0
  %113 = vmatpush1.msra.mxu0 0.0
  %114 = vmatprep.subr.mxu0 0.0
  %115 = vmatpush1.msra.mxu0 0.0
  %116 = vmatprep.subr.mxu0 0.0
  %117 = vmatpush1.msra.mxu0 0.0
  %118 = vmatprep.subr.mxu0 0.0
  %119 = vmatpush1.msra.mxu0 0.0
  %120 = vmatprep.subr.mxu0 0.0
  %121 = vmatpush1.msra.mxu0 0.0
  %122 = vmatprep.subr.mxu0 0.0
  %123 = vmatpush1.msra.mxu0 0.0
  %124 = vmatprep.subr.mxu0 0.0
  %125 = vmatpush1.msra.mxu0 0.0
  %126 = vmatprep.subr.mxu0 0.0
  %127 = vmatpush1.msra.mxu0 0.0
  %128 = vmatprep.subr.mxu0 0.0
  %129 = vmatpush1.msra.mxu0 0.0
  %130 = vmatprep.subr.mxu0 0.0
  %131 = vmatpush1.msra.mxu0 0.0
  %132 = vmatprep.subr.mxu0 0.0
  %133 = vmatpush1.msra.mxu0 0.0
  %134 = vmatprep.subr.mxu0 0.0
  %135 = vmatpush1.msra.mxu0 0.0
  %136 = vmatprep.subr.mxu0 0.0
  %137 = vmatpush1.msra.mxu0 0.0
  %138 = vmatprep.subr.mxu0 0.0
  %139 = vmatpush1.msra.mxu0 0.0
  %140 = vmatprep.subr.mxu0 0.0
  %141 = vmatpush1.msra.mxu0 0.0
  %142 = vmatprep.subr.mxu0 0.0
  %143 = vmatpush1.msra.mxu0 0.0
  %144 = vmatprep.subr.mxu0 0.0
  %145 = vmatpush1.msra.mxu0 0.0
  %146 = vmatprep.subr.mxu0 0.0
  %147 = vmatpush1.msra.mxu0 0.0
  %148 = vmatprep.subr.mxu0 0.0
  %149 = vmatpush1.msra.mxu0 0.0
  %150 = vmatprep.subr.mxu0 0.0
  %151 = vmatpush1.msra.mxu0 0.0
  %152 = vmatprep.mubr.f32.mxu0 0.0
  %153 = vmatmul.mubr.f32.gmra.mrb[0].mxu0 %v83
  %v154 = vpop.f32.mrb[0].mxu0
  %v155 = vadd.f32 %v81, %v154
  %v156 = vpop.f32.mrb[0].mxu0
  %157 = vmatprep.mubr.f32.mxu0 0.0
  %158 = vmatmul.mubr.f32.gmra.mrb[0].mxu0 %v86
  %v159 = vpop.f32.mrb[0].mxu0
  %v160 = vadd.f32 %v81, %v159
  %v161 = vpop.f32.mrb[0].mxu0
  %162 = vdwg.mxu0
  %vm163 = vcmask 785408
  %164 = vst.msk [vmem:[#allocation2] sm:$0xff] %vm163, %v155
  %165 = vst.msk [vmem:[#allocation2 + $0x8] sm:$0xff] %vm163, %v160
  %v166 = vld [vmem:[#allocation2] sm:$0xff]
  %v167 = vld [vmem:[#allocation2 + $0x8] sm:$0xff]
  %170 = vrot.lane.b32.xlu0 %v166, 96
  %v171 = vpop.permute.xlu0 %170
  %172 = vrot.lane.b32.xlu0 %v167, 96
  %v173 = vpop.permute.xlu0 %172
  %vm174 = vcmask 64512
  %v175 = vsel %vm174, %v166, 0
  %v177 = vsel %vm174, %v167, 0
  %v179 = vsel %vm174, %v171, 0
  %v181 = vsel %vm174, %v173, 0
  %183 = vmatprep.subr.mxu0 0.0
  %184 = vmatpush1.xpose.msra.mxu0 %v179
  %185 = vmatprep.subr.mxu0 0.0
  %186 = vmatpush1.xpose.msra.mxu0 %v181
  %187 = vmatprep.subr.mxu0 0.0
  %188 = vmatpush1.xpose.msra.mxu0 0.0
  %189 = vmatprep.subr.mxu0 0.0
  %190 = vmatpush1.xpose.msra.mxu0 0.0
  %191 = vmatprep.subr.mxu0 0.0
  %192 = vmatpush1.xpose.msra.mxu0 0.0
  %193 = vmatprep.subr.mxu0 0.0
  %194 = vmatpush1.xpose.msra.mxu0 0.0
  %195 = vmatprep.subr.mxu0 0.0
  %196 = vmatpush1.xpose.msra.mxu0 0.0
  %197 = vmatprep.subr.mxu0 0.0
  %198 = vmatpush1.xpose.msra.mxu0 0.0
  %199 = vmatprep.subr.mxu0 0.0
  %200 = vmatpush1.xpose.msra.mxu0 0.0
  %201 = vmatprep.subr.mxu0 0.0
  %202 = vmatpush1.xpose.msra.mxu0 0.0
  %203 = vmatprep.subr.mxu0 0.0
  %204 = vmatpush1.xpose.msra.mxu0 0.0
  %205 = vmatprep.subr.mxu0 0.0
  %206 = vmatpush1.xpose.msra.mxu0 0.0
  %207 = vmatprep.subr.mxu0 0.0
  %208 = vmatpush1.xpose.msra.mxu0 0.0
  %209 = vmatprep.subr.mxu0 0.0
  %210 = vmatpush1.xpose.msra.mxu0 0.0
  %211 = vmatprep.subr.mxu0 0.0
  %212 = vmatpush1.xpose.msra.mxu0 0.0
  %213 = vmatprep.subr.mxu0 0.0
  %214 = vmatpush1.xpose.msra.mxu0 0.0
  %215 = vmatprep.subr.mxu0 0.0
  %216 = vmatpush1.xpose.msra.mxu0 0.0
  %217 = vmatprep.subr.mxu0 0.0
  %218 = vmatpush1.xpose.msra.mxu0 0.0
  %219 = vmatprep.subr.mxu0 0.0
  %220 = vmatpush1.xpose.msra.mxu0 0.0
  %221 = vmatprep.subr.mxu0 0.0
  %222 = vmatpush1.xpose.msra.mxu0 0.0
  %223 = vmatprep.subr.mxu0 0.0
  %224 = vmatpush1.xpose.msra.mxu0 0.0
  %225 = vmatprep.subr.mxu0 0.0
  %226 = vmatpush1.xpose.msra.mxu0 0.0
  %227 = vmatprep.subr.mxu0 0.0
  %228 = vmatpush1.xpose.msra.mxu0 0.0
  %229 = vmatprep.subr.mxu0 0.0
  %230 = vmatpush1.xpose.msra.mxu0 0.0
  %231 = vmatprep.subr.mxu0 0.0
  %232 = vmatpush1.xpose.msra.mxu0 0.0
  %233 = vmatprep.subr.mxu0 0.0
  %234 = vmatpush1.xpose.msra.mxu0 0.0
  %235 = vmatprep.subr.mxu0 0.0
  %236 = vmatpush1.xpose.msra.mxu0 0.0
  %237 = vmatprep.subr.mxu0 0.0
  %238 = vmatpush1.xpose.msra.mxu0 0.0
  %239 = vmatprep.subr.mxu0 0.0
  %240 = vmatpush1.xpose.msra.mxu0 0.0
  %241 = vmatprep.subr.mxu0 0.0
  %242 = vmatpush1.xpose.msra.mxu0 0.0
  %243 = vmatprep.subr.mxu0 0.0
  %244 = vmatpush1.xpose.msra.mxu0 0.0
  %245 = vmatprep.subr.mxu0 0.0
  %246 = vmatpush1.xpose.msra.mxu0 0.0
  %247 = vmatprep.mubr.f32.mxu0 0.0
  %248 = vmatmul.mubr.f32.gmra.mrb[0].mxu0 %v175
  %v249 = vpop.f32.mrb[0].mxu0
  %v250 = vadd.f32 0.0, %v249
  %v251 = vpop.f32.mrb[0].mxu0
  %252 = vmatprep.mubr.f32.mxu0 0.0
  %253 = vmatmul.mubr.f32.gmra.mrb[0].mxu0 %v177
  %v254 = vpop.f32.mrb[0].mxu0
  %v255 = vadd.f32 0.0, %v254
  %v256 = vpop.f32.mrb[0].mxu0
  %257 = vdwg.mxu0
  %v258 = vmul.f32 %v250, 0.35355338
  %v259 = vmul.f32 %v255, 0.35355338
  %v260 = vadd.f32 %v258, %v64
  %v261 = vadd.f32 %v259, %v65
  %vm262 = vcmask 130048
  %v263 = vsel %vm262, %v260, -inf
  %264 = vmax.xlane.f32.xlu0 %v263
  %v265 = vpop.xlane.xlu0 %264
  %v266 = vsel %vm262, %v261, -inf
  %267 = vmax.xlane.f32.xlu0 %v266
  %v268 = vpop.xlane.xlu0 %267
  %v269 = vsub.f32 %v260, %v265
  %v270 = vsub.f32 %v261, %v268
  %271 = vrot.lane.b32.xlu0 %v166, 120
  %v272 = vpop.permute.xlu0 %271
  %273 = vrot.lane.b32.xlu0 %v167, 120
  %v274 = vpop.permute.xlu0 %273
  %275 = vrot.lane.b32.xlu0 %v166, 88
  %v276 = vpop.permute.xlu0 %275
  %277 = vrot.lane.b32.xlu0 %v167, 88
  %v278 = vpop.permute.xlu0 %277
  %v279 = vsel %vm174, %v272, 0
  %v281 = vsel %vm174, %v274, 0
  %v283 = vsel %vm174, %v276, 0
  %v285 = vsel %vm174, %v278, 0
  %287 = vmatprep.subr.mxu0 0.0
  %288 = vmatpush1.xpose.msra.mxu0 %v283
  %289 = vmatprep.subr.mxu0 0.0
  %290 = vmatpush1.xpose.msra.mxu0 %v285
  %291 = vmatprep.subr.mxu0 0.0
  %292 = vmatpush1.xpose.msra.mxu0 0.0
  %293 = vmatprep.subr.mxu0 0.0
  %294 = vmatpush1.xpose.msra.mxu0 0.0
  %295 = vmatprep.subr.mxu0 0.0
  %296 = vmatpush1.xpose.msra.mxu0 0.0
  %297 = vmatprep.subr.mxu0 0.0
  %298 = vmatpush1.xpose.msra.mxu0 0.0
  %299 = vmatprep.subr.mxu0 0.0
  %300 = vmatpush1.xpose.msra.mxu0 0.0
  %301 = vmatprep.subr.mxu0 0.0
  %302 = vmatpush1.xpose.msra.mxu0 0.0
  %303 = vmatprep.subr.mxu0 0.0
  %304 = vmatpush1.xpose.msra.mxu0 0.0
  %305 = vmatprep.subr.mxu0 0.0
  %306 = vmatpush1.xpose.msra.mxu0 0.0
  %307 = vmatprep.subr.mxu0 0.0
  %308 = vmatpush1.xpose.msra.mxu0 0.0
  %309 = vmatprep.subr.mxu0 0.0
  %310 = vmatpush1.xpose.msra.mxu0 0.0
  %311 = vmatprep.subr.mxu0 0.0
  %312 = vmatpush1.xpose.msra.mxu0 0.0
  %313 = vmatprep.subr.mxu0 0.0
  %314 = vmatpush1.xpose.msra.mxu0 0.0
  %315 = vmatprep.subr.mxu0 0.0
  %316 = vmatpush1.xpose.msra.mxu0 0.0
  %317 = vmatprep.subr.mxu0 0.0
  %318 = vmatpush1.xpose.msra.mxu0 0.0
  %319 = vmatprep.subr.mxu0 0.0
  %320 = vmatpush1.xpose.msra.mxu0 0.0
  %321 = vmatprep.subr.mxu0 0.0
  %322 = vmatpush1.xpose.msra.mxu0 0.0
  %323 = vmatprep.subr.mxu0 0.0
  %324 = vmatpush1.xpose.msra.mxu0 0.0
  %325 = vmatprep.subr.mxu0 0.0
  %326 = vmatpush1.xpose.msra.mxu0 0.0
  %327 = vmatprep.subr.mxu0 0.0
  %328 = vmatpush1.xpose.msra.mxu0 0.0
  %329 = vmatprep.subr.mxu0 0.0
  %330 = vmatpush1.xpose.msra.mxu0 0.0
  %331 = vmatprep.subr.mxu0 0.0
  %332 = vmatpush1.xpose.msra.mxu0 0.0
  %333 = vmatprep.subr.mxu0 0.0
  %334 = vmatpush1.xpose.msra.mxu0 0.0
  %335 = vmatprep.subr.mxu0 0.0
  %336 = vmatpush1.xpose.msra.mxu0 0.0
  %337 = vmatprep.subr.mxu0 0.0
  %338 = vmatpush1.xpose.msra.mxu0 0.0
  %339 = vmatprep.subr.mxu0 0.0
  %340 = vmatpush1.xpose.msra.mxu0 0.0
  %341 = vmatprep.subr.mxu0 0.0
  %342 = vmatpush1.xpose.msra.mxu0 0.0
  %343 = vmatprep.subr.mxu0 0.0
  %344 = vmatpush1.xpose.msra.mxu0 0.0
  %345 = vmatprep.subr.mxu0 0.0
  %346 = vmatpush1.xpose.msra.mxu0 0.0
  %347 = vmatprep.subr.mxu0 0.0
  %348 = vmatpush1.xpose.msra.mxu0 0.0
  %349 = vmatprep.subr.mxu0 0.0
  %350 = vmatpush1.xpose.msra.mxu0 0.0
  %351 = vmatprep.mubr.f32.mxu0 0.0
  %352 = vmatmul.mubr.f32.gmra.mrb[0].mxu0 %v279
  %v353 = vpop.f32.mrb[0].mxu0
  %v354 = vadd.f32 0.0, %v353
  %v355 = vpop.f32.mrb[0].mxu0
  %356 = vmatprep.mubr.f32.mxu0 0.0
  %357 = vmatmul.mubr.f32.gmra.mrb[0].mxu0 %v281
  %v358 = vpop.f32.mrb[0].mxu0
  %v359 = vadd.f32 0.0, %v358
  %v360 = vpop.f32.mrb[0].mxu0
  %361 = vdwg.mxu0
  %v362 = vmul.f32 %v354, 0.35355338
  %v363 = vmul.f32 %v359, 0.35355338
  %v364 = vadd.f32 %v362, %v64
  %v365 = vadd.f32 %v363, %v65
  %v366 = vsel %vm262, %v364, -inf
  %367 = vmax.xlane.f32.xlu0 %v366
  %v368 = vpop.xlane.xlu0 %367
  %v369 = vsel %vm262, %v365, -inf
  %370 = vmax.xlane.f32.xlu0 %v369
  %v371 = vpop.xlane.xlu0 %370
  %v372 = vsub.f32 %v364, %v368
  %v373 = vsub.f32 %v365, %v371
  %374 = vrot.lane.b32.xlu0 %v166, 112
  %v375 = vpop.permute.xlu0 %374
  %376 = vrot.lane.b32.xlu0 %v167, 112
  %v377 = vpop.permute.xlu0 %376
  %378 = vrot.lane.b32.xlu0 %v166, 80
  %v379 = vpop.permute.xlu0 %378
  %380 = vrot.lane.b32.xlu0 %v167, 80
  %v381 = vpop.permute.xlu0 %380
  %v382 = vsel %vm174, %v375, 0
  %v384 = vsel %vm174, %v377, 0
  %v386 = vsel %vm174, %v379, 0
  %v388 = vsel %vm174, %v381, 0
  %390 = vmatprep.subr.mxu0 0.0
  %391 = vmatpush1.xpose.msra.mxu0 %v386
  %392 = vmatprep.subr.mxu0 0.0
  %393 = vmatpush1.xpose.msra.mxu0 %v388
  %394 = vmatprep.subr.mxu0 0.0
  %395 = vmatpush1.xpose.msra.mxu0 0.0
  %396 = vmatprep.subr.mxu0 0.0
  %397 = vmatpush1.xpose.msra.mxu0 0.0
  %398 = vmatprep.subr.mxu0 0.0
  %399 = vmatpush1.xpose.msra.mxu0 0.0
  %400 = vmatprep.subr.mxu0 0.0
  %401 = vmatpush1.xpose.msra.mxu0 0.0
  %402 = vmatprep.subr.mxu0 0.0
  %403 = vmatpush1.xpose.msra.mxu0 0.0
  %404 = vmatprep.subr.mxu0 0.0
  %405 = vmatpush1.xpose.msra.mxu0 0.0
  %406 = vmatprep.subr.mxu0 0.0
  %407 = vmatpush1.xpose.msra.mxu0 0.0
  %408 = vmatprep.subr.mxu0 0.0
  %409 = vmatpush1.xpose.msra.mxu0 0.0
  %410 = vmatprep.subr.mxu0 0.0
  %411 = vmatpush1.xpose.msra.mxu0 0.0
  %412 = vmatprep.subr.mxu0 0.0
  %413 = vmatpush1.xpose.msra.mxu0 0.0
  %414 = vmatprep.subr.mxu0 0.0
  %415 = vmatpush1.xpose.msra.mxu0 0.0
  %416 = vmatprep.subr.mxu0 0.0
  %417 = vmatpush1.xpose.msra.mxu0 0.0
  %418 = vmatprep.subr.mxu0 0.0
  %419 = vmatpush1.xpose.msra.mxu0 0.0
  %420 = vmatprep.subr.mxu0 0.0
  %421 = vmatpush1.xpose.msra.mxu0 0.0
  %422 = vmatprep.subr.mxu0 0.0
  %423 = vmatpush1.xpose.msra.mxu0 0.0
  %424 = vmatprep.subr.mxu0 0.0
  %425 = vmatpush1.xpose.msra.mxu0 0.0
  %426 = vmatprep.subr.mxu0 0.0
  %427 = vmatpush1.xpose.msra.mxu0 0.0
  %428 = vmatprep.subr.mxu0 0.0
  %429 = vmatpush1.xpose.msra.mxu0 0.0
  %430 = vmatprep.subr.mxu0 0.0
  %431 = vmatpush1.xpose.msra.mxu0 0.0
  %432 = vmatprep.subr.mxu0 0.0
  %433 = vmatpush1.xpose.msra.mxu0 0.0
  %434 = vmatprep.subr.mxu0 0.0
  %435 = vmatpush1.xpose.msra.mxu0 0.0
  %436 = vmatprep.subr.mxu0 0.0
  %437 = vmatpush1.xpose.msra.mxu0 0.0
  %438 = vmatprep.subr.mxu0 0.0
  %439 = vmatpush1.xpose.msra.mxu0 0.0
  %440 = vmatprep.subr.mxu0 0.0
  %441 = vmatpush1.xpose.msra.mxu0 0.0
  %442 = vmatprep.subr.mxu0 0.0
  %443 = vmatpush1.xpose.msra.mxu0 0.0
  %444 = vmatprep.subr.mxu0 0.0
  %445 = vmatpush1.xpose.msra.mxu0 0.0
  %446 = vmatprep.subr.mxu0 0.0
  %447 = vmatpush1.xpose.msra.mxu0 0.0
  %448 = vmatprep.subr.mxu0 0.0
  %449 = vmatpush1.xpose.msra.mxu0 0.0
  %450 = vmatprep.subr.mxu0 0.0
  %451 = vmatpush1.xpose.msra.mxu0 0.0
  %452 = vmatprep.subr.mxu0 0.0
  %453 = vmatpush1.xpose.msra.mxu0 0.0
  %454 = vmatprep.mubr.f32.mxu0 0.0
  %455 = vmatmul.mubr.f32.gmra.mrb[0].mxu0 %v382
  %v456 = vpop.f32.mrb[0].mxu0
  %v457 = vadd.f32 0.0, %v456
  %v458 = vpop.f32.mrb[0].mxu0
  %459 = vmatprep.mubr.f32.mxu0 0.0
  %460 = vmatmul.mubr.f32.gmra.mrb[0].mxu0 %v384
  %v461 = vpop.f32.mrb[0].mxu0
  %v462 = vadd.f32 0.0, %v461
  %v463 = vpop.f32.mrb[0].mxu0
  %464 = vdwg.mxu0
  %v465 = vmul.f32 %v457, 0.35355338
  %v466 = vmul.f32 %v462, 0.35355338
  %v467 = vadd.f32 %v465, %v64
  %v468 = vadd.f32 %v466, %v65
  %v469 = vsel %vm262, %v467, -inf
  %470 = vmax.xlane.f32.xlu0 %v469
  %v471 = vpop.xlane.xlu0 %470
  %v472 = vsel %vm262, %v468, -inf
  %473 = vmax.xlane.f32.xlu0 %v472
  %v474 = vpop.xlane.xlu0 %473
  %v475 = vsub.f32 %v467, %v471
  %v476 = vsub.f32 %v468, %v474
  %477 = vrot.lane.b32.xlu0 %v166, 104
  %v478 = vpop.permute.xlu0 %477
  %479 = vrot.lane.b32.xlu0 %v167, 104
  %v480 = vpop.permute.xlu0 %479
  %481 = vrot.lane.b32.xlu0 %v166, 72
  %v482 = vpop.permute.xlu0 %481
  %483 = vrot.lane.b32.xlu0 %v167, 72
  %v484 = vpop.permute.xlu0 %483
  %v485 = vsel %vm174, %v478, 0
  %v487 = vsel %vm174, %v480, 0
  %v489 = vsel %vm174, %v482, 0
  %v491 = vsel %vm174, %v484, 0
  %493 = vmatprep.subr.mxu0 0.0
  %494 = vmatpush1.xpose.msra.mxu0 %v489
  %495 = vmatprep.subr.mxu0 0.0
  %496 = vmatpush1.xpose.msra.mxu0 %v491
  %497 = vmatprep.subr.mxu0 0.0
  %498 = vmatpush1.xpose.msra.mxu0 0.0
  %499 = vmatprep.subr.mxu0 0.0
  %500 = vmatpush1.xpose.msra.mxu0 0.0
  %501 = vmatprep.subr.mxu0 0.0
  %502 = vmatpush1.xpose.msra.mxu0 0.0
  %503 = vmatprep.subr.mxu0 0.0
  %504 = vmatpush1.xpose.msra.mxu0 0.0
  %505 = vmatprep.subr.mxu0 0.0
  %506 = vmatpush1.xpose.msra.mxu0 0.0
  %507 = vmatprep.subr.mxu0 0.0
  %508 = vmatpush1.xpose.msra.mxu0 0.0
  %509 = vmatprep.subr.mxu0 0.0
  %510 = vmatpush1.xpose.msra.mxu0 0.0
  %511 = vmatprep.subr.mxu0 0.0
  %512 = vmatpush1.xpose.msra.mxu0 0.0
  %513 = vmatprep.subr.mxu0 0.0
  %514 = vmatpush1.xpose.msra.mxu0 0.0
  %515 = vmatprep.subr.mxu0 0.0
  %516 = vmatpush1.xpose.msra.mxu0 0.0
  %517 = vmatprep.subr.mxu0 0.0
  %518 = vmatpush1.xpose.msra.mxu0 0.0
  %519 = vmatprep.subr.mxu0 0.0
  %520 = vmatpush1.xpose.msra.mxu0 0.0
  %521 = vmatprep.subr.mxu0 0.0
  %522 = vmatpush1.xpose.msra.mxu0 0.0
  %523 = vmatprep.subr.mxu0 0.0
  %524 = vmatpush1.xpose.msra.mxu0 0.0
  %525 = vmatprep.subr.mxu0 0.0
  %526 = vmatpush1.xpose.msra.mxu0 0.0
  %527 = vmatprep.subr.mxu0 0.0
  %528 = vmatpush1.xpose.msra.mxu0 0.0
  %529 = vmatprep.subr.mxu0 0.0
  %530 = vmatpush1.xpose.msra.mxu0 0.0
  %531 = vmatprep.subr.mxu0 0.0
  %532 = vmatpush1.xpose.msra.mxu0 0.0
  %533 = vmatprep.subr.mxu0 0.0
  %534 = vmatpush1.xpose.msra.mxu0 0.0
  %535 = vmatprep.subr.mxu0 0.0
  %536 = vmatpush1.xpose.msra.mxu0 0.0
  %537 = vmatprep.subr.mxu0 0.0
  %538 = vmatpush1.xpose.msra.mxu0 0.0
  %539 = vmatprep.subr.mxu0 0.0
  %540 = vmatpush1.xpose.msra.mxu0 0.0
  %541 = vmatprep.subr.mxu0 0.0
  %542 = vmatpush1.xpose.msra.mxu0 0.0
  %543 = vmatprep.subr.mxu0 0.0
  %544 = vmatpush1.xpose.msra.mxu0 0.0
  %545 = vmatprep.subr.mxu0 0.0
  %546 = vmatpush1.xpose.msra.mxu0 0.0
  %547 = vmatprep.subr.mxu0 0.0
  %548 = vmatpush1.xpose.msra.mxu0 0.0
  %549 = vmatprep.subr.mxu0 0.0
  %550 = vmatpush1.xpose.msra.mxu0 0.0
  %551 = vmatprep.subr.mxu0 0.0
  %552 = vmatpush1.xpose.msra.mxu0 0.0
  %553 = vmatprep.subr.mxu0 0.0
  %554 = vmatpush1.xpose.msra.mxu0 0.0
  %555 = vmatprep.subr.mxu0 0.0
  %556 = vmatpush1.xpose.msra.mxu0 0.0
  %557 = vmatprep.mubr.f32.mxu0 0.0
  %558 = vmatmul.mubr.f32.gmra.mrb[0].mxu0 %v485
  %v559 = vpop.f32.mrb[0].mxu0
  %v560 = vadd.f32 0.0, %v559
  %v561 = vpop.f32.mrb[0].mxu0
  %562 = vmatprep.mubr.f32.mxu0 0.0
  %563 = vmatmul.mubr.f32.gmra.mrb[0].mxu0 %v487
  %v564 = vpop.f32.mrb[0].mxu0
  %v565 = vadd.f32 0.0, %v564
  %v566 = vpop.f32.mrb[0].mxu0
  %567 = vdwg.mxu0
  %v568 = vmul.f32 %v560, 0.35355338
  %v569 = vmul.f32 %v565, 0.35355338
  %v570 = vadd.f32 %v568, %v64
  %v571 = vadd.f32 %v569, %v65
  %v572 = vsel %vm262, %v570, -inf
  %573 = vmax.xlane.f32.xlu0 %v572
  %v574 = vpop.xlane.xlu0 %573
  %v575 = vsel %vm262, %v571, -inf
  %576 = vmax.xlane.f32.xlu0 %v575
  %v577 = vpop.xlane.xlu0 %576
  %v578 = vsub.f32 %v570, %v574
  %v579 = vsub.f32 %v571, %v577
  %582 = vrot.lane.b32.xlu0 %v372, 16
  %v583 = vpop.permute.xlu0 %582
  %584 = vrot.lane.b32.xlu0 %v373, 16
  %v585 = vpop.permute.xlu0 %584
  %590 = vrot.lane.b32.xlu0 %v475, 32
  %v591 = vpop.permute.xlu0 %590
  %592 = vrot.lane.b32.xlu0 %v476, 32
  %v593 = vpop.permute.xlu0 %592
  %598 = vrot.lane.b32.xlu0 %v578, 48
  %v599 = vpop.permute.xlu0 %598
  %600 = vrot.lane.b32.xlu0 %v579, 48
  %v601 = vpop.permute.xlu0 %600
  %v604 = vsel %vm262, %v269, %v583
  %v605 = vsel %vm262, %v270, %v585
  %v606 = vsel %vm24, %v604, %v591
  %v607 = vsel %vm24, %v605, %v593
  %vm608 = vcmask 392192
  %v609 = vsel %vm608, %v606, %v599
  %v610 = vsel %vm608, %v607, %v601
  %v611 = vmul.f32 %v609, 1.442695
  %v612 = vpow.pop %v611
  %v613 = vmul.f32 %v610, 1.442695
  %v614 = vpow.pop %v613
  %v615 = vsel %vm262, %v612, 0.0
  %616 = vadd.xlane.f32.xlu0 %v615
  %v617 = vpop.xlane.xlu0 %616
  %v618 = vsel %vm262, %v614, 0.0
  %619 = vadd.xlane.f32.xlu0 %v618
  %v620 = vpop.xlane.xlu0 %619
  %v621 = vrcp.pop %v617
  %v622 = vrcp.pop %v620
  %623 = vrot.lane.b32.xlu0 %v166, 64
  %v624 = vpop.permute.xlu0 %623
  %625 = vrot.lane.b32.xlu0 %v167, 64
  %v626 = vpop.permute.xlu0 %625
  %v630 = vsel %vm262, %v612, 0
  %v633 = vsel %vm262, %v614, 0
  %635 = vmatprep.subr.mxu0 0.0
  %636 = vmatpush1.msra.mxu0 %v624
  %637 = vmatprep.subr.mxu0 0.0
  %638 = vmatpush1.msra.mxu0 %v626
  %639 = vmatprep.subr.mxu0 0.0
  %640 = vmatpush1.msra.mxu0 0.0
  %641 = vmatprep.subr.mxu0 0.0
  %642 = vmatpush1.msra.mxu0 0.0
  %643 = vmatprep.subr.mxu0 0.0
  %644 = vmatpush1.msra.mxu0 0.0
  %645 = vmatprep.subr.mxu0 0.0
  %646 = vmatpush1.msra.mxu0 0.0
  %647 = vmatprep.subr.mxu0 0.0
  %648 = vmatpush1.msra.mxu0 0.0
  %649 = vmatprep.subr.mxu0 0.0
  %650 = vmatpush1.msra.mxu0 0.0
  %651 = vmatprep.subr.mxu0 0.0
  %652 = vmatpush1.msra.mxu0 0.0
  %653 = vmatprep.subr.mxu0 0.0
  %654 = vmatpush1.msra.mxu0 0.0
  %655 = vmatprep.subr.mxu0 0.0
  %656 = vmatpush1.msra.mxu0 0.0
  %657 = vmatprep.subr.mxu0 0.0
  %658 = vmatpush1.msra.mxu0 0.0
  %659 = vmatprep.subr.mxu0 0.0
  %660 = vmatpush1.msra.mxu0 0.0
  %661 = vmatprep.subr.mxu0 0.0
  %662 = vmatpush1.msra.mxu0 0.0
  %663 = vmatprep.subr.mxu0 0.0
  %664 = vmatpush1.msra.mxu0 0.0
  %665 = vmatprep.subr.mxu0 0.0
  %666 = vmatpush1.msra.mxu0 0.0
  %667 = vmatprep.subr.mxu0 0.0
  %668 = vmatpush1.msra.mxu0 0.0
  %669 = vmatprep.subr.mxu0 0.0
  %670 = vmatpush1.msra.mxu0 0.0
  %671 = vmatprep.subr.mxu0 0.0
  %672 = vmatpush1.msra.mxu0 0.0
  %673 = vmatprep.subr.mxu0 0.0
  %674 = vmatpush1.msra.mxu0 0.0
  %675 = vmatprep.subr.mxu0 0.0
  %676 = vmatpush1.msra.mxu0 0.0
  %677 = vmatprep.subr.mxu0 0.0
  %678 = vmatpush1.msra.mxu0 0.0
  %679 = vmatprep.subr.mxu0 0.0
  %680 = vmatpush1.msra.mxu0 0.0
  %681 = vmatprep.subr.mxu0 0.0
  %682 = vmatpush1.msra.mxu0 0.0
  %683 = vmatprep.subr.mxu0 0.0
  %684 = vmatpush1.msra.mxu0 0.0
  %685 = vmatprep.subr.mxu0 0.0
  %686 = vmatpush1.msra.mxu0 0.0
  %687 = vmatprep.subr.mxu0 0.0
  %688 = vmatpush1.msra.mxu0 0.0
  %689 = vmatprep.subr.mxu0 0.0
  %690 = vmatpush1.msra.mxu0 0.0
  %691 = vmatprep.subr.mxu0 0.0
  %692 = vmatpush1.msra.mxu0 0.0
  %693 = vmatprep.subr.mxu0 0.0
  %694 = vmatpush1.msra.mxu0 0.0
  %695 = vmatprep.subr.mxu0 0.0
  %696 = vmatpush1.msra.mxu0 0.0
  %697 = vmatprep.subr.mxu0 0.0
  %698 = vmatpush1.msra.mxu0 0.0
  %699 = vmatprep.mubr.f32.mxu0 0.0
  %700 = vmatmul.mubr.f32.gmra.mrb[0].mxu0 %v630
  %v701 = vpop.f32.mrb[0].mxu0
  %v702 = vadd.f32 0.0, %v701
  %v703 = vpop.f32.mrb[0].mxu0
  %704 = vmatprep.mubr.f32.mxu0 0.0
  %705 = vmatmul.mubr.f32.gmra.mrb[0].mxu0 %v633
  %v706 = vpop.f32.mrb[0].mxu0
  %v707 = vadd.f32 0.0, %v706
  %v708 = vpop.f32.mrb[0].mxu0
  %709 = vdwg.mxu0
  %v710 = vmul.f32 %v702, %v621
  %v711 = vmul.f32 %v707, %v622
  %712 = vrot.lane.b32.xlu0 %v612, 112
  %v713 = vpop.permute.xlu0 %712
  %714 = vrot.lane.b32.xlu0 %v614, 112
  %v715 = vpop.permute.xlu0 %714
  %v718 = vsel %vm262, %v713, 0.0
  %719 = vadd.xlane.f32.xlu0 %v718
  %v720 = vpop.xlane.xlu0 %719
  %v721 = vsel %vm262, %v715, 0.0
  %722 = vadd.xlane.f32.xlu0 %v721
  %v723 = vpop.xlane.xlu0 %722
  %v724 = vrcp.pop %v720
  %v725 = vrcp.pop %v723
  %726 = vrot.lane.b32.xlu0 %v166, 56
  %v727 = vpop.permute.xlu0 %726
  %728 = vrot.lane.b32.xlu0 %v167, 56
  %v729 = vpop.permute.xlu0 %728
  %v732 = vsel %vm262, %v713, 0
  %v734 = vsel %vm262, %v715, 0
  %736 = vmatprep.subr.mxu0 0.0
  %737 = vmatpush1.msra.mxu0 %v727
  %738 = vmatprep.subr.mxu0 0.0
  %739 = vmatpush1.msra.mxu0 %v729
  %740 = vmatprep.subr.mxu0 0.0
  %741 = vmatpush1.msra.mxu0 0.0
  %742 = vmatprep.subr.mxu0 0.0
  %743 = vmatpush1.msra.mxu0 0.0
  %744 = vmatprep.subr.mxu0 0.0
  %745 = vmatpush1.msra.mxu0 0.0
  %746 = vmatprep.subr.mxu0 0.0
  %747 = vmatpush1.msra.mxu0 0.0
  %748 = vmatprep.subr.mxu0 0.0
  %749 = vmatpush1.msra.mxu0 0.0
  %750 = vmatprep.subr.mxu0 0.0
  %751 = vmatpush1.msra.mxu0 0.0
  %752 = vmatprep.subr.mxu0 0.0
  %753 = vmatpush1.msra.mxu0 0.0
  %754 = vmatprep.subr.mxu0 0.0
  %755 = vmatpush1.msra.mxu0 0.0
  %756 = vmatprep.subr.mxu0 0.0
  %757 = vmatpush1.msra.mxu0 0.0
  %758 = vmatprep.subr.mxu0 0.0
  %759 = vmatpush1.msra.mxu0 0.0
  %760 = vmatprep.subr.mxu0 0.0
  %761 = vmatpush1.msra.mxu0 0.0
  %762 = vmatprep.subr.mxu0 0.0
  %763 = vmatpush1.msra.mxu0 0.0
  %764 = vmatprep.subr.mxu0 0.0
  %765 = vmatpush1.msra.mxu0 0.0
  %766 = vmatprep.subr.mxu0 0.0
  %767 = vmatpush1.msra.mxu0 0.0
  %768 = vmatprep.subr.mxu0 0.0
  %769 = vmatpush1.msra.mxu0 0.0
  %770 = vmatprep.subr.mxu0 0.0
  %771 = vmatpush1.msra.mxu0 0.0
  %772 = vmatprep.subr.mxu0 0.0
  %773 = vmatpush1.msra.mxu0 0.0
  %774 = vmatprep.subr.mxu0 0.0
  %775 = vmatpush1.msra.mxu0 0.0
  %776 = vmatprep.subr.mxu0 0.0
  %777 = vmatpush1.msra.mxu0 0.0
  %778 = vmatprep.subr.mxu0 0.0
  %779 = vmatpush1.msra.mxu0 0.0
  %780 = vmatprep.subr.mxu0 0.0
  %781 = vmatpush1.msra.mxu0 0.0
  %782 = vmatprep.subr.mxu0 0.0
  %783 = vmatpush1.msra.mxu0 0.0
  %784 = vmatprep.subr.mxu0 0.0
  %785 = vmatpush1.msra.mxu0 0.0
  %786 = vmatprep.subr.mxu0 0.0
  %787 = vmatpush1.msra.mxu0 0.0
  %788 = vmatprep.subr.mxu0 0.0
  %789 = vmatpush1.msra.mxu0 0.0
  %790 = vmatprep.subr.mxu0 0.0
  %791 = vmatpush1.msra.mxu0 0.0
  %792 = vmatprep.subr.mxu0 0.0
  %793 = vmatpush1.msra.mxu0 0.0
  %794 = vmatprep.subr.mxu0 0.0
  %795 = vmatpush1.msra.mxu0 0.0
  %796 = vmatprep.subr.mxu0 0.0
  %797 = vmatpush1.msra.mxu0 0.0
  %798 = vmatprep.subr.mxu0 0.0
  %799 = vmatpush1.msra.mxu0 0.0
  %800 = vmatprep.mubr.f32.mxu0 0.0
  %801 = vmatmul.mubr.f32.gmra.mrb[0].mxu0 %v732
  %v802 = vpop.f32.mrb[0].mxu0
  %v803 = vadd.f32 0.0, %v802
  %v804 = vpop.f32.mrb[0].mxu0
  %805 = vmatprep.mubr.f32.mxu0 0.0
  %806 = vmatmul.mubr.f32.gmra.mrb[0].mxu0 %v734
  %v807 = vpop.f32.mrb[0].mxu0
  %v808 = vadd.f32 0.0, %v807
  %v809 = vpop.f32.mrb[0].mxu0
  %810 = vdwg.mxu0
  %v811 = vmul.f32 %v803, %v724
  %v812 = vmul.f32 %v808, %v725
  %813 = vrot.lane.b32.xlu0 %v612, 96
  %v814 = vpop.permute.xlu0 %813
  %815 = vrot.lane.b32.xlu0 %v614, 96
  %v816 = vpop.permute.xlu0 %815
  %v819 = vsel %vm262, %v814, 0.0
  %820 = vadd.xlane.f32.xlu0 %v819
  %v821 = vpop.xlane.xlu0 %820
  %v822 = vsel %vm262, %v816, 0.0
  %823 = vadd.xlane.f32.xlu0 %v822
  %v824 = vpop.xlane.xlu0 %823
  %v825 = vrcp.pop %v821
  %v826 = vrcp.pop %v824
  %827 = vrot.lane.b32.xlu0 %v166, 48
  %v828 = vpop.permute.xlu0 %827
  %829 = vrot.lane.b32.xlu0 %v167, 48
  %v830 = vpop.permute.xlu0 %829
  %v833 = vsel %vm262, %v814, 0
  %v835 = vsel %vm262, %v816, 0
  %837 = vmatprep.subr.mxu0 0.0
  %838 = vmatpush1.msra.mxu0 %v828
  %839 = vmatprep.subr.mxu0 0.0
  %840 = vmatpush1.msra.mxu0 %v830
  %841 = vmatprep.subr.mxu0 0.0
  %842 = vmatpush1.msra.mxu0 0.0
  %843 = vmatprep.subr.mxu0 0.0
  %844 = vmatpush1.msra.mxu0 0.0
  %845 = vmatprep.subr.mxu0 0.0
  %846 = vmatpush1.msra.mxu0 0.0
  %847 = vmatprep.subr.mxu0 0.0
  %848 = vmatpush1.msra.mxu0 0.0
  %849 = vmatprep.subr.mxu0 0.0
  %850 = vmatpush1.msra.mxu0 0.0
  %851 = vmatprep.subr.mxu0 0.0
  %852 = vmatpush1.msra.mxu0 0.0
  %853 = vmatprep.subr.mxu0 0.0
  %854 = vmatpush1.msra.mxu0 0.0
  %855 = vmatprep.subr.mxu0 0.0
  %856 = vmatpush1.msra.mxu0 0.0
  %857 = vmatprep.subr.mxu0 0.0
  %858 = vmatpush1.msra.mxu0 0.0
  %859 = vmatprep.subr.mxu0 0.0
  %860 = vmatpush1.msra.mxu0 0.0
  %861 = vmatprep.subr.mxu0 0.0
  %862 = vmatpush1.msra.mxu0 0.0
  %863 = vmatprep.subr.mxu0 0.0
  %864 = vmatpush1.msra.mxu0 0.0
  %865 = vmatprep.subr.mxu0 0.0
  %866 = vmatpush1.msra.mxu0 0.0
  %867 = vmatprep.subr.mxu0 0.0
  %868 = vmatpush1.msra.mxu0 0.0
  %869 = vmatprep.subr.mxu0 0.0
  %870 = vmatpush1.msra.mxu0 0.0
  %871 = vmatprep.subr.mxu0 0.0
  %872 = vmatpush1.msra.mxu0 0.0
  %873 = vmatprep.subr.mxu0 0.0
  %874 = vmatpush1.msra.mxu0 0.0
  %875 = vmatprep.subr.mxu0 0.0
  %876 = vmatpush1.msra.mxu0 0.0
  %877 = vmatprep.subr.mxu0 0.0
  %878 = vmatpush1.msra.mxu0 0.0
  %879 = vmatprep.subr.mxu0 0.0
  %880 = vmatpush1.msra.mxu0 0.0
  %881 = vmatprep.subr.mxu0 0.0
  %882 = vmatpush1.msra.mxu0 0.0
  %883 = vmatprep.subr.mxu0 0.0
  %884 = vmatpush1.msra.mxu0 0.0
  %885 = vmatprep.subr.mxu0 0.0
  %886 = vmatpush1.msra.mxu0 0.0
  %887 = vmatprep.subr.mxu0 0.0
  %888 = vmatpush1.msra.mxu0 0.0
  %889 = vmatprep.subr.mxu0 0.0
  %890 = vmatpush1.msra.mxu0 0.0
  %891 = vmatprep.subr.mxu0 0.0
  %892 = vmatpush1.msra.mxu0 0.0
  %893 = vmatprep.subr.mxu0 0.0
  %894 = vmatpush1.msra.mxu0 0.0
  %895 = vmatprep.subr.mxu0 0.0
  %896 = vmatpush1.msra.mxu0 0.0
  %897 = vmatprep.subr.mxu0 0.0
  %898 = vmatpush1.msra.mxu0 0.0
  %899 = vmatprep.subr.mxu0 0.0
  %900 = vmatpush1.msra.mxu0 0.0
  %901 = vmatprep.mubr.f32.mxu0 0.0
  %902 = vmatmul.mubr.f32.gmra.mrb[0].mxu0 %v833
  %v903 = vpop.f32.mrb[0].mxu0
  %v904 = vadd.f32 0.0, %v903
  %v905 = vpop.f32.mrb[0].mxu0
  %906 = vmatprep.mubr.f32.mxu0 0.0
  %907 = vmatmul.mubr.f32.gmra.mrb[0].mxu0 %v835
  %v908 = vpop.f32.mrb[0].mxu0
  %v909 = vadd.f32 0.0, %v908
  %v910 = vpop.f32.mrb[0].mxu0
  %911 = vdwg.mxu0
  %v912 = vmul.f32 %v904, %v825
  %v913 = vmul.f32 %v909, %v826
  %914 = vrot.lane.b32.xlu0 %v612, 80
  %v915 = vpop.permute.xlu0 %914
  %916 = vrot.lane.b32.xlu0 %v614, 80
  %v917 = vpop.permute.xlu0 %916
  %v920 = vsel %vm262, %v915, 0.0
  %921 = vadd.xlane.f32.xlu0 %v920
  %v922 = vpop.xlane.xlu0 %921
  %v923 = vsel %vm262, %v917, 0.0
  %924 = vadd.xlane.f32.xlu0 %v923
  %v925 = vpop.xlane.xlu0 %924
  %v926 = vrcp.pop %v922
  %v927 = vrcp.pop %v925
  %928 = vrot.lane.b32.xlu0 %v166, 40
  %v929 = vpop.permute.xlu0 %928
  %930 = vrot.lane.b32.xlu0 %v167, 40
  %v931 = vpop.permute.xlu0 %930
  %v934 = vsel %vm262, %v915, 0
  %v936 = vsel %vm262, %v917, 0
  %938 = vmatprep.subr.mxu0 0.0
  %939 = vmatpush1.msra.mxu0 %v929
  %940 = vmatprep.subr.mxu0 0.0
  %941 = vmatpush1.msra.mxu0 %v931
  %942 = vmatprep.subr.mxu0 0.0
  %943 = vmatpush1.msra.mxu0 0.0
  %944 = vmatprep.subr.mxu0 0.0
  %945 = vmatpush1.msra.mxu0 0.0
  %946 = vmatprep.subr.mxu0 0.0
  %947 = vmatpush1.msra.mxu0 0.0
  %948 = vmatprep.subr.mxu0 0.0
  %949 = vmatpush1.msra.mxu0 0.0
  %950 = vmatprep.subr.mxu0 0.0
  %951 = vmatpush1.msra.mxu0 0.0
  %952 = vmatprep.subr.mxu0 0.0
  %953 = vmatpush1.msra.mxu0 0.0
  %954 = vmatprep.subr.mxu0 0.0
  %955 = vmatpush1.msra.mxu0 0.0
  %956 = vmatprep.subr.mxu0 0.0
  %957 = vmatpush1.msra.mxu0 0.0
  %958 = vmatprep.subr.mxu0 0.0
  %959 = vmatpush1.msra.mxu0 0.0
  %960 = vmatprep.subr.mxu0 0.0
  %961 = vmatpush1.msra.mxu0 0.0
  %962 = vmatprep.subr.mxu0 0.0
  %963 = vmatpush1.msra.mxu0 0.0
  %964 = vmatprep.subr.mxu0 0.0
  %965 = vmatpush1.msra.mxu0 0.0
  %966 = vmatprep.subr.mxu0 0.0
  %967 = vmatpush1.msra.mxu0 0.0
  %968 = vmatprep.subr.mxu0 0.0
  %969 = vmatpush1.msra.mxu0 0.0
  %970 = vmatprep.subr.mxu0 0.0
  %971 = vmatpush1.msra.mxu0 0.0
  %972 = vmatprep.subr.mxu0 0.0
  %973 = vmatpush1.msra.mxu0 0.0
  %974 = vmatprep.subr.mxu0 0.0
  %975 = vmatpush1.msra.mxu0 0.0
  %976 = vmatprep.subr.mxu0 0.0
  %977 = vmatpush1.msra.mxu0 0.0
  %978 = vmatprep.subr.mxu0 0.0
  %979 = vmatpush1.msra.mxu0 0.0
  %980 = vmatprep.subr.mxu0 0.0
  %981 = vmatpush1.msra.mxu0 0.0
  %982 = vmatprep.subr.mxu0 0.0
  %983 = vmatpush1.msra.mxu0 0.0
  %984 = vmatprep.subr.mxu0 0.0
  %985 = vmatpush1.msra.mxu0 0.0
  %986 = vmatprep.subr.mxu0 0.0
  %987 = vmatpush1.msra.mxu0 0.0
  %988 = vmatprep.subr.mxu0 0.0
  %989 = vmatpush1.msra.mxu0 0.0
  %990 = vmatprep.subr.mxu0 0.0
  %991 = vmatpush1.msra.mxu0 0.0
  %992 = vmatprep.subr.mxu0 0.0
  %993 = vmatpush1.msra.mxu0 0.0
  %994 = vmatprep.subr.mxu0 0.0
  %995 = vmatpush1.msra.mxu0 0.0
  %996 = vmatprep.subr.mxu0 0.0
  %997 = vmatpush1.msra.mxu0 0.0
  %998 = vmatprep.subr.mxu0 0.0
  %999 = vmatpush1.msra.mxu0 0.0
  %1000 = vmatprep.subr.mxu0 0.0
  %1001 = vmatpush1.msra.mxu0 0.0
  %1002 = vmatprep.mubr.f32.mxu0 0.0
  %1003 = vmatmul.mubr.f32.gmra.mrb[0].mxu0 %v934
  %v1004 = vpop.f32.mrb[0].mxu0
  %v1005 = vadd.f32 0.0, %v1004
  %v1006 = vpop.f32.mrb[0].mxu0
  %1007 = vmatprep.mubr.f32.mxu0 0.0
  %1008 = vmatmul.mubr.f32.gmra.mrb[0].mxu0 %v936
  %v1009 = vpop.f32.mrb[0].mxu0
  %v1010 = vadd.f32 0.0, %v1009
  %v1011 = vpop.f32.mrb[0].mxu0
  %1012 = vdwg.mxu0
  %v1013 = vmul.f32 %v1005, %v926
  %v1014 = vmul.f32 %v1010, %v927
  %1017 = vrot.lane.b32.xlu0 %v811, 8
  %v1018 = vpop.permute.xlu0 %1017
  %1019 = vrot.lane.b32.xlu0 %v812, 8
  %v1020 = vpop.permute.xlu0 %1019
  %1025 = vrot.lane.b32.xlu0 %v912, 16
  %v1026 = vpop.permute.xlu0 %1025
  %1027 = vrot.lane.b32.xlu0 %v913, 16
  %v1028 = vpop.permute.xlu0 %1027
  %1033 = vrot.lane.b32.xlu0 %v1013, 24
  %v1034 = vpop.permute.xlu0 %1033
  %1035 = vrot.lane.b32.xlu0 %v1014, 24
  %v1036 = vpop.permute.xlu0 %1035
  %v1039 = vsel %vm174, %v710, %v1018
  %v1040 = vsel %vm174, %v711, %v1020
  %v1041 = vsel %vm262, %v1039, %v1026
  %v1042 = vsel %vm262, %v1040, %v1028
  %vm1043 = vcmask 195584
  %v1044 = vsel %vm1043, %v1041, %v1034
  %v1045 = vsel %vm1043, %v1042, %v1036
  %v1046 = vld [vmem:[%s3] sm:$0xff]
  %v1047 = vld [vmem:[%s3 + $0x10] sm:$0xff]
  %v1048 = vld [vmem:[%s3 + $0x20] sm:$0xff]
  %v1049 = vld [vmem:[%s3 + $0x30] sm:$0xff]
  %v1050 = vlaneseq
  %v1051 = vshrl.u32 %v1050, 7
  %v1052 = vsub.s32 0, %v1051
  %v1053 = vrot.slane %v67, %v1052
  %1058 = vrot.lane.b32.xlu0 %v1046, 32
  %v1059 = vpop.permute.xlu0 %1058
  %1060 = vrot.lane.b32.xlu0 %v1047, 32
  %v1061 = vpop.permute.xlu0 %1060
  %1062 = vrot.lane.b32.xlu0 %v1048, 32
  %v1063 = vpop.permute.xlu0 %1062
  %1064 = vrot.lane.b32.xlu0 %v1049, 32
  %v1065 = vpop.permute.xlu0 %1064
  %v1071 = vsel %vm24, %v1044, 0
  %v1074 = vsel %vm24, %v1045, 0
  %1076 = vmatprep.subr.mxu0 0.0
  %1077 = vmatpush1.msra.mxu0 %v1059
  %1078 = vmatprep.subr.mxu0 0.0
  %1079 = vmatpush1.msra.mxu0 %v1061
  %1080 = vmatprep.subr.mxu0 0.0
  %1081 = vmatpush1.msra.mxu0 %v1063
  %1082 = vmatprep.subr.mxu0 0.0
  %1083 = vmatpush1.msra.mxu0 %v1065
  %1084 = vmatprep.subr.mxu0 0.0
  %1085 = vmatpush1.msra.mxu0 0.0
  %1086 = vmatprep.subr.mxu0 0.0
  %1087 = vmatpush1.msra.mxu0 0.0
  %1088 = vmatprep.subr.mxu0 0.0
  %1089 = vmatpush1.msra.mxu0 0.0
  %1090 = vmatprep.subr.mxu0 0.0
  %1091 = vmatpush1.msra.mxu0 0.0
  %1092 = vmatprep.subr.mxu0 0.0
  %1093 = vmatpush1.msra.mxu0 0.0
  %1094 = vmatprep.subr.mxu0 0.0
  %1095 = vmatpush1.msra.mxu0 0.0
  %1096 = vmatprep.subr.mxu0 0.0
  %1097 = vmatpush1.msra.mxu0 0.0
  %1098 = vmatprep.subr.mxu0 0.0
  %1099 = vmatpush1.msra.mxu0 0.0
  %1100 = vmatprep.subr.mxu0 0.0
  %1101 = vmatpush1.msra.mxu0 0.0
  %1102 = vmatprep.subr.mxu0 0.0
  %1103 = vmatpush1.msra.mxu0 0.0
  %1104 = vmatprep.subr.mxu0 0.0
  %1105 = vmatpush1.msra.mxu0 0.0
  %1106 = vmatprep.subr.mxu0 0.0
  %1107 = vmatpush1.msra.mxu0 0.0
  %1108 = vmatprep.subr.mxu0 0.0
  %1109 = vmatpush1.msra.mxu0 0.0
  %1110 = vmatprep.subr.mxu0 0.0
  %1111 = vmatpush1.msra.mxu0 0.0
  %1112 = vmatprep.subr.mxu0 0.0
  %1113 = vmatpush1.msra.mxu0 0.0
  %1114 = vmatprep.subr.mxu0 0.0
  %1115 = vmatpush1.msra.mxu0 0.0
  %1116 = vmatprep.subr.mxu0 0.0
  %1117 = vmatpush1.msra.mxu0 0.0
  %1118 = vmatprep.subr.mxu0 0.0
  %1119 = vmatpush1.msra.mxu0 0.0
  %1120 = vmatprep.subr.mxu0 0.0
  %1121 = vmatpush1.msra.mxu0 0.0
  %1122 = vmatprep.subr.mxu0 0.0
  %1123 = vmatpush1.msra.mxu0 0.0
  %1124 = vmatprep.subr.mxu0 0.0
  %1125 = vmatpush1.msra.mxu0 0.0
  %1126 = vmatprep.subr.mxu0 0.0
  %1127 = vmatpush1.msra.mxu0 0.0
  %1128 = vmatprep.subr.mxu0 0.0
  %1129 = vmatpush1.msra.mxu0 0.0
  %1130 = vmatprep.subr.mxu0 0.0
  %1131 = vmatpush1.msra.mxu0 0.0
  %1132 = vmatprep.subr.mxu0 0.0
  %1133 = vmatpush1.msra.mxu0 0.0
  %1134 = vmatprep.subr.mxu0 0.0
  %1135 = vmatpush1.msra.mxu0 0.0
  %1136 = vmatprep.subr.mxu0 0.0
  %1137 = vmatpush1.msra.mxu0 0.0
  %1138 = vmatprep.subr.mxu0 0.0
  %1139 = vmatpush1.msra.mxu0 0.0
  %1140 = vmatprep.mubr.f32.mxu0 0.0
  %1141 = vmatmul.mubr.f32.gmra.mrb[0].mxu0 %v1071
  %v1142 = vpop.f32.mrb[0].mxu0
  %v1143 = vadd.f32 %v1053, %v1142
  %v1144 = vpop.f32.mrb[0].mxu0
  %1145 = vmatprep.mubr.f32.mxu0 0.0
  %1146 = vmatmul.mubr.f32.gmra.mrb[0].mxu0 %v1074
  %v1147 = vpop.f32.mrb[0].mxu0
  %v1148 = vadd.f32 %v1053, %v1147
  %v1149 = vpop.f32.mrb[0].mxu0
  %1150 = vdwg.mxu0
  %v1151 = vadd.f32 %v1143, %v62
  %v1152 = vadd.f32 %v1148, %v63
  %v1153 = vsel %vm24, %v1151, 0.0
  %1154 = vadd.xlane.f32.xlu0 %v1153
  %v1155 = vpop.xlane.xlu0 %1154
  %v1156 = vsel %vm24, %v1152, 0.0
  %1157 = vadd.xlane.f32.xlu0 %v1156
  %v1158 = vpop.xlane.xlu0 %1157
  %v1159 = vmul.f32 %v1155, %v31
  %v1160 = vmul.f32 %v1158, %v31
  %v1161 = vsub.f32 %v1151, %v1159
  %v1162 = vsub.f32 %v1152, %v1160
  %v1163 = vmul.f32 %v1161, %v1161
  %v1164 = vmul.f32 %v1162, %v1162
  %v1165 = vsel %vm24, %v1163, 0.0
  %1166 = vadd.xlane.f32.xlu0 %v1165
  %v1167 = vpop.xlane.xlu0 %1166
  %v1168 = vsel %vm24, %v1164, 0.0
  %1169 = vadd.xlane.f32.xlu0 %v1168
  %v1170 = vpop.xlane.xlu0 %1169
  %v1171 = vmul.f32 %v1167, %v31
  %v1172 = vmul.f32 %v1170, %v31
  %v1173 = vadd.f32 %v1171, 1e-05
  %v1174 = vadd.f32 %v1172, 1e-05
  %v1175 = vrsqrt.pop %v1173
  %v1176 = vrsqrt.pop %v1174
  %v1177 = vmul.f32 %v1161, %v1175
  %v1178 = vmul.f32 %v1162, %v1176
  %v1179 = vlaneseq
  %v1180 = vshrl.u32 %v1179, 7
  %v1181 = vsub.s32 0, %v1180
  %v1182 = vrot.slane %v68, %v1181
  %v1183 = vmul.f32 %v1177, %v1182
  %v1184 = vmul.f32 %v1178, %v1182
  %v1185 = vlaneseq
  %v1186 = vshrl.u32 %v1185, 7
  %v1187 = vsub.s32 0, %v1186
  %v1188 = vrot.slane %v69, %v1187
  %v1189 = vadd.f32 %v1183, %v1188
  %v1190 = vadd.f32 %v1184, %v1188
  %v1191 = vld [vmem:[%s3 + $0x8] sm:$0xff]
  %v1192 = vld [vmem:[%s3 + $0x18] sm:$0xff]
  %v1193 = vld [vmem:[%s3 + $0x28] sm:$0xff]
  %v1194 = vld [vmem:[%s3 + $0x38] sm:$0xff]
  %v1195 = vlaneseq
  %v1196 = vshrl.u32 %v1195, 7
  %v1197 = vsub.s32 0, %v1196
  %v1198 = vrot.slane %v70, %v1197
  %v1200 = vsel %vm24, %v1189, 0
  %v1203 = vsel %vm24, %v1190, 0
  %1205 = vmatprep.subr.mxu0 0.0
  %1206 = vmatpush1.msra.mxu0 %v1191
  %1207 = vmatprep.subr.mxu0 0.0
  %1208 = vmatpush1.msra.mxu0 %v1192
  %1209 = vmatprep.subr.mxu0 0.0
  %1210 = vmatpush1.msra.mxu0 %v1193
  %1211 = vmatprep.subr.mxu0 0.0
  %1212 = vmatpush1.msra.mxu0 %v1194
  %1213 = vmatprep.subr.mxu0 0.0
  %1214 = vmatpush1.msra.mxu0 0.0
  %1215 = vmatprep.subr.mxu0 0.0
  %1216 = vmatpush1.msra.mxu0 0.0
  %1217 = vmatprep.subr.mxu0 0.0
  %1218 = vmatpush1.msra.mxu0 0.0
  %1219 = vmatprep.subr.mxu0 0.0
  %1220 = vmatpush1.msra.mxu0 0.0
  %1221 = vmatprep.subr.mxu0 0.0
  %1222 = vmatpush1.msra.mxu0 0.0
  %1223 = vmatprep.subr.mxu0 0.0
  %1224 = vmatpush1.msra.mxu0 0.0
  %1225 = vmatprep.subr.mxu0 0.0
  %1226 = vmatpush1.msra.mxu0 0.0
  %1227 = vmatprep.subr.mxu0 0.0
  %1228 = vmatpush1.msra.mxu0 0.0
  %1229 = vmatprep.subr.mxu0 0.0
  %1230 = vmatpush1.msra.mxu0 0.0
  %1231 = vmatprep.subr.mxu0 0.0
  %1232 = vmatpush1.msra.mxu0 0.0
  %1233 = vmatprep.subr.mxu0 0.0
  %1234 = vmatpush1.msra.mxu0 0.0
  %1235 = vmatprep.subr.mxu0 0.0
  %1236 = vmatpush1.msra.mxu0 0.0
  %1237 = vmatprep.subr.mxu0 0.0
  %1238 = vmatpush1.msra.mxu0 0.0
  %1239 = vmatprep.subr.mxu0 0.0
  %1240 = vmatpush1.msra.mxu0 0.0
  %1241 = vmatprep.subr.mxu0 0.0
  %1242 = vmatpush1.msra.mxu0 0.0
  %1243 = vmatprep.subr.mxu0 0.0
  %1244 = vmatpush1.msra.mxu0 0.0
  %1245 = vmatprep.subr.mxu0 0.0
  %1246 = vmatpush1.msra.mxu0 0.0
  %1247 = vmatprep.subr.mxu0 0.0
  %1248 = vmatpush1.msra.mxu0 0.0
  %1249 = vmatprep.subr.mxu0 0.0
  %1250 = vmatpush1.msra.mxu0 0.0
  %1251 = vmatprep.subr.mxu0 0.0
  %1252 = vmatpush1.msra.mxu0 0.0
  %1253 = vmatprep.subr.mxu0 0.0
  %1254 = vmatpush1.msra.mxu0 0.0
  %1255 = vmatprep.subr.mxu0 0.0
  %1256 = vmatpush1.msra.mxu0 0.0
  %1257 = vmatprep.subr.mxu0 0.0
  %1258 = vmatpush1.msra.mxu0 0.0
  %1259 = vmatprep.subr.mxu0 0.0
  %1260 = vmatpush1.msra.mxu0 0.0
  %1261 = vmatprep.subr.mxu0 0.0
  %1262 = vmatpush1.msra.mxu0 0.0
  %1263 = vmatprep.subr.mxu0 0.0
  %1264 = vmatpush1.msra.mxu0 0.0
  %1265 = vmatprep.subr.mxu0 0.0
  %1266 = vmatpush1.msra.mxu0 0.0
  %1267 = vmatprep.subr.mxu0 0.0
  %1268 = vmatpush1.msra.mxu0 0.0
  %1269 = vmatprep.mubr.f32.mxu0 0.0
  %1270 = vmatmul.mubr.f32.gmra.mrb[0].mxu0 %v1200
  %v1271 = vpop.f32.mrb[0].mxu0
  %v1272 = vadd.f32 %v1198, %v1271
  %v1273 = vpop.f32.mrb[0].mxu0
  %1274 = vmatprep.mubr.f32.mxu0 0.0
  %1275 = vmatmul.mubr.f32.gmra.mrb[0].mxu0 %v1203
  %v1276 = vpop.f32.mrb[0].mxu0
  %v1277 = vadd.f32 %v1198, %v1276
  %v1278 = vpop.f32.mrb[0].mxu0
  %1279 = vdwg.mxu0
  %v1280 = vmul.f32 %v1272, %v1272
  %v1281 = vmul.f32 %v1277, %v1277
  %v1282 = vmul.f32 %v1272, %v1280
  %v1283 = vmul.f32 %v1277, %v1281
  %v1284 = vmul.f32 %v1282, 0.044715
  %v1285 = vmul.f32 %v1283, 0.044715
  %v1286 = vadd.f32 %v1272, %v1284
  %v1287 = vadd.f32 %v1277, %v1285
  %v1288 = vmul.f32 %v1286, 0.7978846
  %v1289 = vmul.f32 %v1287, 0.7978846
  %v1290 = vtanh.pop %v1288
  %v1291 = vtanh.pop %v1289
  %v1292 = vadd.f32 %v1290, 1.0
  %v1293 = vadd.f32 %v1291, 1.0
  %v1294 = vmul.f32 %v1292, 0.5
  %v1295 = vmul.f32 %v1293, 0.5
  %v1296 = vmul.f32 %v1272, %v1294
  %v1297 = vmul.f32 %v1277, %v1295
  %v1298 = vlaneseq
  %v1299 = vshrl.u32 %v1298, 7
  %v1300 = vsub.s32 0, %v1299
  %v1301 = vrot.slane %v71, %v1300
  %1306 = vrot.lane.b32.xlu0 %v1191, 64
  %v1307 = vpop.permute.xlu0 %1306
  %1308 = vrot.lane.b32.xlu0 %v1192, 64
  %v1309 = vpop.permute.xlu0 %1308
  %1310 = vrot.lane.b32.xlu0 %v1193, 64
  %v1311 = vpop.permute.xlu0 %1310
  %1312 = vrot.lane.b32.xlu0 %v1194, 64
  %v1313 = vpop.permute.xlu0 %1312
  %vm1314 = vcmask 523264
  %v1316 = vsel %vm1314, %v1296, 0
  %v1319 = vsel %vm1314, %v1297, 0
  %v1321 = vsel %vm1314, %v1307, 0
  %v1323 = vsel %vm1314, %v1309, 0
  %v1325 = vsel %vm1314, %v1311, 0
  %v1327 = vsel %vm1314, %v1313, 0
  %1329 = vmatprep.subr.mxu0 0.0
  %1330 = vmatpush1.xpose.msra.mxu0 %v1321
  %1331 = vmatprep.subr.mxu0 0.0
  %1332 = vmatpush1.xpose.msra.mxu0 %v1323
  %1333 = vmatprep.subr.mxu0 0.0
  %1334 = vmatpush1.xpose.msra.mxu0 %v1325
  %1335 = vmatprep.subr.mxu0 0.0
  %1336 = vmatpush1.xpose.msra.mxu0 %v1327
  %1337 = vmatprep.subr.mxu0 0.0
  %1338 = vmatpush1.xpose.msra.mxu0 0.0
  %1339 = vmatprep.subr.mxu0 0.0
  %1340 = vmatpush1.xpose.msra.mxu0 0.0
  %1341 = vmatprep.subr.mxu0 0.0
  %1342 = vmatpush1.xpose.msra.mxu0 0.0
  %1343 = vmatprep.subr.mxu0 0.0
  %1344 = vmatpush1.xpose.msra.mxu0 0.0
  %1345 = vmatprep.subr.mxu0 0.0
  %1346 = vmatpush1.xpose.msra.mxu0 0.0
  %1347 = vmatprep.subr.mxu0 0.0
  %1348 = vmatpush1.xpose.msra.mxu0 0.0
  %1349 = vmatprep.subr.mxu0 0.0
  %1350 = vmatpush1.xpose.msra.mxu0 0.0
  %1351 = vmatprep.subr.mxu0 0.0
  %1352 = vmatpush1.xpose.msra.mxu0 0.0
  %1353 = vmatprep.subr.mxu0 0.0
  %1354 = vmatpush1.xpose.msra.mxu0 0.0
  %1355 = vmatprep.subr.mxu0 0.0
  %1356 = vmatpush1.xpose.msra.mxu0 0.0
  %1357 = vmatprep.subr.mxu0 0.0
  %1358 = vmatpush1.xpose.msra.mxu0 0.0
  %1359 = vmatprep.subr.mxu0 0.0
  %1360 = vmatpush1.xpose.msra.mxu0 0.0
  %1361 = vmatprep.subr.mxu0 0.0
  %1362 = vmatpush1.xpose.msra.mxu0 0.0
  %1363 = vmatprep.subr.mxu0 0.0
  %1364 = vmatpush1.xpose.msra.mxu0 0.0
  %1365 = vmatprep.subr.mxu0 0.0
  %1366 = vmatpush1.xpose.msra.mxu0 0.0
  %1367 = vmatprep.subr.mxu0 0.0
  %1368 = vmatpush1.xpose.msra.mxu0 0.0
  %1369 = vmatprep.subr.mxu0 0.0
  %1370 = vmatpush1.xpose.msra.mxu0 0.0
  %1371 = vmatprep.subr.mxu0 0.0
  %1372 = vmatpush1.xpose.msra.mxu0 0.0
  %1373 = vmatprep.subr.mxu0 0.0
  %1374 = vmatpush1.xpose.msra.mxu0 0.0
  %1375 = vmatprep.subr.mxu0 0.0
  %1376 = vmatpush1.xpose.msra.mxu0 0.0
  %1377 = vmatprep.subr.mxu0 0.0
  %1378 = vmatpush1.xpose.msra.mxu0 0.0
  %1379 = vmatprep.subr.mxu0 0.0
  %1380 = vmatpush1.xpose.msra.mxu0 0.0
  %1381 = vmatprep.subr.mxu0 0.0
  %1382 = vmatpush1.xpose.msra.mxu0 0.0
  %1383 = vmatprep.subr.mxu0 0.0
  %1384 = vmatpush1.xpose.msra.mxu0 0.0
  %1385 = vmatprep.subr.mxu0 0.0
  %1386 = vmatpush1.xpose.msra.mxu0 0.0
  %1387 = vmatprep.subr.mxu0 0.0
  %1388 = vmatpush1.xpose.msra.mxu0 0.0
  %1389 = vmatprep.subr.mxu0 0.0
  %1390 = vmatpush1.xpose.msra.mxu0 0.0
  %1391 = vmatprep.subr.mxu0 0.0
  %1392 = vmatpush1.xpose.msra.mxu0 0.0
  %1393 = vmatprep.mubr.f32.mxu0 0.0
  %1394 = vmatmul.mubr.f32.gmra.mrb[0].mxu0 %v1316
  %v1395 = vpop.f32.mrb[0].mxu0
  %v1396 = vadd.f32 %v1301, %v1395
  %v1397 = vpop.f32.mrb[0].mxu0
  %1398 = vmatprep.mubr.f32.mxu0 0.0
  %1399 = vmatmul.mubr.f32.gmra.mrb[0].mxu0 %v1319
  %v1400 = vpop.f32.mrb[0].mxu0
  %v1401 = vadd.f32 %v1301, %v1400
  %v1402 = vpop.f32.mrb[0].mxu0
  %1403 = vdwg.mxu0
  %v1404 = vadd.f32 %v1396, %v1189
  %v1405 = vadd.f32 %v1401, %v1190
  %v1406 = vsel %vm24, %v1404, 0.0
  %1407 = vadd.xlane.f32.xlu0 %v1406
  %v1408 = vpop.xlane.xlu0 %1407
  %v1409 = vsel %vm24, %v1405, 0.0
  %1410 = vadd.xlane.f32.xlu0 %v1409
  %v1411 = vpop.xlane.xlu0 %1410
  %v1412 = vmul.f32 %v1408, %v31
  %v1413 = vmul.f32 %v1411, %v31
  %v1414 = vsub.f32 %v1404, %v1412
  %v1415 = vsub.f32 %v1405, %v1413
  %v1416 = vmul.f32 %v1414, %v1414
  %v1417 = vmul.f32 %v1415, %v1415
  %v1418 = vsel %vm24, %v1416, 0.0
  %1419 = vadd.xlane.f32.xlu0 %v1418
  %v1420 = vpop.xlane.xlu0 %1419
  %v1421 = vsel %vm24, %v1417, 0.0
  %1422 = vadd.xlane.f32.xlu0 %v1421
  %v1423 = vpop.xlane.xlu0 %1422
  %v1424 = vmul.f32 %v1420, %v31
  %v1425 = vmul.f32 %v1423, %v31
  %v1426 = vadd.f32 %v1424, 1e-05
  %v1427 = vadd.f32 %v1425, 1e-05
  %v1428 = vrsqrt.pop %v1426
  %v1429 = vrsqrt.pop %v1427
  %v1430 = vmul.f32 %v1414, %v1428
  %v1431 = vmul.f32 %v1415, %v1429
  %v1432 = vlaneseq
  %v1433 = vshrl.u32 %v1432, 7
  %v1434 = vsub.s32 0, %v1433
  %v1435 = vrot.slane %v72, %v1434
  %v1436 = vmul.f32 %v1430, %v1435
  %v1437 = vmul.f32 %v1431, %v1435
  %v1438 = vlaneseq
  %v1439 = vshrl.u32 %v1438, 7
  %v1440 = vsub.s32 0, %v1439
  %v1441 = vrot.slane %v73, %v1440
  %v1442 = vadd.f32 %v1436, %v1441
  %v1443 = vadd.f32 %v1437, %v1441
  %v1444 = vld [vmem:[%s4 + $0xb] sm:$0x1]
  %v1445 = vld [vmem:[%s4 + $0xc] sm:$0x1]
  %v1446 = vld [vmem:[%s4 + $0xd] sm:$0x1]
  %v1447 = vld [vmem:[%s4 + $0xe] sm:$0x1]
  %v1448 = vld [vmem:[%s4 + $0xf] sm:$0x1]
  %v1449 = vld [vmem:[%s4 + $0x10] sm:$0x1]
  %v1450 = vld [vmem:[%s4 + $0x11] sm:$0x1]
  %v1451 = vld [vmem:[%s4 + $0x12] sm:$0x1]
  %s1452 = scalar_lea.vmem %s3, 64
  %v1453 = vld [vmem:[%s1452] sm:$0xff]
  %v1454 = vld [vmem:[%s1452 + $0x10] sm:$0xff]
  %v1455 = vld [vmem:[%s1452 + $0x20] sm:$0xff]
  %v1456 = vld [vmem:[%s1452 + $0x30] sm:$0xff]
  %v1457 = vlaneseq
  %v1458 = vshrl.u32 %v1457, 7
  %v1459 = vsub.s32 0, %v1458
  %v1460 = vrot.slane %v1444, %v1459
  %v1462 = vsel %vm24, %v1442, 0
  %v1465 = vsel %vm24, %v1443, 0
  %1467 = vmatprep.subr.mxu0 0.0
  %1468 = vmatpush1.msra.mxu0 %v1453
  %1469 = vmatprep.subr.mxu0 0.0
  %1470 = vmatpush1.msra.mxu0 %v1454
  %1471 = vmatprep.subr.mxu0 0.0
  %1472 = vmatpush1.msra.mxu0 %v1455
  %1473 = vmatprep.subr.mxu0 0.0
  %1474 = vmatpush1.msra.mxu0 %v1456
  %1475 = vmatprep.subr.mxu0 0.0
  %1476 = vmatpush1.msra.mxu0 0.0
  %1477 = vmatprep.subr.mxu0 0.0
  %1478 = vmatpush1.msra.mxu0 0.0
  %1479 = vmatprep.subr.mxu0 0.0
  %1480 = vmatpush1.msra.mxu0 0.0
  %1481 = vmatprep.subr.mxu0 0.0
  %1482 = vmatpush1.msra.mxu0 0.0
  %1483 = vmatprep.subr.mxu0 0.0
  %1484 = vmatpush1.msra.mxu0 0.0
  %1485 = vmatprep.subr.mxu0 0.0
  %1486 = vmatpush1.msra.mxu0 0.0
  %1487 = vmatprep.subr.mxu0 0.0
  %1488 = vmatpush1.msra.mxu0 0.0
  %1489 = vmatprep.subr.mxu0 0.0
  %1490 = vmatpush1.msra.mxu0 0.0
  %1491 = vmatprep.subr.mxu0 0.0
  %1492 = vmatpush1.msra.mxu0 0.0
  %1493 = vmatprep.subr.mxu0 0.0
  %1494 = vmatpush1.msra.mxu0 0.0
  %1495 = vmatprep.subr.mxu0 0.0
  %1496 = vmatpush1.msra.mxu0 0.0
  %1497 = vmatprep.subr.mxu0 0.0
  %1498 = vmatpush1.msra.mxu0 0.0
  %1499 = vmatprep.subr.mxu0 0.0
  %1500 = vmatpush1.msra.mxu0 0.0
  %1501 = vmatprep.subr.mxu0 0.0
  %1502 = vmatpush1.msra.mxu0 0.0
  %1503 = vmatprep.subr.mxu0 0.0
  %1504 = vmatpush1.msra.mxu0 0.0
  %1505 = vmatprep.subr.mxu0 0.0
  %1506 = vmatpush1.msra.mxu0 0.0
  %1507 = vmatprep.subr.mxu0 0.0
  %1508 = vmatpush1.msra.mxu0 0.0
  %1509 = vmatprep.subr.mxu0 0.0
  %1510 = vmatpush1.msra.mxu0 0.0
  %1511 = vmatprep.subr.mxu0 0.0
  %1512 = vmatpush1.msra.mxu0 0.0
  %1513 = vmatprep.subr.mxu0 0.0
  %1514 = vmatpush1.msra.mxu0 0.0
  %1515 = vmatprep.subr.mxu0 0.0
  %1516 = vmatpush1.msra.mxu0 0.0
  %1517 = vmatprep.subr.mxu0 0.0
  %1518 = vmatpush1.msra.mxu0 0.0
  %1519 = vmatprep.subr.mxu0 0.0
  %1520 = vmatpush1.msra.mxu0 0.0
  %1521 = vmatprep.subr.mxu0 0.0
  %1522 = vmatpush1.msra.mxu0 0.0
  %1523 = vmatprep.subr.mxu0 0.0
  %1524 = vmatpush1.msra.mxu0 0.0
  %1525 = vmatprep.subr.mxu0 0.0
  %1526 = vmatpush1.msra.mxu0 0.0
  %1527 = vmatprep.subr.mxu0 0.0
  %1528 = vmatpush1.msra.mxu0 0.0
  %1529 = vmatprep.subr.mxu0 0.0
  %1530 = vmatpush1.msra.mxu0 0.0
  %1531 = vmatprep.mubr.f32.mxu0 0.0
  %1532 = vmatmul.mubr.f32.gmra.mrb[0].mxu0 %v1462
  %v1533 = vpop.f32.mrb[0].mxu0
  %v1534 = vadd.f32 %v1460, %v1533
  %v1535 = vpop.f32.mrb[0].mxu0
  %1536 = vmatprep.mubr.f32.mxu0 0.0
  %1537 = vmatmul.mubr.f32.gmra.mrb[0].mxu0 %v1465
  %v1538 = vpop.f32.mrb[0].mxu0
  %v1539 = vadd.f32 %v1460, %v1538
  %v1540 = vpop.f32.mrb[0].mxu0
  %1541 = vdwg.mxu0
  %1542 = vst.msk [vmem:[#allocation2] sm:$0xff] %vm163, %v1534
  %1543 = vst.msk [vmem:[#allocation2 + $0x8] sm:$0xff] %vm163, %v1539
  %v1544 = vld [vmem:[#allocation2] sm:$0xff]
  %v1545 = vld [vmem:[#allocation2 + $0x8] sm:$0xff]
  %1548 = vrot.lane.b32.xlu0 %v1544, 96
  %v1549 = vpop.permute.xlu0 %1548
  %1550 = vrot.lane.b32.xlu0 %v1545, 96
  %v1551 = vpop.permute.xlu0 %1550
  %v1552 = vsel %vm174, %v1544, 0
  %v1554 = vsel %vm174, %v1545, 0
  %v1556 = vsel %vm174, %v1549, 0
  %v1558 = vsel %vm174, %v1551, 0
  %1560 = vmatprep.subr.mxu0 0.0
  %1561 = vmatpush1.xpose.msra.mxu0 %v1556
  %1562 = vmatprep.subr.mxu0 0.0
  %1563 = vmatpush1.xpose.msra.mxu0 %v1558
  %1564 = vmatprep.subr.mxu0 0.0
  %1565 = vmatpush1.xpose.msra.mxu0 0.0
  %1566 = vmatprep.subr.mxu0 0.0
  %1567 = vmatpush1.xpose.msra.mxu0 0.0
  %1568 = vmatprep.subr.mxu0 0.0
  %1569 = vmatpush1.xpose.msra.mxu0 0.0
  %1570 = vmatprep.subr.mxu0 0.0
  %1571 = vmatpush1.xpose.msra.mxu0 0.0
  %1572 = vmatprep.subr.mxu0 0.0
  %1573 = vmatpush1.xpose.msra.mxu0 0.0
  %1574 = vmatprep.subr.mxu0 0.0
  %1575 = vmatpush1.xpose.msra.mxu0 0.0
  %1576 = vmatprep.subr.mxu0 0.0
  %1577 = vmatpush1.xpose.msra.mxu0 0.0
  %1578 = vmatprep.subr.mxu0 0.0
  %1579 = vmatpush1.xpose.msra.mxu0 0.0
  %1580 = vmatprep.subr.mxu0 0.0
  %1581 = vmatpush1.xpose.msra.mxu0 0.0
  %1582 = vmatprep.subr.mxu0 0.0
  %1583 = vmatpush1.xpose.msra.mxu0 0.0
  %1584 = vmatprep.subr.mxu0 0.0
  %1585 = vmatpush1.xpose.msra.mxu0 0.0
  %1586 = vmatprep.subr.mxu0 0.0
  %1587 = vmatpush1.xpose.msra.mxu0 0.0
  %1588 = vmatprep.subr.mxu0 0.0
  %1589 = vmatpush1.xpose.msra.mxu0 0.0
  %1590 = vmatprep.subr.mxu0 0.0
  %1591 = vmatpush1.xpose.msra.mxu0 0.0
  %1592 = vmatprep.subr.mxu0 0.0
  %1593 = vmatpush1.xpose.msra.mxu0 0.0
  %1594 = vmatprep.subr.mxu0 0.0
  %1595 = vmatpush1.xpose.msra.mxu0 0.0
  %1596 = vmatprep.subr.mxu0 0.0
  %1597 = vmatpush1.xpose.msra.mxu0 0.0
  %1598 = vmatprep.subr.mxu0 0.0
  %1599 = vmatpush1.xpose.msra.mxu0 0.0
  %1600 = vmatprep.subr.mxu0 0.0
  %1601 = vmatpush1.xpose.msra.mxu0 0.0
  %1602 = vmatprep.subr.mxu0 0.0
  %1603 = vmatpush1.xpose.msra.mxu0 0.0
  %1604 = vmatprep.subr.mxu0 0.0
  %1605 = vmatpush1.xpose.msra.mxu0 0.0
  %1606 = vmatprep.subr.mxu0 0.0
  %1607 = vmatpush1.xpose.msra.mxu0 0.0
  %1608 = vmatprep.subr.mxu0 0.0
  %1609 = vmatpush1.xpose.msra.mxu0 0.0
  %1610 = vmatprep.subr.mxu0 0.0
  %1611 = vmatpush1.xpose.msra.mxu0 0.0
  %1612 = vmatprep.subr.mxu0 0.0
  %1613 = vmatpush1.xpose.msra.mxu0 0.0
  %1614 = vmatprep.subr.mxu0 0.0
  %1615 = vmatpush1.xpose.msra.mxu0 0.0
  %1616 = vmatprep.subr.mxu0 0.0
  %1617 = vmatpush1.xpose.msra.mxu0 0.0
  %1618 = vmatprep.subr.mxu0 0.0
  %1619 = vmatpush1.xpose.msra.mxu0 0.0
  %1620 = vmatprep.subr.mxu0 0.0
  %1621 = vmatpush1.xpose.msra.mxu0 0.0
  %1622 = vmatprep.subr.mxu0 0.0
  %1623 = vmatpush1.xpose.msra.mxu0 0.0
  %1624 = vmatprep.mubr.f32.mxu0 0.0
  %1625 = vmatmul.mubr.f32.gmra.mrb[0].mxu0 %v1552
  %v1626 = vpop.f32.mrb[0].mxu0
  %v1627 = vadd.f32 0.0, %v1626
  %v1628 = vpop.f32.mrb[0].mxu0
  %1629 = vmatprep.mubr.f32.mxu0 0.0
  %1630 = vmatmul.mubr.f32.gmra.mrb[0].mxu0 %v1554
  %v1631 = vpop.f32.mrb[0].mxu0
  %v1632 = vadd.f32 0.0, %v1631
  %v1633 = vpop.f32.mrb[0].mxu0
  %1634 = vdwg.mxu0
  %v1635 = vmul.f32 %v1627, 0.35355338
  %v1636 = vmul.f32 %v1632, 0.35355338
  %v1637 = vadd.f32 %v1635, %v64
  %v1638 = vadd.f32 %v1636, %v65
  %v1639 = vsel %vm262, %v1637, -inf
  %1640 = vmax.xlane.f32.xlu0 %v1639
  %v1641 = vpop.xlane.xlu0 %1640
  %v1642 = vsel %vm262, %v1638, -inf
  %1643 = vmax.xlane.f32.xlu0 %v1642
  %v1644 = vpop.xlane.xlu0 %1643
  %v1645 = vsub.f32 %v1637, %v1641
  %v1646 = vsub.f32 %v1638, %v1644
  %1647 = vrot.lane.b32.xlu0 %v1544, 120
  %v1648 = vpop.permute.xlu0 %1647
  %1649 = vrot.lane.b32.xlu0 %v1545, 120
  %v1650 = vpop.permute.xlu0 %1649
  %1651 = vrot.lane.b32.xlu0 %v1544, 88
  %v1652 = vpop.permute.xlu0 %1651
  %1653 = vrot.lane.b32.xlu0 %v1545, 88
  %v1654 = vpop.permute.xlu0 %1653
  %v1655 = vsel %vm174, %v1648, 0
  %v1657 = vsel %vm174, %v1650, 0
  %v1659 = vsel %vm174, %v1652, 0
  %v1661 = vsel %vm174, %v1654, 0
  %1663 = vmatprep.subr.mxu0 0.0
  %1664 = vmatpush1.xpose.msra.mxu0 %v1659
  %1665 = vmatprep.subr.mxu0 0.0
  %1666 = vmatpush1.xpose.msra.mxu0 %v1661
  %1667 = vmatprep.subr.mxu0 0.0
  %1668 = vmatpush1.xpose.msra.mxu0 0.0
  %1669 = vmatprep.subr.mxu0 0.0
  %1670 = vmatpush1.xpose.msra.mxu0 0.0
  %1671 = vmatprep.subr.mxu0 0.0
  %1672 = vmatpush1.xpose.msra.mxu0 0.0
  %1673 = vmatprep.subr.mxu0 0.0
  %1674 = vmatpush1.xpose.msra.mxu0 0.0
  %1675 = vmatprep.subr.mxu0 0.0
  %1676 = vmatpush1.xpose.msra.mxu0 0.0
  %1677 = vmatprep.subr.mxu0 0.0
  %1678 = vmatpush1.xpose.msra.mxu0 0.0
  %1679 = vmatprep.subr.mxu0 0.0
  %1680 = vmatpush1.xpose.msra.mxu0 0.0
  %1681 = vmatprep.subr.mxu0 0.0
  %1682 = vmatpush1.xpose.msra.mxu0 0.0
  %1683 = vmatprep.subr.mxu0 0.0
  %1684 = vmatpush1.xpose.msra.mxu0 0.0
  %1685 = vmatprep.subr.mxu0 0.0
  %1686 = vmatpush1.xpose.msra.mxu0 0.0
  %1687 = vmatprep.subr.mxu0 0.0
  %1688 = vmatpush1.xpose.msra.mxu0 0.0
  %1689 = vmatprep.subr.mxu0 0.0
  %1690 = vmatpush1.xpose.msra.mxu0 0.0
  %1691 = vmatprep.subr.mxu0 0.0
  %1692 = vmatpush1.xpose.msra.mxu0 0.0
  %1693 = vmatprep.subr.mxu0 0.0
  %1694 = vmatpush1.xpose.msra.mxu0 0.0
  %1695 = vmatprep.subr.mxu0 0.0
  %1696 = vmatpush1.xpose.msra.mxu0 0.0
  %1697 = vmatprep.subr.mxu0 0.0
  %1698 = vmatpush1.xpose.msra.mxu0 0.0
  %1699 = vmatprep.subr.mxu0 0.0
  %1700 = vmatpush1.xpose.msra.mxu0 0.0
  %1701 = vmatprep.subr.mxu0 0.0
  %1702 = vmatpush1.xpose.msra.mxu0 0.0
  %1703 = vmatprep.subr.mxu0 0.0
  %1704 = vmatpush1.xpose.msra.mxu0 0.0
  %1705 = vmatprep.subr.mxu0 0.0
  %1706 = vmatpush1.xpose.msra.mxu0 0.0
  %1707 = vmatprep.subr.mxu0 0.0
  %1708 = vmatpush1.xpose.msra.mxu0 0.0
  %1709 = vmatprep.subr.mxu0 0.0
  %1710 = vmatpush1.xpose.msra.mxu0 0.0
  %1711 = vmatprep.subr.mxu0 0.0
  %1712 = vmatpush1.xpose.msra.mxu0 0.0
  %1713 = vmatprep.subr.mxu0 0.0
  %1714 = vmatpush1.xpose.msra.mxu0 0.0
  %1715 = vmatprep.subr.mxu0 0.0
  %1716 = vmatpush1.xpose.msra.mxu0 0.0
  %1717 = vmatprep.subr.mxu0 0.0
  %1718 = vmatpush1.xpose.msra.mxu0 0.0
  %1719 = vmatprep.subr.mxu0 0.0
  %1720 = vmatpush1.xpose.msra.mxu0 0.0
  %1721 = vmatprep.subr.mxu0 0.0
  %1722 = vmatpush1.xpose.msra.mxu0 0.0
  %1723 = vmatprep.subr.mxu0 0.0
  %1724 = vmatpush1.xpose.msra.mxu0 0.0
  %1725 = vmatprep.subr.mxu0 0.0
  %1726 = vmatpush1.xpose.msra.mxu0 0.0
  %1727 = vmatprep.mubr.f32.mxu0 0.0
  %1728 = vmatmul.mubr.f32.gmra.mrb[0].mxu0 %v1655
  %v1729 = vpop.f32.mrb[0].mxu0
  %v1730 = vadd.f32 0.0, %v1729
  %v1731 = vpop.f32.mrb[0].mxu0
  %1732 = vmatprep.mubr.f32.mxu0 0.0
  %1733 = vmatmul.mubr.f32.gmra.mrb[0].mxu0 %v1657
  %v1734 = vpop.f32.mrb[0].mxu0
  %v1735 = vadd.f32 0.0, %v1734
  %v1736 = vpop.f32.mrb[0].mxu0
  %1737 = vdwg.mxu0
  %v1738 = vmul.f32 %v1730, 0.35355338
  %v1739 = vmul.f32 %v1735, 0.35355338
  %v1740 = vadd.f32 %v1738, %v64
  %v1741 = vadd.f32 %v1739, %v65
  %v1742 = vsel %vm262, %v1740, -inf
  %1743 = vmax.xlane.f32.xlu0 %v1742
  %v1744 = vpop.xlane.xlu0 %1743
  %v1745 = vsel %vm262, %v1741, -inf
  %1746 = vmax.xlane.f32.xlu0 %v1745
  %v1747 = vpop.xlane.xlu0 %1746
  %v1748 = vsub.f32 %v1740, %v1744
  %v1749 = vsub.f32 %v1741, %v1747
  %1750 = vrot.lane.b32.xlu0 %v1544, 112
  %v1751 = vpop.permute.xlu0 %1750
  %1752 = vrot.lane.b32.xlu0 %v1545, 112
  %v1753 = vpop.permute.xlu0 %1752
  %1754 = vrot.lane.b32.xlu0 %v1544, 80
  %v1755 = vpop.permute.xlu0 %1754
  %1756 = vrot.lane.b32.xlu0 %v1545, 80
  %v1757 = vpop.permute.xlu0 %1756
  %v1758 = vsel %vm174, %v1751, 0
  %v1760 = vsel %vm174, %v1753, 0
  %v1762 = vsel %vm174, %v1755, 0
  %v1764 = vsel %vm174, %v1757, 0
  %1766 = vmatprep.subr.mxu0 0.0
  %1767 = vmatpush1.xpose.msra.mxu0 %v1762
  %1768 = vmatprep.subr.mxu0 0.0
  %1769 = vmatpush1.xpose.msra.mxu0 %v1764
  %1770 = vmatprep.subr.mxu0 0.0
  %1771 = vmatpush1.xpose.msra.mxu0 0.0
  %1772 = vmatprep.subr.mxu0 0.0
  %1773 = vmatpush1.xpose.msra.mxu0 0.0
  %1774 = vmatprep.subr.mxu0 0.0
  %1775 = vmatpush1.xpose.msra.mxu0 0.0
  %1776 = vmatprep.subr.mxu0 0.0
  %1777 = vmatpush1.xpose.msra.mxu0 0.0
  %1778 = vmatprep.subr.mxu0 0.0
  %1779 = vmatpush1.xpose.msra.mxu0 0.0
  %1780 = vmatprep.subr.mxu0 0.0
  %1781 = vmatpush1.xpose.msra.mxu0 0.0
  %1782 = vmatprep.subr.mxu0 0.0
  %1783 = vmatpush1.xpose.msra.mxu0 0.0
  %1784 = vmatprep.subr.mxu0 0.0
  %1785 = vmatpush1.xpose.msra.mxu0 0.0
  %1786 = vmatprep.subr.mxu0 0.0
  %1787 = vmatpush1.xpose.msra.mxu0 0.0
  %1788 = vmatprep.subr.mxu0 0.0
  %1789 = vmatpush1.xpose.msra.mxu0 0.0
  %1790 = vmatprep.subr.mxu0 0.0
  %1791 = vmatpush1.xpose.msra.mxu0 0.0
  %1792 = vmatprep.subr.mxu0 0.0
  %1793 = vmatpush1.xpose.msra.mxu0 0.0
  %1794 = vmatprep.subr.mxu0 0.0
  %1795 = vmatpush1.xpose.msra.mxu0 0.0
  %1796 = vmatprep.subr.mxu0 0.0
  %1797 = vmatpush1.xpose.msra.mxu0 0.0
  %1798 = vmatprep.subr.mxu0 0.0
  %1799 = vmatpush1.xpose.msra.mxu0 0.0
  %1800 = vmatprep.subr.mxu0 0.0
  %1801 = vmatpush1.xpose.msra.mxu0 0.0
  %1802 = vmatprep.subr.mxu0 0.0
  %1803 = vmatpush1.xpose.msra.mxu0 0.0
  %1804 = vmatprep.subr.mxu0 0.0
  %1805 = vmatpush1.xpose.msra.mxu0 0.0
  %1806 = vmatprep.subr.mxu0 0.0
  %1807 = vmatpush1.xpose.msra.mxu0 0.0
  %1808 = vmatprep.subr.mxu0 0.0
  %1809 = vmatpush1.xpose.msra.mxu0 0.0
  %1810 = vmatprep.subr.mxu0 0.0
  %1811 = vmatpush1.xpose.msra.mxu0 0.0
  %1812 = vmatprep.subr.mxu0 0.0
  %1813 = vmatpush1.xpose.msra.mxu0 0.0
  %1814 = vmatprep.subr.mxu0 0.0
  %1815 = vmatpush1.xpose.msra.mxu0 0.0
  %1816 = vmatprep.subr.mxu0 0.0
  %1817 = vmatpush1.xpose.msra.mxu0 0.0
  %1818 = vmatprep.subr.mxu0 0.0
  %1819 = vmatpush1.xpose.msra.mxu0 0.0
  %1820 = vmatprep.subr.mxu0 0.0
  %1821 = vmatpush1.xpose.msra.mxu0 0.0
  %1822 = vmatprep.subr.mxu0 0.0
  %1823 = vmatpush1.xpose.msra.mxu0 0.0
  %1824 = vmatprep.subr.mxu0 0.0
  %1825 = vmatpush1.xpose.msra.mxu0 0.0
  %1826 = vmatprep.subr.mxu0 0.0
  %1827 = vmatpush1.xpose.msra.mxu0 0.0
  %1828 = vmatprep.subr.mxu0 0.0
  %1829 = vmatpush1.xpose.msra.mxu0 0.0
  %1830 = vmatprep.mubr.f32.mxu0 0.0
  %1831 = vmatmul.mubr.f32.gmra.mrb[0].mxu0 %v1758
  %v1832 = vpop.f32.mrb[0].mxu0
  %v1833 = vadd.f32 0.0, %v1832
  %v1834 = vpop.f32.mrb[0].mxu0
  %1835 = vmatprep.mubr.f32.mxu0 0.0
  %1836 = vmatmul.mubr.f32.gmra.mrb[0].mxu0 %v1760
  %v1837 = vpop.f32.mrb[0].mxu0
  %v1838 = vadd.f32 0.0, %v1837
  %v1839 = vpop.f32.mrb[0].mxu0
  %1840 = vdwg.mxu0
  %v1841 = vmul.f32 %v1833, 0.35355338
  %v1842 = vmul.f32 %v1838, 0.35355338
  %v1843 = vadd.f32 %v1841, %v64
  %v1844 = vadd.f32 %v1842, %v65
  %v1845 = vsel %vm262, %v1843, -inf
  %1846 = vmax.xlane.f32.xlu0 %v1845
  %v1847 = vpop.xlane.xlu0 %1846
  %v1848 = vsel %vm262, %v1844, -inf
  %1849 = vmax.xlane.f32.xlu0 %v1848
  %v1850 = vpop.xlane.xlu0 %1849
  %v1851 = vsub.f32 %v1843, %v1847
  %v1852 = vsub.f32 %v1844, %v1850
  %1853 = vrot.lane.b32.xlu0 %v1544, 104
  %v1854 = vpop.permute.xlu0 %1853
  %1855 = vrot.lane.b32.xlu0 %v1545, 104
  %v1856 = vpop.permute.xlu0 %1855
  %1857 = vrot.lane.b32.xlu0 %v1544, 72
  %v1858 = vpop.permute.xlu0 %1857
  %1859 = vrot.lane.b32.xlu0 %v1545, 72
  %v1860 = vpop.permute.xlu0 %1859
  %v1861 = vsel %vm174, %v1854, 0
  %v1863 = vsel %vm174, %v1856, 0
  %v1865 = vsel %vm174, %v1858, 0
  %v1867 = vsel %vm174, %v1860, 0
  %1869 = vmatprep.subr.mxu0 0.0
  %1870 = vmatpush1.xpose.msra.mxu0 %v1865
  %1871 = vmatprep.subr.mxu0 0.0
  %1872 = vmatpush1.xpose.msra.mxu0 %v1867
  %1873 = vmatprep.subr.mxu0 0.0
  %1874 = vmatpush1.xpose.msra.mxu0 0.0
  %1875 = vmatprep.subr.mxu0 0.0
  %1876 = vmatpush1.xpose.msra.mxu0 0.0
  %1877 = vmatprep.subr.mxu0 0.0
  %1878 = vmatpush1.xpose.msra.mxu0 0.0
  %1879 = vmatprep.subr.mxu0 0.0
  %1880 = vmatpush1.xpose.msra.mxu0 0.0
  %1881 = vmatprep.subr.mxu0 0.0
  %1882 = vmatpush1.xpose.msra.mxu0 0.0
  %1883 = vmatprep.subr.mxu0 0.0
  %1884 = vmatpush1.xpose.msra.mxu0 0.0
  %1885 = vmatprep.subr.mxu0 0.0
  %1886 = vmatpush1.xpose.msra.mxu0 0.0
  %1887 = vmatprep.subr.mxu0 0.0
  %1888 = vmatpush1.xpose.msra.mxu0 0.0
  %1889 = vmatprep.subr.mxu0 0.0
  %1890 = vmatpush1.xpose.msra.mxu0 0.0
  %1891 = vmatprep.subr.mxu0 0.0
  %1892 = vmatpush1.xpose.msra.mxu0 0.0
  %1893 = vmatprep.subr.mxu0 0.0
  %1894 = vmatpush1.xpose.msra.mxu0 0.0
  %1895 = vmatprep.subr.mxu0 0.0
  %1896 = vmatpush1.xpose.msra.mxu0 0.0
  %1897 = vmatprep.subr.mxu0 0.0
  %1898 = vmatpush1.xpose.msra.mxu0 0.0
  %1899 = vmatprep.subr.mxu0 0.0
  %1900 = vmatpush1.xpose.msra.mxu0 0.0
  %1901 = vmatprep.subr.mxu0 0.0
  %1902 = vmatpush1.xpose.msra.mxu0 0.0
  %1903 = vmatprep.subr.mxu0 0.0
  %1904 = vmatpush1.xpose.msra.mxu0 0.0
  %1905 = vmatprep.subr.mxu0 0.0
  %1906 = vmatpush1.xpose.msra.mxu0 0.0
  %1907 = vmatprep.subr.mxu0 0.0
  %1908 = vmatpush1.xpose.msra.mxu0 0.0
  %1909 = vmatprep.subr.mxu0 0.0
  %1910 = vmatpush1.xpose.msra.mxu0 0.0
  %1911 = vmatprep.subr.mxu0 0.0
  %1912 = vmatpush1.xpose.msra.mxu0 0.0
  %1913 = vmatprep.subr.mxu0 0.0
  %1914 = vmatpush1.xpose.msra.mxu0 0.0
  %1915 = vmatprep.subr.mxu0 0.0
  %1916 = vmatpush1.xpose.msra.mxu0 0.0
  %1917 = vmatprep.subr.mxu0 0.0
  %1918 = vmatpush1.xpose.msra.mxu0 0.0
  %1919 = vmatprep.subr.mxu0 0.0
  %1920 = vmatpush1.xpose.msra.mxu0 0.0
  %1921 = vmatprep.subr.mxu0 0.0
  %1922 = vmatpush1.xpose.msra.mxu0 0.0
  %1923 = vmatprep.subr.mxu0 0.0
  %1924 = vmatpush1.xpose.msra.mxu0 0.0
  %1925 = vmatprep.subr.mxu0 0.0
  %1926 = vmatpush1.xpose.msra.mxu0 0.0
  %1927 = vmatprep.subr.mxu0 0.0
  %1928 = vmatpush1.xpose.msra.mxu0 0.0
  %1929 = vmatprep.subr.mxu0 0.0
  %1930 = vmatpush1.xpose.msra.mxu0 0.0
  %1931 = vmatprep.subr.mxu0 0.0
  %1932 = vmatpush1.xpose.msra.mxu0 0.0
  %1933 = vmatprep.mubr.f32.mxu0 0.0
  %1934 = vmatmul.mubr.f32.gmra.mrb[0].mxu0 %v1861
  %v1935 = vpop.f32.mrb[0].mxu0
  %v1936 = vadd.f32 0.0, %v1935
  %v1937 = vpop.f32.mrb[0].mxu0
  %1938 = vmatprep.mubr.f32.mxu0 0.0
  %1939 = vmatmul.mubr.f32.gmra.mrb[0].mxu0 %v1863
  %v1940 = vpop.f32.mrb[0].mxu0
  %v1941 = vadd.f32 0.0, %v1940
  %v1942 = vpop.f32.mrb[0].mxu0
  %1943 = vdwg.mxu0
  %v1944 = vmul.f32 %v1936, 0.35355338
  %v1945 = vmul.f32 %v1941, 0.35355338
  %v1946 = vadd.f32 %v1944, %v64
  %v1947 = vadd.f32 %v1945, %v65
  %v1948 = vsel %vm262, %v1946, -inf
  %1949 = vmax.xlane.f32.xlu0 %v1948
  %v1950 = vpop.xlane.xlu0 %1949
  %v1951 = vsel %vm262, %v1947, -inf
  %1952 = vmax.xlane.f32.xlu0 %v1951
  %v1953 = vpop.xlane.xlu0 %1952
  %v1954 = vsub.f32 %v1946, %v1950
  %v1955 = vsub.f32 %v1947, %v1953
  %1958 = vrot.lane.b32.xlu0 %v1748, 16
  %v1959 = vpop.permute.xlu0 %1958
  %1960 = vrot.lane.b32.xlu0 %v1749, 16
  %v1961 = vpop.permute.xlu0 %1960
  %1966 = vrot.lane.b32.xlu0 %v1851, 32
  %v1967 = vpop.permute.xlu0 %1966
  %1968 = vrot.lane.b32.xlu0 %v1852, 32
  %v1969 = vpop.permute.xlu0 %1968
  %1974 = vrot.lane.b32.xlu0 %v1954, 48
  %v1975 = vpop.permute.xlu0 %1974
  %1976 = vrot.lane.b32.xlu0 %v1955, 48
  %v1977 = vpop.permute.xlu0 %1976
  %v1980 = vsel %vm262, %v1645, %v1959
  %v1981 = vsel %vm262, %v1646, %v1961
  %v1982 = vsel %vm24, %v1980, %v1967
  %v1983 = vsel %vm24, %v1981, %v1969
  %v1984 = vsel %vm608, %v1982, %v1975
  %v1985 = vsel %vm608, %v1983, %v1977
  %v1986 = vmul.f32 %v1984, 1.442695
  %v1987 = vpow.pop %v1986
  %v1988 = vmul.f32 %v1985, 1.442695
  %v1989 = vpow.pop %v1988
  %v1990 = vsel %vm262, %v1987, 0.0
  %1991 = vadd.xlane.f32.xlu0 %v1990
  %v1992 = vpop.xlane.xlu0 %1991
  %v1993 = vsel %vm262, %v1989, 0.0
  %1994 = vadd.xlane.f32.xlu0 %v1993
  %v1995 = vpop.xlane.xlu0 %1994
  %v1996 = vrcp.pop %v1992
  %v1997 = vrcp.pop %v1995
  %1998 = vrot.lane.b32.xlu0 %v1544, 64
  %v1999 = vpop.permute.xlu0 %1998
  %2000 = vrot.lane.b32.xlu0 %v1545, 64
  %v2001 = vpop.permute.xlu0 %2000
  %v2005 = vsel %vm262, %v1987, 0
  %v2008 = vsel %vm262, %v1989, 0
  %2010 = vmatprep.subr.mxu0 0.0
  %2011 = vmatpush1.msra.mxu0 %v1999
  %2012 = vmatprep.subr.mxu0 0.0
  %2013 = vmatpush1.msra.mxu0 %v2001
  %2014 = vmatprep.subr.mxu0 0.0
  %2015 = vmatpush1.msra.mxu0 0.0
  %2016 = vmatprep.subr.mxu0 0.0
  %2017 = vmatpush1.msra.mxu0 0.0
  %2018 = vmatprep.subr.mxu0 0.0
  %2019 = vmatpush1.msra.mxu0 0.0
  %2020 = vmatprep.subr.mxu0 0.0
  %2021 = vmatpush1.msra.mxu0 0.0
  %2022 = vmatprep.subr.mxu0 0.0
  %2023 = vmatpush1.msra.mxu0 0.0
  %2024 = vmatprep.subr.mxu0 0.0
  %2025 = vmatpush1.msra.mxu0 0.0
  %2026 = vmatprep.subr.mxu0 0.0
  %2027 = vmatpush1.msra.mxu0 0.0
  %2028 = vmatprep.subr.mxu0 0.0
  %2029 = vmatpush1.msra.mxu0 0.0
  %2030 = vmatprep.subr.mxu0 0.0
  %2031 = vmatpush1.msra.mxu0 0.0
  %2032 = vmatprep.subr.mxu0 0.0
  %2033 = vmatpush1.msra.mxu0 0.0
  %2034 = vmatprep.subr.mxu0 0.0
  %2035 = vmatpush1.msra.mxu0 0.0
  %2036 = vmatprep.subr.mxu0 0.0
  %2037 = vmatpush1.msra.mxu0 0.0
  %2038 = vmatprep.subr.mxu0 0.0
  %2039 = vmatpush1.msra.mxu0 0.0
  %2040 = vmatprep.subr.mxu0 0.0
  %2041 = vmatpush1.msra.mxu0 0.0
  %2042 = vmatprep.subr.mxu0 0.0
  %2043 = vmatpush1.msra.mxu0 0.0
  %2044 = vmatprep.subr.mxu0 0.0
  %2045 = vmatpush1.msra.mxu0 0.0
  %2046 = vmatprep.subr.mxu0 0.0
  %2047 = vmatpush1.msra.mxu0 0.0
  %2048 = vmatprep.subr.mxu0 0.0
  %2049 = vmatpush1.msra.mxu0 0.0
  %2050 = vmatprep.subr.mxu0 0.0
  %2051 = vmatpush1.msra.mxu0 0.0
  %2052 = vmatprep.subr.mxu0 0.0
  %2053 = vmatpush1.msra.mxu0 0.0
  %2054 = vmatprep.subr.mxu0 0.0
  %2055 = vmatpush1.msra.mxu0 0.0
  %2056 = vmatprep.subr.mxu0 0.0
  %2057 = vmatpush1.msra.mxu0 0.0
  %2058 = vmatprep.subr.mxu0 0.0
  %2059 = vmatpush1.msra.mxu0 0.0
  %2060 = vmatprep.subr.mxu0 0.0
  %2061 = vmatpush1.msra.mxu0 0.0
  %2062 = vmatprep.subr.mxu0 0.0
  %2063 = vmatpush1.msra.mxu0 0.0
  %2064 = vmatprep.subr.mxu0 0.0
  %2065 = vmatpush1.msra.mxu0 0.0
  %2066 = vmatprep.subr.mxu0 0.0
  %2067 = vmatpush1.msra.mxu0 0.0
  %2068 = vmatprep.subr.mxu0 0.0
  %2069 = vmatpush1.msra.mxu0 0.0
  %2070 = vmatprep.subr.mxu0 0.0
  %2071 = vmatpush1.msra.mxu0 0.0
  %2072 = vmatprep.subr.mxu0 0.0
  %2073 = vmatpush1.msra.mxu0 0.0
  %2074 = vmatprep.mubr.f32.mxu0 0.0
  %2075 = vmatmul.mubr.f32.gmra.mrb[0].mxu0 %v2005
  %v2076 = vpop.f32.mrb[0].mxu0
  %v2077 = vadd.f32 0.0, %v2076
  %v2078 = vpop.f32.mrb[0].mxu0
  %2079 = vmatprep.mubr.f32.mxu0 0.0
  %2080 = vmatmul.mubr.f32.gmra.mrb[0].mxu0 %v2008
  %v2081 = vpop.f32.mrb[0].mxu0
  %v2082 = vadd.f32 0.0, %v2081
  %v2083 = vpop.f32.mrb[0].mxu0
  %2084 = vdwg.mxu0
  %v2085 = vmul.f32 %v2077, %v1996
  %v2086 = vmul.f32 %v2082, %v1997
  %2087 = vrot.lane.b32.xlu0 %v1987, 112
  %v2088 = vpop.permute.xlu0 %2087
  %2089 = vrot.lane.b32.xlu0 %v1989, 112
  %v2090 = vpop.permute.xlu0 %2089
  %v2093 = vsel %vm262, %v2088, 0.0
  %2094 = vadd.xlane.f32.xlu0 %v2093
  %v2095 = vpop.xlane.xlu0 %2094
  %v2096 = vsel %vm262, %v2090, 0.0
  %2097 = vadd.xlane.f32.xlu0 %v2096
  %v2098 = vpop.xlane.xlu0 %2097
  %v2099 = vrcp.pop %v2095
  %v2100 = vrcp.pop %v2098
  %2101 = vrot.lane.b32.xlu0 %v1544, 56
  %v2102 = vpop.permute.xlu0 %2101
  %2103 = vrot.lane.b32.xlu0 %v1545, 56
  %v2104 = vpop.permute.xlu0 %2103
  %v2107 = vsel %vm262, %v2088, 0
  %v2109 = vsel %vm262, %v2090, 0
  %2111 = vmatprep.subr.mxu0 0.0
  %2112 = vmatpush1.msra.mxu0 %v2102
  %2113 = vmatprep.subr.mxu0 0.0
  %2114 = vmatpush1.msra.mxu0 %v2104
  %2115 = vmatprep.subr.mxu0 0.0
  %2116 = vmatpush1.msra.mxu0 0.0
  %2117 = vmatprep.subr.mxu0 0.0
  %2118 = vmatpush1.msra.mxu0 0.0
  %2119 = vmatprep.subr.mxu0 0.0
  %2120 = vmatpush1.msra.mxu0 0.0
  %2121 = vmatprep.subr.mxu0 0.0
  %2122 = vmatpush1.msra.mxu0 0.0
  %2123 = vmatprep.subr.mxu0 0.0
  %2124 = vmatpush1.msra.mxu0 0.0
  %2125 = vmatprep.subr.mxu0 0.0
  %2126 = vmatpush1.msra.mxu0 0.0
  %2127 = vmatprep.subr.mxu0 0.0
  %2128 = vmatpush1.msra.mxu0 0.0
  %2129 = vmatprep.subr.mxu0 0.0
  %2130 = vmatpush1.msra.mxu0 0.0
  %2131 = vmatprep.subr.mxu0 0.0
  %2132 = vmatpush1.msra.mxu0 0.0
  %2133 = vmatprep.subr.mxu0 0.0
  %2134 = vmatpush1.msra.mxu0 0.0
  %2135 = vmatprep.subr.mxu0 0.0
  %2136 = vmatpush1.msra.mxu0 0.0
  %2137 = vmatprep.subr.mxu0 0.0
  %2138 = vmatpush1.msra.mxu0 0.0
  %2139 = vmatprep.subr.mxu0 0.0
  %2140 = vmatpush1.msra.mxu0 0.0
  %2141 = vmatprep.subr.mxu0 0.0
  %2142 = vmatpush1.msra.mxu0 0.0
  %2143 = vmatprep.subr.mxu0 0.0
  %2144 = vmatpush1.msra.mxu0 0.0
  %2145 = vmatprep.subr.mxu0 0.0
  %2146 = vmatpush1.msra.mxu0 0.0
  %2147 = vmatprep.subr.mxu0 0.0
  %2148 = vmatpush1.msra.mxu0 0.0
  %2149 = vmatprep.subr.mxu0 0.0
  %2150 = vmatpush1.msra.mxu0 0.0
  %2151 = vmatprep.subr.mxu0 0.0
  %2152 = vmatpush1.msra.mxu0 0.0
  %2153 = vmatprep.subr.mxu0 0.0
  %2154 = vmatpush1.msra.mxu0 0.0
  %2155 = vmatprep.subr.mxu0 0.0
  %2156 = vmatpush1.msra.mxu0 0.0
  %2157 = vmatprep.subr.mxu0 0.0
  %2158 = vmatpush1.msra.mxu0 0.0
  %2159 = vmatprep.subr.mxu0 0.0
  %2160 = vmatpush1.msra.mxu0 0.0
  %2161 = vmatprep.subr.mxu0 0.0
  %2162 = vmatpush1.msra.mxu0 0.0
  %2163 = vmatprep.subr.mxu0 0.0
  %2164 = vmatpush1.msra.mxu0 0.0
  %2165 = vmatprep.subr.mxu0 0.0
  %2166 = vmatpush1.msra.mxu0 0.0
  %2167 = vmatprep.subr.mxu0 0.0
  %2168 = vmatpush1.msra.mxu0 0.0
  %2169 = vmatprep.subr.mxu0 0.0
  %2170 = vmatpush1.msra.mxu0 0.0
  %2171 = vmatprep.subr.mxu0 0.0
  %2172 = vmatpush1.msra.mxu0 0.0
  %2173 = vmatprep.subr.mxu0 0.0
  %2174 = vmatpush1.msra.mxu0 0.0
  %2175 = vmatprep.mubr.f32.mxu0 0.0
  %2176 = vmatmul.mubr.f32.gmra.mrb[0].mxu0 %v2107
  %v2177 = vpop.f32.mrb[0].mxu0
  %v2178 = vadd.f32 0.0, %v2177
  %v2179 = vpop.f32.mrb[0].mxu0
  %2180 = vmatprep.mubr.f32.mxu0 0.0
  %2181 = vmatmul.mubr.f32.gmra.mrb[0].mxu0 %v2109
  %v2182 = vpop.f32.mrb[0].mxu0
  %v2183 = vadd.f32 0.0, %v2182
  %v2184 = vpop.f32.mrb[0].mxu0
  %2185 = vdwg.mxu0
  %v2186 = vmul.f32 %v2178, %v2099
  %v2187 = vmul.f32 %v2183, %v2100
  %2188 = vrot.lane.b32.xlu0 %v1987, 96
  %v2189 = vpop.permute.xlu0 %2188
  %2190 = vrot.lane.b32.xlu0 %v1989, 96
  %v2191 = vpop.permute.xlu0 %2190
  %v2194 = vsel %vm262, %v2189, 0.0
  %2195 = vadd.xlane.f32.xlu0 %v2194
  %v2196 = vpop.xlane.xlu0 %2195
  %v2197 = vsel %vm262, %v2191, 0.0
  %2198 = vadd.xlane.f32.xlu0 %v2197
  %v2199 = vpop.xlane.xlu0 %2198
  %v2200 = vrcp.pop %v2196
  %v2201 = vrcp.pop %v2199
  %2202 = vrot.lane.b32.xlu0 %v1544, 48
  %v2203 = vpop.permute.xlu0 %2202
  %2204 = vrot.lane.b32.xlu0 %v1545, 48
  %v2205 = vpop.permute.xlu0 %2204
  %v2208 = vsel %vm262, %v2189, 0
  %v2210 = vsel %vm262, %v2191, 0
  %2212 = vmatprep.subr.mxu0 0.0
  %2213 = vmatpush1.msra.mxu0 %v2203
  %2214 = vmatprep.subr.mxu0 0.0
  %2215 = vmatpush1.msra.mxu0 %v2205
  %2216 = vmatprep.subr.mxu0 0.0
  %2217 = vmatpush1.msra.mxu0 0.0
  %2218 = vmatprep.subr.mxu0 0.0
  %2219 = vmatpush1.msra.mxu0 0.0
  %2220 = vmatprep.subr.mxu0 0.0
  %2221 = vmatpush1.msra.mxu0 0.0
  %2222 = vmatprep.subr.mxu0 0.0
  %2223 = vmatpush1.msra.mxu0 0.0
  %2224 = vmatprep.subr.mxu0 0.0
  %2225 = vmatpush1.msra.mxu0 0.0
  %2226 = vmatprep.subr.mxu0 0.0
  %2227 = vmatpush1.msra.mxu0 0.0
  %2228 = vmatprep.subr.mxu0 0.0
  %2229 = vmatpush1.msra.mxu0 0.0
  %2230 = vmatprep.subr.mxu0 0.0
  %2231 = vmatpush1.msra.mxu0 0.0
  %2232 = vmatprep.subr.mxu0 0.0
  %2233 = vmatpush1.msra.mxu0 0.0
  %2234 = vmatprep.subr.mxu0 0.0
  %2235 = vmatpush1.msra.mxu0 0.0
  %2236 = vmatprep.subr.mxu0 0.0
  %2237 = vmatpush1.msra.mxu0 0.0
  %2238 = vmatprep.subr.mxu0 0.0
  %2239 = vmatpush1.msra.mxu0 0.0
  %2240 = vmatprep.subr.mxu0 0.0
  %2241 = vmatpush1.msra.mxu0 0.0
  %2242 = vmatprep.subr.mxu0 0.0
  %2243 = vmatpush1.msra.mxu0 0.0
  %2244 = vmatprep.subr.mxu0 0.0
  %2245 = vmatpush1.msra.mxu0 0.0
  %2246 = vmatprep.subr.mxu0 0.0
  %2247 = vmatpush1.msra.mxu0 0.0
  %2248 = vmatprep.subr.mxu0 0.0
  %2249 = vmatpush1.msra.mxu0 0.0
  %2250 = vmatprep.subr.mxu0 0.0
  %2251 = vmatpush1.msra.mxu0 0.0
  %2252 = vmatprep.subr.mxu0 0.0
  %2253 = vmatpush1.msra.mxu0 0.0
  %2254 = vmatprep.subr.mxu0 0.0
  %2255 = vmatpush1.msra.mxu0 0.0
  %2256 = vmatprep.subr.mxu0 0.0
  %2257 = vmatpush1.msra.mxu0 0.0
  %2258 = vmatprep.subr.mxu0 0.0
  %2259 = vmatpush1.msra.mxu0 0.0
  %2260 = vmatprep.subr.mxu0 0.0
  %2261 = vmatpush1.msra.mxu0 0.0
  %2262 = vmatprep.subr.mxu0 0.0
  %2263 = vmatpush1.msra.mxu0 0.0
  %2264 = vmatprep.subr.mxu0 0.0
  %2265 = vmatpush1.msra.mxu0 0.0
  %2266 = vmatprep.subr.mxu0 0.0
  %2267 = vmatpush1.msra.mxu0 0.0
  %2268 = vmatprep.subr.mxu0 0.0
  %2269 = vmatpush1.msra.mxu0 0.0
  %2270 = vmatprep.subr.mxu0 0.0
  %2271 = vmatpush1.msra.mxu0 0.0
  %2272 = vmatprep.subr.mxu0 0.0
  %2273 = vmatpush1.msra.mxu0 0.0
  %2274 = vmatprep.subr.mxu0 0.0
  %2275 = vmatpush1.msra.mxu0 0.0
  %2276 = vmatprep.mubr.f32.mxu0 0.0
  %2277 = vmatmul.mubr.f32.gmra.mrb[0].mxu0 %v2208
  %v2278 = vpop.f32.mrb[0].mxu0
  %v2279 = vadd.f32 0.0, %v2278
  %v2280 = vpop.f32.mrb[0].mxu0
  %2281 = vmatprep.mubr.f32.mxu0 0.0
  %2282 = vmatmul.mubr.f32.gmra.mrb[0].mxu0 %v2210
  %v2283 = vpop.f32.mrb[0].mxu0
  %v2284 = vadd.f32 0.0, %v2283
  %v2285 = vpop.f32.mrb[0].mxu0
  %2286 = vdwg.mxu0
  %v2287 = vmul.f32 %v2279, %v2200
  %v2288 = vmul.f32 %v2284, %v2201
  %2289 = vrot.lane.b32.xlu0 %v1987, 80
  %v2290 = vpop.permute.xlu0 %2289
  %2291 = vrot.lane.b32.xlu0 %v1989, 80
  %v2292 = vpop.permute.xlu0 %2291
  %v2295 = vsel %vm262, %v2290, 0.0
  %2296 = vadd.xlane.f32.xlu0 %v2295
  %v2297 = vpop.xlane.xlu0 %2296
  %v2298 = vsel %vm262, %v2292, 0.0
  %2299 = vadd.xlane.f32.xlu0 %v2298
  %v2300 = vpop.xlane.xlu0 %2299
  %v2301 = vrcp.pop %v2297
  %v2302 = vrcp.pop %v2300
  %2303 = vrot.lane.b32.xlu0 %v1544, 40
  %v2304 = vpop.permute.xlu0 %2303
  %2305 = vrot.lane.b32.xlu0 %v1545, 40
  %v2306 = vpop.permute.xlu0 %2305
  %v2309 = vsel %vm262, %v2290, 0
  %v2311 = vsel %vm262, %v2292, 0
  %2313 = vmatprep.subr.mxu0 0.0
  %2314 = vmatpush1.msra.mxu0 %v2304
  %2315 = vmatprep.subr.mxu0 0.0
  %2316 = vmatpush1.msra.mxu0 %v2306
  %2317 = vmatprep.subr.mxu0 0.0
  %2318 = vmatpush1.msra.mxu0 0.0
  %2319 = vmatprep.subr.mxu0 0.0
  %2320 = vmatpush1.msra.mxu0 0.0
  %2321 = vmatprep.subr.mxu0 0.0
  %2322 = vmatpush1.msra.mxu0 0.0
  %2323 = vmatprep.subr.mxu0 0.0
  %2324 = vmatpush1.msra.mxu0 0.0
  %2325 = vmatprep.subr.mxu0 0.0
  %2326 = vmatpush1.msra.mxu0 0.0
  %2327 = vmatprep.subr.mxu0 0.0
  %2328 = vmatpush1.msra.mxu0 0.0
  %2329 = vmatprep.subr.mxu0 0.0
  %2330 = vmatpush1.msra.mxu0 0.0
  %2331 = vmatprep.subr.mxu0 0.0
  %2332 = vmatpush1.msra.mxu0 0.0
  %2333 = vmatprep.subr.mxu0 0.0
  %2334 = vmatpush1.msra.mxu0 0.0
  %2335 = vmatprep.subr.mxu0 0.0
  %2336 = vmatpush1.msra.mxu0 0.0
  %2337 = vmatprep.subr.mxu0 0.0
  %2338 = vmatpush1.msra.mxu0 0.0
  %2339 = vmatprep.subr.mxu0 0.0
  %2340 = vmatpush1.msra.mxu0 0.0
  %2341 = vmatprep.subr.mxu0 0.0
  %2342 = vmatpush1.msra.mxu0 0.0
  %2343 = vmatprep.subr.mxu0 0.0
  %2344 = vmatpush1.msra.mxu0 0.0
  %2345 = vmatprep.subr.mxu0 0.0
  %2346 = vmatpush1.msra.mxu0 0.0
  %2347 = vmatprep.subr.mxu0 0.0
  %2348 = vmatpush1.msra.mxu0 0.0
  %2349 = vmatprep.subr.mxu0 0.0
  %2350 = vmatpush1.msra.mxu0 0.0
  %2351 = vmatprep.subr.mxu0 0.0
  %2352 = vmatpush1.msra.mxu0 0.0
  %2353 = vmatprep.subr.mxu0 0.0
  %2354 = vmatpush1.msra.mxu0 0.0
  %2355 = vmatprep.subr.mxu0 0.0
  %2356 = vmatpush1.msra.mxu0 0.0
  %2357 = vmatprep.subr.mxu0 0.0
  %2358 = vmatpush1.msra.mxu0 0.0
  %2359 = vmatprep.subr.mxu0 0.0
  %2360 = vmatpush1.msra.mxu0 0.0
  %2361 = vmatprep.subr.mxu0 0.0
  %2362 = vmatpush1.msra.mxu0 0.0
  %2363 = vmatprep.subr.mxu0 0.0
  %2364 = vmatpush1.msra.mxu0 0.0
  %2365 = vmatprep.subr.mxu0 0.0
  %2366 = vmatpush1.msra.mxu0 0.0
  %2367 = vmatprep.subr.mxu0 0.0
  %2368 = vmatpush1.msra.mxu0 0.0
  %2369 = vmatprep.subr.mxu0 0.0
  %2370 = vmatpush1.msra.mxu0 0.0
  %2371 = vmatprep.subr.mxu0 0.0
  %2372 = vmatpush1.msra.mxu0 0.0
  %2373 = vmatprep.subr.mxu0 0.0
  %2374 = vmatpush1.msra.mxu0 0.0
  %2375 = vmatprep.subr.mxu0 0.0
  %2376 = vmatpush1.msra.mxu0 0.0
  %2377 = vmatprep.mubr.f32.mxu0 0.0
  %2378 = vmatmul.mubr.f32.gmra.mrb[0].mxu0 %v2309
  %v2379 = vpop.f32.mrb[0].mxu0
  %v2380 = vadd.f32 0.0, %v2379
  %v2381 = vpop.f32.mrb[0].mxu0
  %2382 = vmatprep.mubr.f32.mxu0 0.0
  %2383 = vmatmul.mubr.f32.gmra.mrb[0].mxu0 %v2311
  %v2384 = vpop.f32.mrb[0].mxu0
  %v2385 = vadd.f32 0.0, %v2384
  %v2386 = vpop.f32.mrb[0].mxu0
  %2387 = vdwg.mxu0
  %v2388 = vmul.f32 %v2380, %v2301
  %v2389 = vmul.f32 %v2385, %v2302
  %2392 = vrot.lane.b32.xlu0 %v2186, 8
  %v2393 = vpop.permute.xlu0 %2392
  %2394 = vrot.lane.b32.xlu0 %v2187, 8
  %v2395 = vpop.permute.xlu0 %2394
  %2400 = vrot.lane.b32.xlu0 %v2287, 16
  %v2401 = vpop.permute.xlu0 %2400
  %2402 = vrot.lane.b32.xlu0 %v2288, 16
  %v2403 = vpop.permute.xlu0 %2402
  %2408 = vrot.lane.b32.xlu0 %v2388, 24
  %v2409 = vpop.permute.xlu0 %2408
  %2410 = vrot.lane.b32.xlu0 %v2389, 24
  %v2411 = vpop.permute.xlu0 %2410
  %v2414 = vsel %vm174, %v2085, %v2393
  %v2415 = vsel %vm174, %v2086, %v2395
  %v2416 = vsel %vm262, %v2414, %v2401
  %v2417 = vsel %vm262, %v2415, %v2403
  %v2418 = vsel %vm1043, %v2416, %v2409
  %v2419 = vsel %vm1043, %v2417, %v2411
  %v2420 = vld [vmem:[%s1452] sm:$0xff]
  %v2421 = vld [vmem:[%s1452 + $0x10] sm:$0xff]
  %v2422 = vld [vmem:[%s1452 + $0x20] sm:$0xff]
  %v2423 = vld [vmem:[%s1452 + $0x30] sm:$0xff]
  %v2424 = vlaneseq
  %v2425 = vshrl.u32 %v2424, 7
  %v2426 = vsub.s32 0, %v2425
  %v2427 = vrot.slane %v1445, %v2426
  %2432 = vrot.lane.b32.xlu0 %v2420, 32
  %v2433 = vpop.permute.xlu0 %2432
  %2434 = vrot.lane.b32.xlu0 %v2421, 32
  %v2435 = vpop.permute.xlu0 %2434
  %2436 = vrot.lane.b32.xlu0 %v2422, 32
  %v2437 = vpop.permute.xlu0 %2436
  %2438 = vrot.lane.b32.xlu0 %v2423, 32
  %v2439 = vpop.permute.xlu0 %2438
  %v2445 = vsel %vm24, %v2418, 0
  %v2448 = vsel %vm24, %v2419, 0
  %2450 = vmatprep.subr.mxu0 0.0
  %2451 = vmatpush1.msra.mxu0 %v2433
  %2452 = vmatprep.subr.mxu0 0.0
  %2453 = vmatpush1.msra.mxu0 %v2435
  %2454 = vmatprep.subr.mxu0 0.0
  %2455 = vmatpush1.msra.mxu0 %v2437
  %2456 = vmatprep.subr.mxu0 0.0
  %2457 = vmatpush1.msra.mxu0 %v2439
  %2458 = vmatprep.subr.mxu0 0.0
  %2459 = vmatpush1.msra.mxu0 0.0
  %2460 = vmatprep.subr.mxu0 0.0
  %2461 = vmatpush1.msra.mxu0 0.0
  %2462 = vmatprep.subr.mxu0 0.0
  %2463 = vmatpush1.msra.mxu0 0.0
  %2464 = vmatprep.subr.mxu0 0.0
  %2465 = vmatpush1.msra.mxu0 0.0
  %2466 = vmatprep.subr.mxu0 0.0
  %2467 = vmatpush1.msra.mxu0 0.0
  %2468 = vmatprep.subr.mxu0 0.0
  %2469 = vmatpush1.msra.mxu0 0.0
  %2470 = vmatprep.subr.mxu0 0.0
  %2471 = vmatpush1.msra.mxu0 0.0
  %2472 = vmatprep.subr.mxu0 0.0
  %2473 = vmatpush1.msra.mxu0 0.0
  %2474 = vmatprep.subr.mxu0 0.0
  %2475 = vmatpush1.msra.mxu0 0.0
  %2476 = vmatprep.subr.mxu0 0.0
  %2477 = vmatpush1.msra.mxu0 0.0
  %2478 = vmatprep.subr.mxu0 0.0
  %2479 = vmatpush1.msra.mxu0 0.0
  %2480 = vmatprep.subr.mxu0 0.0
  %2481 = vmatpush1.msra.mxu0 0.0
  %2482 = vmatprep.subr.mxu0 0.0
  %2483 = vmatpush1.msra.mxu0 0.0
  %2484 = vmatprep.subr.mxu0 0.0
  %2485 = vmatpush1.msra.mxu0 0.0
  %2486 = vmatprep.subr.mxu0 0.0
  %2487 = vmatpush1.msra.mxu0 0.0
  %2488 = vmatprep.subr.mxu0 0.0
  %2489 = vmatpush1.msra.mxu0 0.0
  %2490 = vmatprep.subr.mxu0 0.0
  %2491 = vmatpush1.msra.mxu0 0.0
  %2492 = vmatprep.subr.mxu0 0.0
  %2493 = vmatpush1.msra.mxu0 0.0
  %2494 = vmatprep.subr.mxu0 0.0
  %2495 = vmatpush1.msra.mxu0 0.0
  %2496 = vmatprep.subr.mxu0 0.0
  %2497 = vmatpush1.msra.mxu0 0.0
  %2498 = vmatprep.subr.mxu0 0.0
  %2499 = vmatpush1.msra.mxu0 0.0
  %2500 = vmatprep.subr.mxu0 0.0
  %2501 = vmatpush1.msra.mxu0 0.0
  %2502 = vmatprep.subr.mxu0 0.0
  %2503 = vmatpush1.msra.mxu0 0.0
  %2504 = vmatprep.subr.mxu0 0.0
  %2505 = vmatpush1.msra.mxu0 0.0
  %2506 = vmatprep.subr.mxu0 0.0
  %2507 = vmatpush1.msra.mxu0 0.0
  %2508 = vmatprep.subr.mxu0 0.0
  %2509 = vmatpush1.msra.mxu0 0.0
  %2510 = vmatprep.subr.mxu0 0.0
  %2511 = vmatpush1.msra.mxu0 0.0
  %2512 = vmatprep.subr.mxu0 0.0
  %2513 = vmatpush1.msra.mxu0 0.0
  %2514 = vmatprep.mubr.f32.mxu0 0.0
  %2515 = vmatmul.mubr.f32.gmra.mrb[0].mxu0 %v2445
  %v2516 = vpop.f32.mrb[0].mxu0
  %v2517 = vadd.f32 %v2427, %v2516
  %v2518 = vpop.f32.mrb[0].mxu0
  %2519 = vmatprep.mubr.f32.mxu0 0.0
  %2520 = vmatmul.mubr.f32.gmra.mrb[0].mxu0 %v2448
  %v2521 = vpop.f32.mrb[0].mxu0
  %v2522 = vadd.f32 %v2427, %v2521
  %v2523 = vpop.f32.mrb[0].mxu0
  %2524 = vdwg.mxu0
  %v2525 = vadd.f32 %v2517, %v1442
  %v2526 = vadd.f32 %v2522, %v1443
  %v2527 = vsel %vm24, %v2525, 0.0
  %2528 = vadd.xlane.f32.xlu0 %v2527
  %v2529 = vpop.xlane.xlu0 %2528
  %v2530 = vsel %vm24, %v2526, 0.0
  %2531 = vadd.xlane.f32.xlu0 %v2530
  %v2532 = vpop.xlane.xlu0 %2531
  %v2533 = vmul.f32 %v2529, %v31
  %v2534 = vmul.f32 %v2532, %v31
  %v2535 = vsub.f32 %v2525, %v2533
  %v2536 = vsub.f32 %v2526, %v2534
  %v2537 = vmul.f32 %v2535, %v2535
  %v2538 = vmul.f32 %v2536, %v2536
  %v2539 = vsel %vm24, %v2537, 0.0
  %2540 = vadd.xlane.f32.xlu0 %v2539
  %v2541 = vpop.xlane.xlu0 %2540
  %v2542 = vsel %vm24, %v2538, 0.0
  %2543 = vadd.xlane.f32.xlu0 %v2542
  %v2544 = vpop.xlane.xlu0 %2543
  %v2545 = vmul.f32 %v2541, %v31
  %v2546 = vmul.f32 %v2544, %v31
  %v2547 = vadd.f32 %v2545, 1e-05
  %v2548 = vadd.f32 %v2546, 1e-05
  %v2549 = vrsqrt.pop %v2547
  %v2550 = vrsqrt.pop %v2548
  %v2551 = vmul.f32 %v2535, %v2549
  %v2552 = vmul.f32 %v2536, %v2550
  %v2553 = vlaneseq
  %v2554 = vshrl.u32 %v2553, 7
  %v2555 = vsub.s32 0, %v2554
  %v2556 = vrot.slane %v1446, %v2555
  %v2557 = vmul.f32 %v2551, %v2556
  %v2558 = vmul.f32 %v2552, %v2556
  %v2559 = vlaneseq
  %v2560 = vshrl.u32 %v2559, 7
  %v2561 = vsub.s32 0, %v2560
  %v2562 = vrot.slane %v1447, %v2561
  %v2563 = vadd.f32 %v2557, %v2562
  %v2564 = vadd.f32 %v2558, %v2562
  %v2565 = vld [vmem:[%s1452 + $0x8] sm:$0xff]
  %v2566 = vld [vmem:[%s1452 + $0x18] sm:$0xff]
  %v2567 = vld [vmem:[%s1452 + $0x28] sm:$0xff]
  %v2568 = vld [vmem:[%s1452 + $0x38] sm:$0xff]
  %v2569 = vlaneseq
  %v2570 = vshrl.u32 %v2569, 7
  %v2571 = vsub.s32 0, %v2570
  %v2572 = vrot.slane %v1448, %v2571
  %v2574 = vsel %vm24, %v2563, 0
  %v2577 = vsel %vm24, %v2564, 0
  %2579 = vmatprep.subr.mxu0 0.0
  %2580 = vmatpush1.msra.mxu0 %v2565
  %2581 = vmatprep.subr.mxu0 0.0
  %2582 = vmatpush1.msra.mxu0 %v2566
  %2583 = vmatprep.subr.mxu0 0.0
  %2584 = vmatpush1.msra.mxu0 %v2567
  %2585 = vmatprep.subr.mxu0 0.0
  %2586 = vmatpush1.msra.mxu0 %v2568
  %2587 = vmatprep.subr.mxu0 0.0
  %2588 = vmatpush1.msra.mxu0 0.0
  %2589 = vmatprep.subr.mxu0 0.0
  %2590 = vmatpush1.msra.mxu0 0.0
  %2591 = vmatprep.subr.mxu0 0.0
  %2592 = vmatpush1.msra.mxu0 0.0
  %2593 = vmatprep.subr.mxu0 0.0
  %2594 = vmatpush1.msra.mxu0 0.0
  %2595 = vmatprep.subr.mxu0 0.0
  %2596 = vmatpush1.msra.mxu0 0.0
  %2597 = vmatprep.subr.mxu0 0.0
  %2598 = vmatpush1.msra.mxu0 0.0
  %2599 = vmatprep.subr.mxu0 0.0
  %2600 = vmatpush1.msra.mxu0 0.0
  %2601 = vmatprep.subr.mxu0 0.0
  %2602 = vmatpush1.msra.mxu0 0.0
  %2603 = vmatprep.subr.mxu0 0.0
  %2604 = vmatpush1.msra.mxu0 0.0
  %2605 = vmatprep.subr.mxu0 0.0
  %2606 = vmatpush1.msra.mxu0 0.0
  %2607 = vmatprep.subr.mxu0 0.0
  %2608 = vmatpush1.msra.mxu0 0.0
  %2609 = vmatprep.subr.mxu0 0.0
  %2610 = vmatpush1.msra.mxu0 0.0
  %2611 = vmatprep.subr.mxu0 0.0
  %2612 = vmatpush1.msra.mxu0 0.0
  %2613 = vmatprep.subr.mxu0 0.0
  %2614 = vmatpush1.msra.mxu0 0.0
  %2615 = vmatprep.subr.mxu0 0.0
  %2616 = vmatpush1.msra.mxu0 0.0
  %2617 = vmatprep.subr.mxu0 0.0
  %2618 = vmatpush1.msra.mxu0 0.0
  %2619 = vmatprep.subr.mxu0 0.0
  %2620 = vmatpush1.msra.mxu0 0.0
  %2621 = vmatprep.subr.mxu0 0.0
  %2622 = vmatpush1.msra.mxu0 0.0
  %2623 = vmatprep.subr.mxu0 0.0
  %2624 = vmatpush1.msra.mxu0 0.0
  %2625 = vmatprep.subr.mxu0 0.0
  %2626 = vmatpush1.msra.mxu0 0.0
  %2627 = vmatprep.subr.mxu0 0.0
  %2628 = vmatpush1.msra.mxu0 0.0
  %2629 = vmatprep.subr.mxu0 0.0
  %2630 = vmatpush1.msra.mxu0 0.0
  %2631 = vmatprep.subr.mxu0 0.0
  %2632 = vmatpush1.msra.mxu0 0.0
  %2633 = vmatprep.subr.mxu0 0.0
  %2634 = vmatpush1.msra.mxu0 0.0
  %2635 = vmatprep.subr.mxu0 0.0
  %2636 = vmatpush1.msra.mxu0 0.0
  %2637 = vmatprep.subr.mxu0 0.0
  %2638 = vmatpush1.msra.mxu0 0.0
  %2639 = vmatprep.subr.mxu0 0.0
  %2640 = vmatpush1.msra.mxu0 0.0
  %2641 = vmatprep.subr.mxu0 0.0
  %2642 = vmatpush1.msra.mxu0 0.0
  %2643 = vmatprep.mubr.f32.mxu0 0.0
  %2644 = vmatmul.mubr.f32.gmra.mrb[0].mxu0 %v2574
  %v2645 = vpop.f32.mrb[0].mxu0
  %v2646 = vadd.f32 %v2572, %v2645
  %v2647 = vpop.f32.mrb[0].mxu0
  %2648 = vmatprep.mubr.f32.mxu0 0.0
  %2649 = vmatmul.mubr.f32.gmra.mrb[0].mxu0 %v2577
  %v2650 = vpop.f32.mrb[0].mxu0
  %v2651 = vadd.f32 %v2572, %v2650
  %v2652 = vpop.f32.mrb[0].mxu0
  %2653 = vdwg.mxu0
  %v2654 = vmul.f32 %v2646, %v2646
  %v2655 = vmul.f32 %v2651, %v2651
  %v2656 = vmul.f32 %v2646, %v2654
  %v2657 = vmul.f32 %v2651, %v2655
  %v2658 = vmul.f32 %v2656, 0.044715
  %v2659 = vmul.f32 %v2657, 0.044715
  %v2660 = vadd.f32 %v2646, %v2658
  %v2661 = vadd.f32 %v2651, %v2659
  %v2662 = vmul.f32 %v2660, 0.7978846
  %v2663 = vmul.f32 %v2661, 0.7978846
  %v2664 = vtanh.pop %v2662
  %v2665 = vtanh.pop %v2663
  %v2666 = vadd.f32 %v2664, 1.0
  %v2667 = vadd.f32 %v2665, 1.0
  %v2668 = vmul.f32 %v2666, 0.5
  %v2669 = vmul.f32 %v2667, 0.5
  %v2670 = vmul.f32 %v2646, %v2668
  %v2671 = vmul.f32 %v2651, %v2669
  %v2672 = vlaneseq
  %v2673 = vshrl.u32 %v2672, 7
  %v2674 = vsub.s32 0, %v2673
  %v2675 = vrot.slane %v1449, %v2674
  %2680 = vrot.lane.b32.xlu0 %v2565, 64
  %v2681 = vpop.permute.xlu0 %2680
  %2682 = vrot.lane.b32.xlu0 %v2566, 64
  %v2683 = vpop.permute.xlu0 %2682
  %2684 = vrot.lane.b32.xlu0 %v2567, 64
  %v2685 = vpop.permute.xlu0 %2684
  %2686 = vrot.lane.b32.xlu0 %v2568, 64
  %v2687 = vpop.permute.xlu0 %2686
  %v2689 = vsel %vm1314, %v2670, 0
  %v2692 = vsel %vm1314, %v2671, 0
  %v2694 = vsel %vm1314, %v2681, 0
  %v2696 = vsel %vm1314, %v2683, 0
  %v2698 = vsel %vm1314, %v2685, 0
  %v2700 = vsel %vm1314, %v2687, 0
  %2702 = vmatprep.subr.mxu0 0.0
  %2703 = vmatpush1.xpose.msra.mxu0 %v2694
  %2704 = vmatprep.subr.mxu0 0.0
  %2705 = vmatpush1.xpose.msra.mxu0 %v2696
  %2706 = vmatprep.subr.mxu0 0.0
  %2707 = vmatpush1.xpose.msra.mxu0 %v2698
  %2708 = vmatprep.subr.mxu0 0.0
  %2709 = vmatpush1.xpose.msra.mxu0 %v2700
  %2710 = vmatprep.subr.mxu0 0.0
  %2711 = vmatpush1.xpose.msra.mxu0 0.0
  %2712 = vmatprep.subr.mxu0 0.0
  %2713 = vmatpush1.xpose.msra.mxu0 0.0
  %2714 = vmatprep.subr.mxu0 0.0
  %2715 = vmatpush1.xpose.msra.mxu0 0.0
  %2716 = vmatprep.subr.mxu0 0.0
  %2717 = vmatpush1.xpose.msra.mxu0 0.0
  %2718 = vmatprep.subr.mxu0 0.0
  %2719 = vmatpush1.xpose.msra.mxu0 0.0
  %2720 = vmatprep.subr.mxu0 0.0
  %2721 = vmatpush1.xpose.msra.mxu0 0.0
  %2722 = vmatprep.subr.mxu0 0.0
  %2723 = vmatpush1.xpose.msra.mxu0 0.0
  %2724 = vmatprep.subr.mxu0 0.0
  %2725 = vmatpush1.xpose.msra.mxu0 0.0
  %2726 = vmatprep.subr.mxu0 0.0
  %2727 = vmatpush1.xpose.msra.mxu0 0.0
  %2728 = vmatprep.subr.mxu0 0.0
  %2729 = vmatpush1.xpose.msra.mxu0 0.0
  %2730 = vmatprep.subr.mxu0 0.0
  %2731 = vmatpush1.xpose.msra.mxu0 0.0
  %2732 = vmatprep.subr.mxu0 0.0
  %2733 = vmatpush1.xpose.msra.mxu0 0.0
  %2734 = vmatprep.subr.mxu0 0.0
  %2735 = vmatpush1.xpose.msra.mxu0 0.0
  %2736 = vmatprep.subr.mxu0 0.0
  %2737 = vmatpush1.xpose.msra.mxu0 0.0
  %2738 = vmatprep.subr.mxu0 0.0
  %2739 = vmatpush1.xpose.msra.mxu0 0.0
  %2740 = vmatprep.subr.mxu0 0.0
  %2741 = vmatpush1.xpose.msra.mxu0 0.0
  %2742 = vmatprep.subr.mxu0 0.0
  %2743 = vmatpush1.xpose.msra.mxu0 0.0
  %2744 = vmatprep.subr.mxu0 0.0
  %2745 = vmatpush1.xpose.msra.mxu0 0.0
  %2746 = vmatprep.subr.mxu0 0.0
  %2747 = vmatpush1.xpose.msra.mxu0 0.0
  %2748 = vmatprep.subr.mxu0 0.0
  %2749 = vmatpush1.xpose.msra.mxu0 0.0
  %2750 = vmatprep.subr.mxu0 0.0
  %2751 = vmatpush1.xpose.msra.mxu0 0.0
  %2752 = vmatprep.subr.mxu0 0.0
  %2753 = vmatpush1.xpose.msra.mxu0 0.0
  %2754 = vmatprep.subr.mxu0 0.0
  %2755 = vmatpush1.xpose.msra.mxu0 0.0
  %2756 = vmatprep.subr.mxu0 0.0
  %2757 = vmatpush1.xpose.msra.mxu0 0.0
  %2758 = vmatprep.subr.mxu0 0.0
  %2759 = vmatpush1.xpose.msra.mxu0 0.0
  %2760 = vmatprep.subr.mxu0 0.0
  %2761 = vmatpush1.xpose.msra.mxu0 0.0
  %2762 = vmatprep.subr.mxu0 0.0
  %2763 = vmatpush1.xpose.msra.mxu0 0.0
  %2764 = vmatprep.subr.mxu0 0.0
  %2765 = vmatpush1.xpose.msra.mxu0 0.0
  %2766 = vmatprep.mubr.f32.mxu0 0.0
  %2767 = vmatmul.mubr.f32.gmra.mrb[0].mxu0 %v2689
  %v2768 = vpop.f32.mrb[0].mxu0
  %v2769 = vadd.f32 %v2675, %v2768
  %v2770 = vpop.f32.mrb[0].mxu0
  %2771 = vmatprep.mubr.f32.mxu0 0.0
  %2772 = vmatmul.mubr.f32.gmra.mrb[0].mxu0 %v2692
  %v2773 = vpop.f32.mrb[0].mxu0
  %v2774 = vadd.f32 %v2675, %v2773
  %v2775 = vpop.f32.mrb[0].mxu0
  %2776 = vdwg.mxu0
  %v2777 = vadd.f32 %v2769, %v2563
  %v2778 = vadd.f32 %v2774, %v2564
  %v2779 = vsel %vm24, %v2777, 0.0
  %2780 = vadd.xlane.f32.xlu0 %v2779
  %v2781 = vpop.xlane.xlu0 %2780
  %v2782 = vsel %vm24, %v2778, 0.0
  %2783 = vadd.xlane.f32.xlu0 %v2782
  %v2784 = vpop.xlane.xlu0 %2783
  %v2785 = vmul.f32 %v2781, %v31
  %v2786 = vmul.f32 %v2784, %v31
  %v2787 = vsub.f32 %v2777, %v2785
  %v2788 = vsub.f32 %v2778, %v2786
  %v2789 = vmul.f32 %v2787, %v2787
  %v2790 = vmul.f32 %v2788, %v2788
  %v2791 = vsel %vm24, %v2789, 0.0
  %2792 = vadd.xlane.f32.xlu0 %v2791
  %v2793 = vpop.xlane.xlu0 %2792
  %v2794 = vsel %vm24, %v2790, 0.0
  %2795 = vadd.xlane.f32.xlu0 %v2794
  %v2796 = vpop.xlane.xlu0 %2795
  %v2797 = vmul.f32 %v2793, %v31
  %v2798 = vmul.f32 %v2796, %v31
  %v2799 = vadd.f32 %v2797, 1e-05
  %v2800 = vadd.f32 %v2798, 1e-05
  %v2801 = vrsqrt.pop %v2799
  %v2802 = vrsqrt.pop %v2800
  %v2803 = vmul.f32 %v2787, %v2801
  %v2804 = vmul.f32 %v2788, %v2802
  %v2805 = vlaneseq
  %v2806 = vshrl.u32 %v2805, 7
  %v2807 = vsub.s32 0, %v2806
  %v2808 = vrot.slane %v1450, %v2807
  %v2809 = vmul.f32 %v2803, %v2808
  %v2810 = vmul.f32 %v2804, %v2808
  %v2811 = vlaneseq
  %v2812 = vshrl.u32 %v2811, 7
  %v2813 = vsub.s32 0, %v2812
  %v2814 = vrot.slane %v1451, %v2813
  %v2815 = vadd.f32 %v2809, %v2814
  %v2816 = vadd.f32 %v2810, %v2814
  %v2817 = vld [vmem:[%s2] sm:$0x3]
  %v2819 = vsel %vm262, %v2817, 0
  %2821 = vmatprep.subr.mxu0 0.0
  %2822 = vmatpush1.msra.mxu0 %v2815
  %2823 = vmatprep.subr.mxu0 0.0
  %2824 = vmatpush1.msra.mxu0 %v2816
  %2825 = vmatprep.subr.mxu0 0.0
  %2826 = vmatpush1.msra.mxu0 0.0
  %2827 = vmatprep.subr.mxu0 0.0
  %2828 = vmatpush1.msra.mxu0 0.0
  %2829 = vmatprep.subr.mxu0 0.0
  %2830 = vmatpush1.msra.mxu0 0.0
  %2831 = vmatprep.subr.mxu0 0.0
  %2832 = vmatpush1.msra.mxu0 0.0
  %2833 = vmatprep.subr.mxu0 0.0
  %2834 = vmatpush1.msra.mxu0 0.0
  %2835 = vmatprep.subr.mxu0 0.0
  %2836 = vmatpush1.msra.mxu0 0.0
  %2837 = vmatprep.subr.mxu0 0.0
  %2838 = vmatpush1.msra.mxu0 0.0
  %2839 = vmatprep.subr.mxu0 0.0
  %2840 = vmatpush1.msra.mxu0 0.0
  %2841 = vmatprep.subr.mxu0 0.0
  %2842 = vmatpush1.msra.mxu0 0.0
  %2843 = vmatprep.subr.mxu0 0.0
  %2844 = vmatpush1.msra.mxu0 0.0
  %2845 = vmatprep.subr.mxu0 0.0
  %2846 = vmatpush1.msra.mxu0 0.0
  %2847 = vmatprep.subr.mxu0 0.0
  %2848 = vmatpush1.msra.mxu0 0.0
  %2849 = vmatprep.subr.mxu0 0.0
  %2850 = vmatpush1.msra.mxu0 0.0
  %2851 = vmatprep.subr.mxu0 0.0
  %2852 = vmatpush1.msra.mxu0 0.0
  %2853 = vmatprep.subr.mxu0 0.0
  %2854 = vmatpush1.msra.mxu0 0.0
  %2855 = vmatprep.subr.mxu0 0.0
  %2856 = vmatpush1.msra.mxu0 0.0
  %2857 = vmatprep.subr.mxu0 0.0
  %2858 = vmatpush1.msra.mxu0 0.0
  %2859 = vmatprep.subr.mxu0 0.0
  %2860 = vmatpush1.msra.mxu0 0.0
  %2861 = vmatprep.subr.mxu0 0.0
  %2862 = vmatpush1.msra.mxu0 0.0
  %2863 = vmatprep.subr.mxu0 0.0
  %2864 = vmatpush1.msra.mxu0 0.0
  %2865 = vmatprep.subr.mxu0 0.0
  %2866 = vmatpush1.msra.mxu0 0.0
  %2867 = vmatprep.subr.mxu0 0.0
  %2868 = vmatpush1.msra.mxu0 0.0
  %2869 = vmatprep.subr.mxu0 0.0
  %2870 = vmatpush1.msra.mxu0 0.0
  %2871 = vmatprep.subr.mxu0 0.0
  %2872 = vmatpush1.msra.mxu0 0.0
  %2873 = vmatprep.subr.mxu0 0.0
  %2874 = vmatpush1.msra.mxu0 0.0
  %2875 = vmatprep.subr.mxu0 0.0
  %2876 = vmatpush1.msra.mxu0 0.0
  %2877 = vmatprep.subr.mxu0 0.0
  %2878 = vmatpush1.msra.mxu0 0.0
  %2879 = vmatprep.subr.mxu0 0.0
  %2880 = vmatpush1.msra.mxu0 0.0
  %2881 = vmatprep.subr.mxu0 0.0
  %2882 = vmatpush1.msra.mxu0 0.0
  %2883 = vmatprep.subr.mxu0 0.0
  %2884 = vmatpush1.msra.mxu0 0.0
  %2885 = vmatprep.mubr.f32.mxu0 0.0
  %2886 = vmatmul.mubr.f32.gmra.mrb[0].mxu0 %v2819
  %v2887 = vpop.f32.mrb[0].mxu0
  %v2888 = vadd.f32 0.0, %v2887
  %v2889 = vpop.f32.mrb[0].mxu0
  %2890 = vdwg.mxu0
  %v2891 = vld [vmem:[%s4 + $0x2] sm:$0x1]
  %v2892 = vlaneseq
  %v2893 = vshrl.u32 %v2892, 7
  %v2894 = vsub.s32 0, %v2893
  %v2895 = vrot.slane %v2891, %v2894
  %v2896 = vmul.f32 %v2888, %v2895
  %vm2897 = vcmask 254976
  %v2898 = vsel %vm2897, %v2896, 0.0
  %2899 = vadd.xlane.f32.xlu0 %v2898
  %v2900 = vpop.xlane.xlu0 %2899
  %v2901 = vadd.f32 %v2900, %v2895
  %2903 = vrot.lane.b32.xlu0 %v2901, 96
  %v2904 = vpop.permute.xlu0 %2903
  %vm2906 = vcmask 1024
  %2907 = vst.msk [vmem:[%s5] sm:$0x3] %vm2906, %v2904
  // Predicated region
  $region22: #{xlm_comet_forward.1} parent=0 // pred_check
    _
  $region23: #{xlm_comet_forward.1} parent=0 // pred_check_branch
    %2909 = sbr.rel (0) target = $region25
  $region24: #{xlm_comet_forward.1} parent=0 // pred_region
    _
  $region25: #{xlm_comet_forward.1} parent=0 // pred_fallthru
    _
  // Predicated region
  $region26: #{xlm_comet_forward.1} parent=0 // pred_check
    _
  $region27: #{xlm_comet_forward.1} parent=0 // pred_check_branch
    %2911 = sbr.rel (0) target = $region29
  $region28: #{xlm_comet_forward.1} parent=0 // pred_region
    _
  $region29: #{xlm_comet_forward.1} parent=0 // pred_fallthru
    _

</llo_original>
